<compile_context>
chip_gen: v5e
topology: v5e:2x2
jax: 0.10.0
libtpu: 0.0.40
codegen_flags: <defaults>
</compile_context>

<pallas_src>
import math

import jax
import jax.numpy as jnp
from jax.experimental import pallas as pl
from jax.experimental.pallas import tpu as pltpu


def _silu(v):
    return v * (1.0 / (1.0 + jnp.exp(-v)))


def _rmsnorm(v, g, dim):
    # F.normalize(x, dim=channel) * g * sqrt(dim); channel is the last axis here.
    nrm = jnp.sqrt(jnp.sum(v * v, axis=-1, keepdims=True))
    return v * (1.0 / jnp.maximum(nrm, 1e-12)) * (g * math.sqrt(dim))


def _make_block1_kernel(offsets, pout, cout):
    def kernel(t_ref, x_ref, w_ref, b_ref, tw_ref, tb_ref, g_ref, o_ref):
        # t_ref:(1,1,T) x_ref:(1,P,Cin) w_ref:(27,Cin,Cout) b_ref:(1,Cout)
        # tw_ref:(T,2*Cout) tb_ref:(1,2*Cout) g_ref:(1,Cout) o_ref:(1,Pout,Cout)
        # ---- fused time MLP: SiLU -> Linear -> chunk(scale, shift) ----
        t = _silu(t_ref[0].astype(jnp.float32))                      # (1, T)
        ss = jnp.dot(t, tw_ref[...], preferred_element_type=jnp.float32) + tb_ref[...]
        scale = ss[:, :cout]
        shift = ss[:, cout:]
        # ---- conv3d 3x3x3 as 27 row-shifted matmuls (MXU) ----
        acc = jnp.zeros((pout, cout), jnp.float32)
        for k, off in enumerate(offsets):
            acc = acc + jnp.dot(x_ref[0, off:off + pout, :], w_ref[k],
                                preferred_element_type=jnp.float32)
        acc = acc + b_ref[...]
        # ---- RMSNorm, scale/shift, SiLU ----
        y = _rmsnorm(acc, g_ref[...], cout)
        y = y * (scale + 1.0) + shift
        y = _silu(y)
        # TODO(synk): nn.Dropout is p=0.0 / eval-mode -> identity (no RNG here).
        o_ref[0, :, :] = y.astype(o_ref.dtype)

    return kernel


def _make_block2_kernel(offsets, center_off, pout, cout):
    def kernel(h_ref, x_ref, w_ref, b_ref, g_ref, wr_ref, br_ref, o_ref):
        # h_ref:(1,P,Cout) x_ref:(1,P,Cin) w_ref:(27,Cout,Cout) o_ref:(1,Pout,Cout)
        acc = jnp.zeros((pout, cout), jnp.float32)
        for k, off in enumerate(offsets):
            acc = acc + jnp.dot(h_ref[0, off:off + pout, :], w_ref[k],
                                preferred_element_type=jnp.float32)
        acc = acc + b_ref[...]
        y = _silu(_rmsnorm(acc, g_ref[...], cout))
        # fused 1x1 residual conv: rows aligned with the output live at the
        # center-tap offset of the padded/flattened input.
        res = jnp.dot(x_ref[0, center_off:center_off + pout, :], wr_ref[...],
                      preferred_element_type=jnp.float32) + br_ref[...]
        o_ref[0, :, :] = (y + res).astype(o_ref.dtype)

    return kernel


def resnet_block_forward(x, time_emb, params):
    """x: (N, Cin, D, H, W) f32 (torch NCDHW layout); time_emb: (N, T) f32."""
    n, cin, d, h, w = x.shape
    t_dim = time_emb.shape[1]
    cout = params["g1"].shape[0]

    dp, hp, wp = d + 2, h + 2, w + 2
    p = dp * hp * wp
    dmax = 2 * hp * wp + 2 * wp + 2
    pout = p - dmax
    offsets = [kd * hp * wp + kh * wp + kw
               for kd in range(3) for kh in range(3) for kw in range(3)]
    center = hp * wp + wp + 1

    f32 = jnp.float32
    # channels-last, zero-padded, spatially flattened
    x_cl = jnp.transpose(x, (0, 2, 3, 4, 1)).astype(f32)
    x_flat = jnp.pad(x_cl, ((0, 0), (1, 1), (1, 1), (1, 1), (0, 0))).reshape(n, p, cin)
    t3 = time_emb.astype(f32).reshape(n, 1, t_dim)

    w1 = params["w1"].astype(f32)
    b1 = params["b1"].reshape(1, cout).astype(f32)
    w2 = params["w2"].astype(f32)
    b2 = params["b2"].reshape(1, cout).astype(f32)
    g1 = params["g1"].reshape(1, cout).astype(f32)
    g2 = params["g2"].reshape(1, cout).astype(f32)
    tw = params["tw"].astype(f32)
    tb = params["tb"].reshape(1, 2 * cout).astype(f32)
    if cin == cout and "wr" not in params:          # res_conv = Identity
        wr = jnp.eye(cin, dtype=f32)
        br = jnp.zeros((1, cout), f32)
    else:
        wr = params["wr"].astype(f32)
        br = params["br"].reshape(1, cout).astype(f32)

    def full(*shape):
        return pl.BlockSpec(shape, lambda i, s=len(shape): (0,) * s)

    def batched(*shape):
        return pl.BlockSpec((1,) + shape, lambda i, s=len(shape): (i,) + (0,) * s)

    cp = pltpu.CompilerParams(dimension_semantics=("parallel",))

    cost1 = pl.CostEstimate(
        flops=2 * n * pout * cin * cout * 27 + 2 * n * t_dim * 2 * cout,
        transcendentals=n * (pout * cout + t_dim),
        bytes_accessed=4 * (x_flat.size + w1.size + tw.size + n * pout * cout),
    )

    h1_flat = pl.pallas_call(
        _make_block1_kernel(offsets, pout, cout),
        out_shape=jax.ShapeDtypeStruct((n, pout, cout), f32),
        grid=(n,),
        in_specs=[
            batched(1, t_dim),       # time_emb  (N,1,T)
            batched(p, cin),         # padded/flattened x
            full(27, cin, cout),     # conv1 weights (per-tap)
            full(1, cout),           # conv1 bias
            full(t_dim, 2 * cout),   # time-MLP linear weight
            full(1, 2 * cout),       # time-MLP linear bias
            full(1, cout),           # RMSNorm g1
        ],
        out_specs=batched(pout, cout),
        compiler_params=cp,
        cost_estimate=cost1,
    )(t3, x_flat, w1, b1, tw, tb, g1)

    # recover valid voxels (rows d*Hp*Wp + h*Wp + w), re-pad for block2
    h1 = jnp.pad(h1_flat, ((0, 0), (0, p - pout), (0, 0))).reshape(
        n, dp, hp, wp, cout)[:, :d, :h, :w, :]
    h1_flat_p = jnp.pad(h1, ((0, 0), (1, 1), (1, 1), (1, 1), (0, 0))).reshape(n, p, cout)

    cost2 = pl.CostEstimate(
        flops=2 * n * pout * cout * cout * 27 + 2 * n * pout * cin * cout,
        transcendentals=n * pout * cout,
        bytes_accessed=4 * (h1_flat_p.size + x_flat.size + w2.size + n * pout * cout),
    )

    out_flat = pl.pallas_call(
        _make_block2_kernel(offsets, center, pout, cout),
        out_shape=jax.ShapeDtypeStruct((n, pout, cout), f32),
        grid=(n,),
        in_specs=[
            batched(p, cout),        # padded/flattened h
            batched(p, cin),         # padded/flattened x (residual)
            full(27, cout, cout),    # conv2 weights
            full(1, cout),           # conv2 bias
            full(1, cout),           # RMSNorm g2
            full(cin, cout),         # 1x1 res_conv weight
            full(1, cout),           # 1x1 res_conv bias
        ],
        out_specs=batched(pout, cout),
        compiler_params=cp,
        cost_estimate=cost2,
    )(h1_flat_p, x_flat, w2, b2, g2, wr, br)

    out = jnp.pad(out_flat, ((0, 0), (0, p - pout), (0, 0))).reshape(
        n, dp, hp, wp, cout)[:, :d, :h, :w, :]
    return jnp.transpose(out, (0, 4, 1, 2, 3))      # back to NCDHW


# ----------------------- pure-JAX reference -----------------------
def _conv3d_taps_ref(x_cl, w_taps, b):
    n, d, h, w, _ = x_cl.shape
    co = w_taps.shape[-1]
    xp = jnp.pad(x_cl, ((0, 0), (1, 1), (1, 1), (1, 1), (0, 0)))
    out = jnp.zeros((n, d, h, w, co), jnp.float32)
    k = 0
    for kd in range(3):
        for kh in range(3):
            for kw in range(3):
                out = out + jnp.einsum(
                    "ndhwc,co->ndhwo",
                    xp[:, kd:kd + d, kh:kh + h, kw:kw + w, :], w_taps[k],
                    precision=jax.lax.Precision.HIGHEST)
                k += 1
    return out + b


def _block_ref(x_cl, w, b, g, scale_shift=None):
    co = w.shape[-1]
    y = _conv3d_taps_ref(x_cl, w, b)
    nrm = jnp.sqrt(jnp.sum(y * y, axis=-1, keepdims=True))
    y = y / jnp.maximum(nrm, 1e-12) * g * math.sqrt(co)
    if scale_shift is not None:
        scale, shift = scale_shift
        y = y * (scale + 1.0) + shift
    return y * jax.nn.sigmoid(y)


def resnet_block_reference(x, time_emb, params):
    n, cin, d, h, w = x.shape
    cout = params["g1"].shape[0]
    x_cl = jnp.transpose(x, (0, 2, 3, 4, 1)).astype(jnp.float32)

    t = jax.nn.silu(time_emb)
    ss = jnp.dot(t, params["tw"], precision=jax.lax.Precision.HIGHEST) + params["tb"]
    scale = ss[:, :cout].reshape(n, 1, 1, 1, cout)
    shift = ss[:, cout:].reshape(n, 1, 1, 1, cout)

    h1 = _block_ref(x_cl, params["w1"], params["b1"], params["g1"], (scale, shift))
    h2 = _block_ref(h1, params["w2"], params["b2"], params["g2"])
    if cin == cout and "wr" not in params:
        res = x_cl
    else:
        res = jnp.einsum("ndhwc,co->ndhwo", x_cl, params["wr"],
                         precision=jax.lax.Precision.HIGHEST) + params["br"]
    return jnp.transpose(h2 + res, (0, 4, 1, 2, 3))


if __name__ == "__main__":
    key = jax.random.PRNGKey(0)
    ks = jax.random.split(key, 12)

    n, cin, cout, t_dim = 2, 8, 16, 32      # batch, dim, dim_out, time_emb_dim
    d = h = w = 4                           # small 3D volume

    x = jax.random.normal(ks[0], (n, cin, d, h, w), jnp.float32)
    time_emb = jax.random.normal(ks[1], (n, t_dim), jnp.float32)

    def init(k, shape, scale):
        return jax.random.normal(k, shape, jnp.float32) * scale

    params = {
        "w1": init(ks[2], (27, cin, cout), 1.0 / math.sqrt(27 * cin)),
        "b1": init(ks[3], (cout,), 0.1),
        "g1": 1.0 + 0.1 * jax.random.normal(ks[4], (cout,), jnp.float32),
        "w2": init(ks[5], (27, cout, cout), 1.0 / math.sqrt(27 * cout)),
        "b2": init(ks[6], (cout,), 0.1),
        "g2": 1.0 + 0.1 * jax.random.normal(ks[7], (cout,), jnp.float32),
        "tw": init(ks[8], (t_dim, 2 * cout), 1.0 / math.sqrt(t_dim)),
        "tb": init(ks[9], (2 * cout,), 0.1),
        "wr": init(ks[10], (cin, cout), 1.0 / math.sqrt(cin)),
        "br": init(ks[11], (cout,), 0.1),
    }

    out = resnet_block_forward(x, time_emb, params)
    out = jax.block_until_ready(out)

    ref = resnet_block_reference(x, time_emb, params)
    assert out.shape == (n, cout, d, h, w), out.shape
    assert jnp.allclose(out, ref, atol=3e-2, rtol=3e-2), float(
        jnp.max(jnp.abs(out - ref)))

    print("KERNEL_OK")
</pallas_src>

<mosaic_0001>
module attributes {stable_mosaic.version = 11 : i64} {
  func.func @kernel(%arg0: i32, %arg1: memref<1x1x32xf32, #tpu.memory_space<vmem>>, %arg2: memref<1x216x8xf32, #tpu.memory_space<vmem>>, %arg3: memref<27x8x16xf32, #tpu.memory_space<vmem>>, %arg4: memref<1x16xf32, #tpu.memory_space<vmem>>, %arg5: memref<32x32xf32, #tpu.memory_space<vmem>>, %arg6: memref<1x32xf32, #tpu.memory_space<vmem>>, %arg7: memref<1x16xf32, #tpu.memory_space<vmem>>, %arg8: memref<1x130x16xf32, #tpu.memory_space<vmem>>) attributes {dimension_semantics = [#tpu.dimension_semantics<parallel>], iteration_bounds = array<i64: 2>, scalar_prefetch = 0 : i64, scratch_operands = 0 : i64, tpu.core_type = #tpu.core_type<tc>, window_params = [{transform_indices = @transform_0, window_bounds = array<i64: 1, 1, 32>}, {transform_indices = @transform_1, window_bounds = array<i64: 1, 216, 8>}, {pipeline_mode = #tpu.pipeline_mode<synchronous>, transform_indices = @transform_2, window_bounds = array<i64: 27, 8, 16>}, {pipeline_mode = #tpu.pipeline_mode<synchronous>, transform_indices = @transform_3, window_bounds = array<i64: 1, 16>}, {pipeline_mode = #tpu.pipeline_mode<synchronous>, transform_indices = @transform_4, window_bounds = array<i64: 32, 32>}, {pipeline_mode = #tpu.pipeline_mode<synchronous>, transform_indices = @transform_5, window_bounds = array<i64: 1, 32>}, {pipeline_mode = #tpu.pipeline_mode<synchronous>, transform_indices = @transform_6, window_bounds = array<i64: 1, 16>}, {transform_indices = @transform_7, window_bounds = array<i64: 1, 130, 16>}]} {
    %c0 = arith.constant 0 : index
    %c0_0 = arith.constant 0 : index
    %c0_1 = arith.constant 0 : index
    %0 = vector.load %arg1[%c0, %c0_0, %c0_1] : memref<1x1x32xf32, #tpu.memory_space<vmem>>, vector<1x1x32xf32>
    %1 = vector.shape_cast %0 : vector<1x1x32xf32> to vector<1x32xf32>
    %cst = arith.constant 0.000000e+00 : f32
    %2 = vector.broadcast %cst : f32 to vector<1x32xf32>
    %3 = arith.subf %2, %1 : vector<1x32xf32>
    %4 = math.exp %3 : vector<1x32xf32>
    %cst_2 = arith.constant 1.000000e+00 : f32
    %5 = vector.broadcast %cst_2 : f32 to vector<1x32xf32>
    %6 = arith.addf %5, %4 : vector<1x32xf32>
    %cst_3 = arith.constant 1.000000e+00 : f32
    %7 = vector.broadcast %cst_3 : f32 to vector<1x32xf32>
    %8 = arith.divf %7, %6 : vector<1x32xf32>
    %9 = arith.mulf %1, %8 : vector<1x32xf32>
    %c0_4 = arith.constant 0 : index
    %c0_5 = arith.constant 0 : index
    %10 = vector.load %arg5[%c0_4, %c0_5] : memref<32x32xf32, #tpu.memory_space<vmem>>, vector<32x32xf32>
    %cst_6 = arith.constant dense<0.000000e+00> : vector<1x32xf32>
    %11 = tpu.matmul %9, %10, %cst_6 {dimension_numbers = #tpu.dot_dimension_numbers<[1], [0], [0], [1], [0, 0, 1, 1], [], []>} : vector<1x32xf32>, vector<32x32xf32>, vector<1x32xf32> -> vector<1x32xf32>
    %c0_7 = arith.constant 0 : index
    %c0_8 = arith.constant 0 : index
    %12 = vector.load %arg6[%c0_7, %c0_8] : memref<1x32xf32, #tpu.memory_space<vmem>>, vector<1x32xf32>
    %13 = arith.addf %11, %12 : vector<1x32xf32>
    %14 = vector.extract_strided_slice %13 {offsets = [0, 0], sizes = [1, 16], strides = [1, 1]} : vector<1x32xf32> to vector<1x16xf32>
    %15 = vector.extract_strided_slice %13 {offsets = [0, 16], sizes = [1, 16], strides = [1, 1]} : vector<1x32xf32> to vector<1x16xf32>
    %cst_9 = arith.constant 0.000000e+00 : f32
    %16 = vector.broadcast %cst_9 : f32 to vector<130x16xf32>
    %c0_10 = arith.constant 0 : index
    %c0_11 = arith.constant 0 : index
    %c0_12 = arith.constant 0 : index
    %17 = vector.load %arg2[%c0_10, %c0_11, %c0_12] : memref<1x216x8xf32, #tpu.memory_space<vmem>>, vector<1x130x8xf32>
    %18 = vector.shape_cast %17 : vector<1x130x8xf32> to vector<130x8xf32>
    %c0_13 = arith.constant 0 : index
    %c0_14 = arith.constant 0 : index
    %c0_15 = arith.constant 0 : index
    %19 = vector.load %arg3[%c0_13, %c0_14, %c0_15] : memref<27x8x16xf32, #tpu.memory_space<vmem>>, vector<1x8x16xf32>
    %20 = vector.shape_cast %19 : vector<1x8x16xf32> to vector<8x16xf32>
    %cst_16 = arith.constant dense<0.000000e+00> : vector<130x16xf32>
    %21 = tpu.matmul %18, %20, %cst_16 {dimension_numbers = #tpu.dot_dimension_numbers<[1], [0], [0], [1], [0, 0, 1, 1], [], []>} : vector<130x8xf32>, vector<8x16xf32>, vector<130x16xf32> -> vector<130x16xf32>
    %22 = arith.addf %16, %21 : vector<130x16xf32>
    %c0_17 = arith.constant 0 : index
    %c1 = arith.constant 1 : index
    %c0_18 = arith.constant 0 : index
    %23 = vector.load %arg2[%c0_17, %c1, %c0_18] : memref<1x216x8xf32, #tpu.memory_space<vmem>>, vector<1x130x8xf32>
    %24 = vector.shape_cast %23 : vector<1x130x8xf32> to vector<130x8xf32>
    %c1_19 = arith.constant 1 : index
    %c0_20 = arith.constant 0 : index
    %c0_21 = arith.constant 0 : index
    %25 = vector.load %arg3[%c1_19, %c0_20, %c0_21] : memref<27x8x16xf32, #tpu.memory_space<vmem>>, vector<1x8x16xf32>
    %26 = vector.shape_cast %25 : vector<1x8x16xf32> to vector<8x16xf32>
    %cst_22 = arith.constant dense<0.000000e+00> : vector<130x16xf32>
    %27 = tpu.matmul %24, %26, %cst_22 {dimension_numbers = #tpu.dot_dimension_numbers<[1], [0], [0], [1], [0, 0, 1, 1], [], []>} : vector<130x8xf32>, vector<8x16xf32>, vector<130x16xf32> -> vector<130x16xf32>
    %28 = arith.addf %22, %27 : vector<130x16xf32>
    %c0_23 = arith.constant 0 : index
    %c2 = arith.constant 2 : index
    %c0_24 = arith.constant 0 : index
    %29 = vector.load %arg2[%c0_23, %c2, %c0_24] : memref<1x216x8xf32, #tpu.memory_space<vmem>>, vector<1x130x8xf32>
    %30 = vector.shape_cast %29 : vector<1x130x8xf32> to vector<130x8xf32>
    %c2_25 = arith.constant 2 : index
    %c0_26 = arith.constant 0 : index
    %c0_27 = arith.constant 0 : index
    %31 = vector.load %arg3[%c2_25, %c0_26, %c0_27] : memref<27x8x16xf32, #tpu.memory_space<vmem>>, vector<1x8x16xf32>
    %32 = vector.shape_cast %31 : vector<1x8x16xf32> to vector<8x16xf32>
    %cst_28 = arith.constant dense<0.000000e+00> : vector<130x16xf32>
    %33 = tpu.matmul %30, %32, %cst_28 {dimension_numbers = #tpu.dot_dimension_numbers<[1], [0], [0], [1], [0, 0, 1, 1], [], []>} : vector<130x8xf32>, vector<8x16xf32>, vector<130x16xf32> -> vector<130x16xf32>
    %34 = arith.addf %28, %33 : vector<130x16xf32>
    %c0_29 = arith.constant 0 : index
    %c6 = arith.constant 6 : index
    %c0_30 = arith.constant 0 : index
    %35 = vector.load %arg2[%c0_29, %c6, %c0_30] : memref<1x216x8xf32, #tpu.memory_space<vmem>>, vector<1x130x8xf32>
    %36 = vector.shape_cast %35 : vector<1x130x8xf32> to vector<130x8xf32>
    %c3 = arith.constant 3 : index
    %c0_31 = arith.constant 0 : index
    %c0_32 = arith.constant 0 : index
    %37 = vector.load %arg3[%c3, %c0_31, %c0_32] : memref<27x8x16xf32, #tpu.memory_space<vmem>>, vector<1x8x16xf32>
    %38 = vector.shape_cast %37 : vector<1x8x16xf32> to vector<8x16xf32>
    %cst_33 = arith.constant dense<0.000000e+00> : vector<130x16xf32>
    %39 = tpu.matmul %36, %38, %cst_33 {dimension_numbers = #tpu.dot_dimension_numbers<[1], [0], [0], [1], [0, 0, 1, 1], [], []>} : vector<130x8xf32>, vector<8x16xf32>, vector<130x16xf32> -> vector<130x16xf32>
    %40 = arith.addf %34, %39 : vector<130x16xf32>
    %c0_34 = arith.constant 0 : index
    %c7 = arith.constant 7 : index
    %c0_35 = arith.constant 0 : index
    %41 = vector.load %arg2[%c0_34, %c7, %c0_35] : memref<1x216x8xf32, #tpu.memory_space<vmem>>, vector<1x130x8xf32>
    %42 = vector.shape_cast %41 : vector<1x130x8xf32> to vector<130x8xf32>
    %c4 = arith.constant 4 : index
    %c0_36 = arith.constant 0 : index
    %c0_37 = arith.constant 0 : index
    %43 = vector.load %arg3[%c4, %c0_36, %c0_37] : memref<27x8x16xf32, #tpu.memory_space<vmem>>, vector<1x8x16xf32>
    %44 = vector.shape_cast %43 : vector<1x8x16xf32> to vector<8x16xf32>
    %cst_38 = arith.constant dense<0.000000e+00> : vector<130x16xf32>
    %45 = tpu.matmul %42, %44, %cst_38 {dimension_numbers = #tpu.dot_dimension_numbers<[1], [0], [0], [1], [0, 0, 1, 1], [], []>} : vector<130x8xf32>, vector<8x16xf32>, vector<130x16xf32> -> vector<130x16xf32>
    %46 = arith.addf %40, %45 : vector<130x16xf32>
    %c0_39 = arith.constant 0 : index
    %c8 = arith.constant 8 : index
    %c0_40 = arith.constant 0 : index
    %47 = vector.load %arg2[%c0_39, %c8, %c0_40] : memref<1x216x8xf32, #tpu.memory_space<vmem>>, vector<1x130x8xf32>
    %48 = vector.shape_cast %47 : vector<1x130x8xf32> to vector<130x8xf32>
    %c5 = arith.constant 5 : index
    %c0_41 = arith.constant 0 : index
    %c0_42 = arith.constant 0 : index
    %49 = vector.load %arg3[%c5, %c0_41, %c0_42] : memref<27x8x16xf32, #tpu.memory_space<vmem>>, vector<1x8x16xf32>
    %50 = vector.shape_cast %49 : vector<1x8x16xf32> to vector<8x16xf32>
    %cst_43 = arith.constant dense<0.000000e+00> : vector<130x16xf32>
    %51 = tpu.matmul %48, %50, %cst_43 {dimension_numbers = #tpu.dot_dimension_numbers<[1], [0], [0], [1], [0, 0, 1, 1], [], []>} : vector<130x8xf32>, vector<8x16xf32>, vector<130x16xf32> -> vector<130x16xf32>
    %52 = arith.addf %46, %51 : vector<130x16xf32>
    %c0_44 = arith.constant 0 : index
    %c12 = arith.constant 12 : index
    %c0_45 = arith.constant 0 : index
    %53 = vector.load %arg2[%c0_44, %c12, %c0_45] : memref<1x216x8xf32, #tpu.memory_space<vmem>>, vector<1x130x8xf32>
    %54 = vector.shape_cast %53 : vector<1x130x8xf32> to vector<130x8xf32>
    %c6_46 = arith.constant 6 : index
    %c0_47 = arith.constant 0 : index
    %c0_48 = arith.constant 0 : index
    %55 = vector.load %arg3[%c6_46, %c0_47, %c0_48] : memref<27x8x16xf32, #tpu.memory_space<vmem>>, vector<1x8x16xf32>
    %56 = vector.shape_cast %55 : vector<1x8x16xf32> to vector<8x16xf32>
    %cst_49 = arith.constant dense<0.000000e+00> : vector<130x16xf32>
    %57 = tpu.matmul %54, %56, %cst_49 {dimension_numbers = #tpu.dot_dimension_numbers<[1], [0], [0], [1], [0, 0, 1, 1], [], []>} : vector<130x8xf32>, vector<8x16xf32>, vector<130x16xf32> -> vector<130x16xf32>
    %58 = arith.addf %52, %57 : vector<130x16xf32>
    %c0_50 = arith.constant 0 : index
    %c13 = arith.constant 13 : index
    %c0_51 = arith.constant 0 : index
    %59 = vector.load %arg2[%c0_50, %c13, %c0_51] : memref<1x216x8xf32, #tpu.memory_space<vmem>>, vector<1x130x8xf32>
    %60 = vector.shape_cast %59 : vector<1x130x8xf32> to vector<130x8xf32>
    %c7_52 = arith.constant 7 : index
    %c0_53 = arith.constant 0 : index
    %c0_54 = arith.constant 0 : index
    %61 = vector.load %arg3[%c7_52, %c0_53, %c0_54] : memref<27x8x16xf32, #tpu.memory_space<vmem>>, vector<1x8x16xf32>
    %62 = vector.shape_cast %61 : vector<1x8x16xf32> to vector<8x16xf32>
    %cst_55 = arith.constant dense<0.000000e+00> : vector<130x16xf32>
    %63 = tpu.matmul %60, %62, %cst_55 {dimension_numbers = #tpu.dot_dimension_numbers<[1], [0], [0], [1], [0, 0, 1, 1], [], []>} : vector<130x8xf32>, vector<8x16xf32>, vector<130x16xf32> -> vector<130x16xf32>
    %64 = arith.addf %58, %63 : vector<130x16xf32>
    %c0_56 = arith.constant 0 : index
    %c14 = arith.constant 14 : index
    %c0_57 = arith.constant 0 : index
    %65 = vector.load %arg2[%c0_56, %c14, %c0_57] : memref<1x216x8xf32, #tpu.memory_space<vmem>>, vector<1x130x8xf32>
    %66 = vector.shape_cast %65 : vector<1x130x8xf32> to vector<130x8xf32>
    %c8_58 = arith.constant 8 : index
    %c0_59 = arith.constant 0 : index
    %c0_60 = arith.constant 0 : index
    %67 = vector.load %arg3[%c8_58, %c0_59, %c0_60] : memref<27x8x16xf32, #tpu.memory_space<vmem>>, vector<1x8x16xf32>
    %68 = vector.shape_cast %67 : vector<1x8x16xf32> to vector<8x16xf32>
    %cst_61 = arith.constant dense<0.000000e+00> : vector<130x16xf32>
    %69 = tpu.matmul %66, %68, %cst_61 {dimension_numbers = #tpu.dot_dimension_numbers<[1], [0], [0], [1], [0, 0, 1, 1], [], []>} : vector<130x8xf32>, vector<8x16xf32>, vector<130x16xf32> -> vector<130x16xf32>
    %70 = arith.addf %64, %69 : vector<130x16xf32>
    %c0_62 = arith.constant 0 : index
    %c36 = arith.constant 36 : index
    %c0_63 = arith.constant 0 : index
    %71 = vector.load %arg2[%c0_62, %c36, %c0_63] : memref<1x216x8xf32, #tpu.memory_space<vmem>>, vector<1x130x8xf32>
    %72 = vector.shape_cast %71 : vector<1x130x8xf32> to vector<130x8xf32>
    %c9 = arith.constant 9 : index
    %c0_64 = arith.constant 0 : index
    %c0_65 = arith.constant 0 : index
    %73 = vector.load %arg3[%c9, %c0_64, %c0_65] : memref<27x8x16xf32, #tpu.memory_space<vmem>>, vector<1x8x16xf32>
    %74 = vector.shape_cast %73 : vector<1x8x16xf32> to vector<8x16xf32>
    %cst_66 = arith.constant dense<0.000000e+00> : vector<130x16xf32>
    %75 = tpu.matmul %72, %74, %cst_66 {dimension_numbers = #tpu.dot_dimension_numbers<[1], [0], [0], [1], [0, 0, 1, 1], [], []>} : vector<130x8xf32>, vector<8x16xf32>, vector<130x16xf32> -> vector<130x16xf32>
    %76 = arith.addf %70, %75 : vector<130x16xf32>
    %c0_67 = arith.constant 0 : index
    %c37 = arith.constant 37 : index
    %c0_68 = arith.constant 0 : index
    %77 = vector.load %arg2[%c0_67, %c37, %c0_68] : memref<1x216x8xf32, #tpu.memory_space<vmem>>, vector<1x130x8xf32>
    %78 = vector.shape_cast %77 : vector<1x130x8xf32> to vector<130x8xf32>
    %c10 = arith.constant 10 : index
    %c0_69 = arith.constant 0 : index
    %c0_70 = arith.constant 0 : index
    %79 = vector.load %arg3[%c10, %c0_69, %c0_70] : memref<27x8x16xf32, #tpu.memory_space<vmem>>, vector<1x8x16xf32>
    %80 = vector.shape_cast %79 : vector<1x8x16xf32> to vector<8x16xf32>
    %cst_71 = arith.constant dense<0.000000e+00> : vector<130x16xf32>
    %81 = tpu.matmul %78, %80, %cst_71 {dimension_numbers = #tpu.dot_dimension_numbers<[1], [0], [0], [1], [0, 0, 1, 1], [], []>} : vector<130x8xf32>, vector<8x16xf32>, vector<130x16xf32> -> vector<130x16xf32>
    %82 = arith.addf %76, %81 : vector<130x16xf32>
    %c0_72 = arith.constant 0 : index
    %c38 = arith.constant 38 : index
    %c0_73 = arith.constant 0 : index
    %83 = vector.load %arg2[%c0_72, %c38, %c0_73] : memref<1x216x8xf32, #tpu.memory_space<vmem>>, vector<1x130x8xf32>
    %84 = vector.shape_cast %83 : vector<1x130x8xf32> to vector<130x8xf32>
    %c11 = arith.constant 11 : index
    %c0_74 = arith.constant 0 : index
    %c0_75 = arith.constant 0 : index
    %85 = vector.load %arg3[%c11, %c0_74, %c0_75] : memref<27x8x16xf32, #tpu.memory_space<vmem>>, vector<1x8x16xf32>
    %86 = vector.shape_cast %85 : vector<1x8x16xf32> to vector<8x16xf32>
    %cst_76 = arith.constant dense<0.000000e+00> : vector<130x16xf32>
    %87 = tpu.matmul %84, %86, %cst_76 {dimension_numbers = #tpu.dot_dimension_numbers<[1], [0], [0], [1], [0, 0, 1, 1], [], []>} : vector<130x8xf32>, vector<8x16xf32>, vector<130x16xf32> -> vector<130x16xf32>
    %88 = arith.addf %82, %87 : vector<130x16xf32>
    %c0_77 = arith.constant 0 : index
    %c42 = arith.constant 42 : index
    %c0_78 = arith.constant 0 : index
    %89 = vector.load %arg2[%c0_77, %c42, %c0_78] : memref<1x216x8xf32, #tpu.memory_space<vmem>>, vector<1x130x8xf32>
    %90 = vector.shape_cast %89 : vector<1x130x8xf32> to vector<130x8xf32>
    %c12_79 = arith.constant 12 : index
    %c0_80 = arith.constant 0 : index
    %c0_81 = arith.constant 0 : index
    %91 = vector.load %arg3[%c12_79, %c0_80, %c0_81] : memref<27x8x16xf32, #tpu.memory_space<vmem>>, vector<1x8x16xf32>
    %92 = vector.shape_cast %91 : vector<1x8x16xf32> to vector<8x16xf32>
    %cst_82 = arith.constant dense<0.000000e+00> : vector<130x16xf32>
    %93 = tpu.matmul %90, %92, %cst_82 {dimension_numbers = #tpu.dot_dimension_numbers<[1], [0], [0], [1], [0, 0, 1, 1], [], []>} : vector<130x8xf32>, vector<8x16xf32>, vector<130x16xf32> -> vector<130x16xf32>
    %94 = arith.addf %88, %93 : vector<130x16xf32>
    %c0_83 = arith.constant 0 : index
    %c43 = arith.constant 43 : index
    %c0_84 = arith.constant 0 : index
    %95 = vector.load %arg2[%c0_83, %c43, %c0_84] : memref<1x216x8xf32, #tpu.memory_space<vmem>>, vector<1x130x8xf32>
    %96 = vector.shape_cast %95 : vector<1x130x8xf32> to vector<130x8xf32>
    %c13_85 = arith.constant 13 : index
    %c0_86 = arith.constant 0 : index
    %c0_87 = arith.constant 0 : index
    %97 = vector.load %arg3[%c13_85, %c0_86, %c0_87] : memref<27x8x16xf32, #tpu.memory_space<vmem>>, vector<1x8x16xf32>
    %98 = vector.shape_cast %97 : vector<1x8x16xf32> to vector<8x16xf32>
    %cst_88 = arith.constant dense<0.000000e+00> : vector<130x16xf32>
    %99 = tpu.matmul %96, %98, %cst_88 {dimension_numbers = #tpu.dot_dimension_numbers<[1], [0], [0], [1], [0, 0, 1, 1], [], []>} : vector<130x8xf32>, vector<8x16xf32>, vector<130x16xf32> -> vector<130x16xf32>
    %100 = arith.addf %94, %99 : vector<130x16xf32>
    %c0_89 = arith.constant 0 : index
    %c44 = arith.constant 44 : index
    %c0_90 = arith.constant 0 : index
    %101 = vector.load %arg2[%c0_89, %c44, %c0_90] : memref<1x216x8xf32, #tpu.memory_space<vmem>>, vector<1x130x8xf32>
    %102 = vector.shape_cast %101 : vector<1x130x8xf32> to vector<130x8xf32>
    %c14_91 = arith.constant 14 : index
    %c0_92 = arith.constant 0 : index
    %c0_93 = arith.constant 0 : index
    %103 = vector.load %arg3[%c14_91, %c0_92, %c0_93] : memref<27x8x16xf32, #tpu.memory_space<vmem>>, vector<1x8x16xf32>
    %104 = vector.shape_cast %103 : vector<1x8x16xf32> to vector<8x16xf32>
    %cst_94 = arith.constant dense<0.000000e+00> : vector<130x16xf32>
    %105 = tpu.matmul %102, %104, %cst_94 {dimension_numbers = #tpu.dot_dimension_numbers<[1], [0], [0], [1], [0, 0, 1, 1], [], []>} : vector<130x8xf32>, vector<8x16xf32>, vector<130x16xf32> -> vector<130x16xf32>
    %106 = arith.addf %100, %105 : vector<130x16xf32>
    %c0_95 = arith.constant 0 : index
    %c48 = arith.constant 48 : index
    %c0_96 = arith.constant 0 : index
    %107 = vector.load %arg2[%c0_95, %c48, %c0_96] : memref<1x216x8xf32, #tpu.memory_space<vmem>>, vector<1x130x8xf32>
    %108 = vector.shape_cast %107 : vector<1x130x8xf32> to vector<130x8xf32>
    %c15 = arith.constant 15 : index
    %c0_97 = arith.constant 0 : index
    %c0_98 = arith.constant 0 : index
    %109 = vector.load %arg3[%c15, %c0_97, %c0_98] : memref<27x8x16xf32, #tpu.memory_space<vmem>>, vector<1x8x16xf32>
    %110 = vector.shape_cast %109 : vector<1x8x16xf32> to vector<8x16xf32>
    %cst_99 = arith.constant dense<0.000000e+00> : vector<130x16xf32>
    %111 = tpu.matmul %108, %110, %cst_99 {dimension_numbers = #tpu.dot_dimension_numbers<[1], [0], [0], [1], [0, 0, 1, 1], [], []>} : vector<130x8xf32>, vector<8x16xf32>, vector<130x16xf32> -> vector<130x16xf32>
    %112 = arith.addf %106, %111 : vector<130x16xf32>
    %c0_100 = arith.constant 0 : index
    %c49 = arith.constant 49 : index
    %c0_101 = arith.constant 0 : index
    %113 = vector.load %arg2[%c0_100, %c49, %c0_101] : memref<1x216x8xf32, #tpu.memory_space<vmem>>, vector<1x130x8xf32>
    %114 = vector.shape_cast %113 : vector<1x130x8xf32> to vector<130x8xf32>
    %c16 = arith.constant 16 : index
    %c0_102 = arith.constant 0 : index
    %c0_103 = arith.constant 0 : index
    %115 = vector.load %arg3[%c16, %c0_102, %c0_103] : memref<27x8x16xf32, #tpu.memory_space<vmem>>, vector<1x8x16xf32>
    %116 = vector.shape_cast %115 : vector<1x8x16xf32> to vector<8x16xf32>
    %cst_104 = arith.constant dense<0.000000e+00> : vector<130x16xf32>
    %117 = tpu.matmul %114, %116, %cst_104 {dimension_numbers = #tpu.dot_dimension_numbers<[1], [0], [0], [1], [0, 0, 1, 1], [], []>} : vector<130x8xf32>, vector<8x16xf32>, vector<130x16xf32> -> vector<130x16xf32>
    %118 = arith.addf %112, %117 : vector<130x16xf32>
    %c0_105 = arith.constant 0 : index
    %c50 = arith.constant 50 : index
    %c0_106 = arith.constant 0 : index
    %119 = vector.load %arg2[%c0_105, %c50, %c0_106] : memref<1x216x8xf32, #tpu.memory_space<vmem>>, vector<1x130x8xf32>
    %120 = vector.shape_cast %119 : vector<1x130x8xf32> to vector<130x8xf32>
    %c17 = arith.constant 17 : index
    %c0_107 = arith.constant 0 : index
    %c0_108 = arith.constant 0 : index
    %121 = vector.load %arg3[%c17, %c0_107, %c0_108] : memref<27x8x16xf32, #tpu.memory_space<vmem>>, vector<1x8x16xf32>
    %122 = vector.shape_cast %121 : vector<1x8x16xf32> to vector<8x16xf32>
    %cst_109 = arith.constant dense<0.000000e+00> : vector<130x16xf32>
    %123 = tpu.matmul %120, %122, %cst_109 {dimension_numbers = #tpu.dot_dimension_numbers<[1], [0], [0], [1], [0, 0, 1, 1], [], []>} : vector<130x8xf32>, vector<8x16xf32>, vector<130x16xf32> -> vector<130x16xf32>
    %124 = arith.addf %118, %123 : vector<130x16xf32>
    %c0_110 = arith.constant 0 : index
    %c72 = arith.constant 72 : index
    %c0_111 = arith.constant 0 : index
    %125 = vector.load %arg2[%c0_110, %c72, %c0_111] : memref<1x216x8xf32, #tpu.memory_space<vmem>>, vector<1x130x8xf32>
    %126 = vector.shape_cast %125 : vector<1x130x8xf32> to vector<130x8xf32>
    %c18 = arith.constant 18 : index
    %c0_112 = arith.constant 0 : index
    %c0_113 = arith.constant 0 : index
    %127 = vector.load %arg3[%c18, %c0_112, %c0_113] : memref<27x8x16xf32, #tpu.memory_space<vmem>>, vector<1x8x16xf32>
    %128 = vector.shape_cast %127 : vector<1x8x16xf32> to vector<8x16xf32>
    %cst_114 = arith.constant dense<0.000000e+00> : vector<130x16xf32>
    %129 = tpu.matmul %126, %128, %cst_114 {dimension_numbers = #tpu.dot_dimension_numbers<[1], [0], [0], [1], [0, 0, 1, 1], [], []>} : vector<130x8xf32>, vector<8x16xf32>, vector<130x16xf32> -> vector<130x16xf32>
    %130 = arith.addf %124, %129 : vector<130x16xf32>
    %c0_115 = arith.constant 0 : index
    %c73 = arith.constant 73 : index
    %c0_116 = arith.constant 0 : index
    %131 = vector.load %arg2[%c0_115, %c73, %c0_116] : memref<1x216x8xf32, #tpu.memory_space<vmem>>, vector<1x130x8xf32>
    %132 = vector.shape_cast %131 : vector<1x130x8xf32> to vector<130x8xf32>
    %c19 = arith.constant 19 : index
    %c0_117 = arith.constant 0 : index
    %c0_118 = arith.constant 0 : index
    %133 = vector.load %arg3[%c19, %c0_117, %c0_118] : memref<27x8x16xf32, #tpu.memory_space<vmem>>, vector<1x8x16xf32>
    %134 = vector.shape_cast %133 : vector<1x8x16xf32> to vector<8x16xf32>
    %cst_119 = arith.constant dense<0.000000e+00> : vector<130x16xf32>
    %135 = tpu.matmul %132, %134, %cst_119 {dimension_numbers = #tpu.dot_dimension_numbers<[1], [0], [0], [1], [0, 0, 1, 1], [], []>} : vector<130x8xf32>, vector<8x16xf32>, vector<130x16xf32> -> vector<130x16xf32>
    %136 = arith.addf %130, %135 : vector<130x16xf32>
    %c0_120 = arith.constant 0 : index
    %c74 = arith.constant 74 : index
    %c0_121 = arith.constant 0 : index
    %137 = vector.load %arg2[%c0_120, %c74, %c0_121] : memref<1x216x8xf32, #tpu.memory_space<vmem>>, vector<1x130x8xf32>
    %138 = vector.shape_cast %137 : vector<1x130x8xf32> to vector<130x8xf32>
    %c20 = arith.constant 20 : index
    %c0_122 = arith.constant 0 : index
    %c0_123 = arith.constant 0 : index
    %139 = vector.load %arg3[%c20, %c0_122, %c0_123] : memref<27x8x16xf32, #tpu.memory_space<vmem>>, vector<1x8x16xf32>
    %140 = vector.shape_cast %139 : vector<1x8x16xf32> to vector<8x16xf32>
    %cst_124 = arith.constant dense<0.000000e+00> : vector<130x16xf32>
    %141 = tpu.matmul %138, %140, %cst_124 {dimension_numbers = #tpu.dot_dimension_numbers<[1], [0], [0], [1], [0, 0, 1, 1], [], []>} : vector<130x8xf32>, vector<8x16xf32>, vector<130x16xf32> -> vector<130x16xf32>
    %142 = arith.addf %136, %141 : vector<130x16xf32>
    %c0_125 = arith.constant 0 : index
    %c78 = arith.constant 78 : index
    %c0_126 = arith.constant 0 : index
    %143 = vector.load %arg2[%c0_125, %c78, %c0_126] : memref<1x216x8xf32, #tpu.memory_space<vmem>>, vector<1x130x8xf32>
    %144 = vector.shape_cast %143 : vector<1x130x8xf32> to vector<130x8xf32>
    %c21 = arith.constant 21 : index
    %c0_127 = arith.constant 0 : index
    %c0_128 = arith.constant 0 : index
    %145 = vector.load %arg3[%c21, %c0_127, %c0_128] : memref<27x8x16xf32, #tpu.memory_space<vmem>>, vector<1x8x16xf32>
    %146 = vector.shape_cast %145 : vector<1x8x16xf32> to vector<8x16xf32>
    %cst_129 = arith.constant dense<0.000000e+00> : vector<130x16xf32>
    %147 = tpu.matmul %144, %146, %cst_129 {dimension_numbers = #tpu.dot_dimension_numbers<[1], [0], [0], [1], [0, 0, 1, 1], [], []>} : vector<130x8xf32>, vector<8x16xf32>, vector<130x16xf32> -> vector<130x16xf32>
    %148 = arith.addf %142, %147 : vector<130x16xf32>
    %c0_130 = arith.constant 0 : index
    %c79 = arith.constant 79 : index
    %c0_131 = arith.constant 0 : index
    %149 = vector.load %arg2[%c0_130, %c79, %c0_131] : memref<1x216x8xf32, #tpu.memory_space<vmem>>, vector<1x130x8xf32>
    %150 = vector.shape_cast %149 : vector<1x130x8xf32> to vector<130x8xf32>
    %c22 = arith.constant 22 : index
    %c0_132 = arith.constant 0 : index
    %c0_133 = arith.constant 0 : index
    %151 = vector.load %arg3[%c22, %c0_132, %c0_133] : memref<27x8x16xf32, #tpu.memory_space<vmem>>, vector<1x8x16xf32>
    %152 = vector.shape_cast %151 : vector<1x8x16xf32> to vector<8x16xf32>
    %cst_134 = arith.constant dense<0.000000e+00> : vector<130x16xf32>
    %153 = tpu.matmul %150, %152, %cst_134 {dimension_numbers = #tpu.dot_dimension_numbers<[1], [0], [0], [1], [0, 0, 1, 1], [], []>} : vector<130x8xf32>, vector<8x16xf32>, vector<130x16xf32> -> vector<130x16xf32>
    %154 = arith.addf %148, %153 : vector<130x16xf32>
    %c0_135 = arith.constant 0 : index
    %c80 = arith.constant 80 : index
    %c0_136 = arith.constant 0 : index
    %155 = vector.load %arg2[%c0_135, %c80, %c0_136] : memref<1x216x8xf32, #tpu.memory_space<vmem>>, vector<1x130x8xf32>
    %156 = vector.shape_cast %155 : vector<1x130x8xf32> to vector<130x8xf32>
    %c23 = arith.constant 23 : index
    %c0_137 = arith.constant 0 : index
    %c0_138 = arith.constant 0 : index
    %157 = vector.load %arg3[%c23, %c0_137, %c0_138] : memref<27x8x16xf32, #tpu.memory_space<vmem>>, vector<1x8x16xf32>
    %158 = vector.shape_cast %157 : vector<1x8x16xf32> to vector<8x16xf32>
    %cst_139 = arith.constant dense<0.000000e+00> : vector<130x16xf32>
    %159 = tpu.matmul %156, %158, %cst_139 {dimension_numbers = #tpu.dot_dimension_numbers<[1], [0], [0], [1], [0, 0, 1, 1], [], []>} : vector<130x8xf32>, vector<8x16xf32>, vector<130x16xf32> -> vector<130x16xf32>
    %160 = arith.addf %154, %159 : vector<130x16xf32>
    %c0_140 = arith.constant 0 : index
    %c84 = arith.constant 84 : index
    %c0_141 = arith.constant 0 : index
    %161 = vector.load %arg2[%c0_140, %c84, %c0_141] : memref<1x216x8xf32, #tpu.memory_space<vmem>>, vector<1x130x8xf32>
    %162 = vector.shape_cast %161 : vector<1x130x8xf32> to vector<130x8xf32>
    %c24 = arith.constant 24 : index
    %c0_142 = arith.constant 0 : index
    %c0_143 = arith.constant 0 : index
    %163 = vector.load %arg3[%c24, %c0_142, %c0_143] : memref<27x8x16xf32, #tpu.memory_space<vmem>>, vector<1x8x16xf32>
    %164 = vector.shape_cast %163 : vector<1x8x16xf32> to vector<8x16xf32>
    %cst_144 = arith.constant dense<0.000000e+00> : vector<130x16xf32>
    %165 = tpu.matmul %162, %164, %cst_144 {dimension_numbers = #tpu.dot_dimension_numbers<[1], [0], [0], [1], [0, 0, 1, 1], [], []>} : vector<130x8xf32>, vector<8x16xf32>, vector<130x16xf32> -> vector<130x16xf32>
    %166 = arith.addf %160, %165 : vector<130x16xf32>
    %c0_145 = arith.constant 0 : index
    %c85 = arith.constant 85 : index
    %c0_146 = arith.constant 0 : index
    %167 = vector.load %arg2[%c0_145, %c85, %c0_146] : memref<1x216x8xf32, #tpu.memory_space<vmem>>, vector<1x130x8xf32>
    %168 = vector.shape_cast %167 : vector<1x130x8xf32> to vector<130x8xf32>
    %c25 = arith.constant 25 : index
    %c0_147 = arith.constant 0 : index
    %c0_148 = arith.constant 0 : index
    %169 = vector.load %arg3[%c25, %c0_147, %c0_148] : memref<27x8x16xf32, #tpu.memory_space<vmem>>, vector<1x8x16xf32>
    %170 = vector.shape_cast %169 : vector<1x8x16xf32> to vector<8x16xf32>
    %cst_149 = arith.constant dense<0.000000e+00> : vector<130x16xf32>
    %171 = tpu.matmul %168, %170, %cst_149 {dimension_numbers = #tpu.dot_dimension_numbers<[1], [0], [0], [1], [0, 0, 1, 1], [], []>} : vector<130x8xf32>, vector<8x16xf32>, vector<130x16xf32> -> vector<130x16xf32>
    %172 = arith.addf %166, %171 : vector<130x16xf32>
    %c0_150 = arith.constant 0 : index
    %c86 = arith.constant 86 : index
    %c0_151 = arith.constant 0 : index
    %173 = vector.load %arg2[%c0_150, %c86, %c0_151] : memref<1x216x8xf32, #tpu.memory_space<vmem>>, vector<1x130x8xf32>
    %174 = vector.shape_cast %173 : vector<1x130x8xf32> to vector<130x8xf32>
    %c26 = arith.constant 26 : index
    %c0_152 = arith.constant 0 : index
    %c0_153 = arith.constant 0 : index
    %175 = vector.load %arg3[%c26, %c0_152, %c0_153] : memref<27x8x16xf32, #tpu.memory_space<vmem>>, vector<1x8x16xf32>
    %176 = vector.shape_cast %175 : vector<1x8x16xf32> to vector<8x16xf32>
    %cst_154 = arith.constant dense<0.000000e+00> : vector<130x16xf32>
    %177 = tpu.matmul %174, %176, %cst_154 {dimension_numbers = #tpu.dot_dimension_numbers<[1], [0], [0], [1], [0, 0, 1, 1], [], []>} : vector<130x8xf32>, vector<8x16xf32>, vector<130x16xf32> -> vector<130x16xf32>
    %178 = arith.addf %172, %177 : vector<130x16xf32>
    %c0_155 = arith.constant 0 : index
    %c0_156 = arith.constant 0 : index
    %179 = vector.load %arg4[%c0_155, %c0_156] : memref<1x16xf32, #tpu.memory_space<vmem>>, vector<1x16xf32>
    %180 = vector.broadcast %179 : vector<1x16xf32> to vector<130x16xf32>
    %181 = arith.addf %178, %180 : vector<130x16xf32>
    %c0_157 = arith.constant 0 : index
    %c0_158 = arith.constant 0 : index
    %182 = vector.load %arg7[%c0_157, %c0_158] : memref<1x16xf32, #tpu.memory_space<vmem>>, vector<1x16xf32>
    %183 = arith.mulf %181, %181 : vector<130x16xf32>
    %cst_159 = arith.constant dense<0.000000e+00> : vector<130xf32>
    %184 = vector.multi_reduction <add>, %183, %cst_159 [1] : vector<130x16xf32> to vector<130xf32>
    %185 = vector.shape_cast %184 : vector<130xf32> to vector<130x1xf32>
    %186 = math.sqrt %185 : vector<130x1xf32>
    %cst_160 = arith.constant 9.99999996E-13 : f32
    %187 = vector.broadcast %cst_160 : f32 to vector<130x1xf32>
    %188 = arith.maximumf %186, %187 : vector<130x1xf32>
    %cst_161 = arith.constant 1.000000e+00 : f32
    %189 = vector.broadcast %cst_161 : f32 to vector<130x1xf32>
    %190 = arith.divf %189, %188 : vector<130x1xf32>
    %191 = vector.broadcast %190 : vector<130x1xf32> to vector<130x16xf32>
    %192 = arith.mulf %181, %191 : vector<130x16xf32>
    %cst_162 = arith.constant 4.000000e+00 : f32
    %193 = vector.broadcast %cst_162 : f32 to vector<1x16xf32>
    %194 = arith.mulf %182, %193 : vector<1x16xf32>
    %195 = vector.broadcast %194 : vector<1x16xf32> to vector<130x16xf32>
    %196 = arith.mulf %192, %195 : vector<130x16xf32>
    %cst_163 = arith.constant 1.000000e+00 : f32
    %197 = vector.broadcast %cst_163 : f32 to vector<1x16xf32>
    %198 = arith.addf %14, %197 : vector<1x16xf32>
    %199 = vector.broadcast %198 : vector<1x16xf32> to vector<130x16xf32>
    %200 = arith.mulf %196, %199 : vector<130x16xf32>
    %201 = vector.broadcast %15 : vector<1x16xf32> to vector<130x16xf32>
    %202 = arith.addf %200, %201 : vector<130x16xf32>
    %cst_164 = arith.constant 0.000000e+00 : f32
    %203 = vector.broadcast %cst_164 : f32 to vector<130x16xf32>
    %204 = arith.subf %203, %202 : vector<130x16xf32>
    %205 = math.exp %204 : vector<130x16xf32>
    %cst_165 = arith.constant 1.000000e+00 : f32
    %206 = vector.broadcast %cst_165 : f32 to vector<130x16xf32>
    %207 = arith.addf %206, %205 : vector<130x16xf32>
    %cst_166 = arith.constant 1.000000e+00 : f32
    %208 = vector.broadcast %cst_166 : f32 to vector<130x16xf32>
    %209 = arith.divf %208, %207 : vector<130x16xf32>
    %210 = arith.mulf %202, %209 : vector<130x16xf32>
    %c0_167 = arith.constant 0 : index
    %c0_168 = arith.constant 0 : index
    %c0_169 = arith.constant 0 : index
    %211 = vector.load %arg8[%c0_167, %c0_168, %c0_169] : memref<1x130x16xf32, #tpu.memory_space<vmem>>, vector<1x130x16xf32>
    %212 = vector.shape_cast %211 : vector<1x130x16xf32> to vector<130x16xf32>
    %213 = vector.shape_cast %210 : vector<130x16xf32> to vector<1x130x16xf32>
    tpu.vector_store %arg8[%c0_167, %c0_168, %c0_169], %213 {strides = array<i32>} : memref<1x130x16xf32, #tpu.memory_space<vmem>>, vector<1x130x16xf32>,
    return
  }
  func.func @transform_0(%arg0: i32) -> (i32, i32, i32) {
    %c0_i32 = arith.constant 0 : i32
    %c0_i32_0 = arith.constant 0 : i32
    %c0_i32_1 = arith.constant 0 : i32
    return %arg0, %c0_i32, %c0_i32_0 : i32, i32, i32
  }
  func.func @transform_1(%arg0: i32) -> (i32, i32, i32) {
    %c0_i32 = arith.constant 0 : i32
    %c0_i32_0 = arith.constant 0 : i32
    %c0_i32_1 = arith.constant 0 : i32
    return %arg0, %c0_i32, %c0_i32_0 : i32, i32, i32
  }
  func.func @transform_2(%arg0: i32) -> (i32, i32, i32) {
    %c0_i32 = arith.constant 0 : i32
    %c0_i32_0 = arith.constant 0 : i32
    %c0_i32_1 = arith.constant 0 : i32
    %c0_i32_2 = arith.constant 0 : i32
    return %c0_i32, %c0_i32_0, %c0_i32_1 : i32, i32, i32
  }
  func.func @transform_3(%arg0: i32) -> (i32, i32) {
    %c0_i32 = arith.constant 0 : i32
    %c0_i32_0 = arith.constant 0 : i32
    %c0_i32_1 = arith.constant 0 : i32
    return %c0_i32, %c0_i32_0 : i32, i32
  }
  func.func @transform_4(%arg0: i32) -> (i32, i32) {
    %c0_i32 = arith.constant 0 : i32
    %c0_i32_0 = arith.constant 0 : i32
    %c0_i32_1 = arith.constant 0 : i32
    return %c0_i32, %c0_i32_0 : i32, i32
  }
  func.func @transform_5(%arg0: i32) -> (i32, i32) {
    %c0_i32 = arith.constant 0 : i32
    %c0_i32_0 = arith.constant 0 : i32
    %c0_i32_1 = arith.constant 0 : i32
    return %c0_i32, %c0_i32_0 : i32, i32
  }
  func.func @transform_6(%arg0: i32) -> (i32, i32) {
    %c0_i32 = arith.constant 0 : i32
    %c0_i32_0 = arith.constant 0 : i32
    %c0_i32_1 = arith.constant 0 : i32
    return %c0_i32, %c0_i32_0 : i32, i32
  }
  func.func @transform_7(%arg0: i32) -> (i32, i32, i32) {
    %c0_i32 = arith.constant 0 : i32
    %c0_i32_0 = arith.constant 0 : i32
    %c0_i32_1 = arith.constant 0 : i32
    return %arg0, %c0_i32, %c0_i32_0 : i32, i32, i32
  }
}

</mosaic_0001>

<llo_original>
// kernel: tpu_custom_call.1
$region0: #{tpu_custom_call.1}
  #allocation0 [shape = 'u32[]', space=smem, size = 0x4, offset = 0x4, fixed_abs, tag = 'smem constant byte address 0x4 - core index']
  #allocation1 [shape = 'u32[72,128]{1,0:T(1,128)}', space=vmem, size = 0x9000, scoped, tag = 'internal scratch']
  %s0 = inlined_call_operand.vmem [shape: f32[2,1,32], index: 0, kind: input, shape index: {}]
  %s1 = inlined_call_operand.vmem [shape: f32[2,216,8], index: 1, kind: input, shape index: {}]
  %s2 = inlined_call_operand.vmem [shape: f32[27,8,16], index: 2, kind: input, shape index: {}]
  %s3 = inlined_call_operand.vmem [shape: f32[1,16], index: 3, kind: input, shape index: {}]
  %s4 = inlined_call_operand.vmem [shape: f32[32,32], index: 4, kind: input, shape index: {}]
  %s5 = inlined_call_operand.vmem [shape: f32[1,32], index: 5, kind: input, shape index: {}]
  %s6 = inlined_call_operand.vmem [shape: f32[1,16], index: 6, kind: input, shape index: {}]
  %s7 = inlined_call_operand.vmem [shape: f32[2,130,16], index: 7, kind: output, shape index: {}]
  %s8 = sld [smem:[#allocation0]]
  $region61: #{tpu_custom_call.1} parent=0
    _
  %s10 = ssub.s32 1, %s8
  %s11 = scalar_select 0, %s10, %s8
  loop: start=0, step=1, limit=4
  $region2: #{tpu_custom_call.1} parent=0 // loop_pre_header
    _
  $region3: #{tpu_custom_call.1} parent=0 // loop_header
    %s13 = sphi 0, %s17
    %p14 = scmp.ge.s32.totalorder %s13, 4
    %s23 = sphi 0, %s25
    %s26 = sphi 0, %s23
    %s27 = sphi 0, %s26
    %s43 = sphi 0, %s27
    %s49 = sphi 0, %s51
    %s52 = sphi 0, %s49
    %s53 = sphi 0, %s52
    %s69 = sphi 0, %s53
    %s73 = sphi 0, %s73
    %s75 = sphi 0, %s73
    %s76 = sphi 0, %s75
    %s90 = sphi 0, %s76
    %s94 = sphi 0, %s94
    %s96 = sphi 0, %s94
    %s97 = sphi 0, %s96
    %s111 = sphi 0, %s97
    %s115 = sphi 0, %s115
    %s117 = sphi 0, %s115
    %s118 = sphi 0, %s117
    %s132 = sphi 0, %s118
    %s136 = sphi 0, %s136
    %s138 = sphi 0, %s136
    %s139 = sphi 0, %s138
    %s153 = sphi 0, %s139
    %s157 = sphi 0, %s157
    %s159 = sphi 0, %s157
    %s160 = sphi 0, %s159
    %s174 = sphi 0, %s160
    %s180 = sphi 0, %s182
    %s183 = sphi 0, %s180
    %s184 = sphi 0, %s183
    %s200 = sphi 0, %s184
  $region4: #{tpu_custom_call.1} parent=0 // loop_header_branch
    %16 = sbr.rel (%p14) target = $region8
  $region5: #{tpu_custom_call.1} parent=0 // loop_body
    %s18 = ssub.s32 %s13, 1
    %s19 = ssub.s32 %s13, 2
    %s20 = sadd.s32 %s13, 1
    %s21 = ssub.s32 %s13, %s20
    %p22 = scmp.eq.s32.totalorder %s21, 0
    %s24 = sadd.s32 %s23, 1
    %s25 = scalar_select %p22, %s23, %s24
    %p28 = pneg %p22
    %p29 = scmp.eq.s32.totalorder %s13, 1
    %p30 = por %p28, %p29
    %p31 = scmp.ne.s32.totalorder %s23, %s26
    %p32 = scmp.eq.s32.totalorder %s13, 0
    %p33 = por %p31, %p32
    %p34 = scmp.ne.s32.totalorder %s23, %s26
    %p35 = scmp.eq.s32.totalorder %s18, 1
    %p36 = por %p34, %p35
    %p37 = scmp.ne.s32.totalorder %s26, %s27
    %p38 = scmp.eq.s32.totalorder %s18, 0
    %p39 = por %p37, %p38
    %p40 = scmp.ne.s32.totalorder %s26, %s27
    %p41 = scmp.eq.s32.totalorder %s19, 1
    %p42 = por %p40, %p41
    %p44 = scmp.ne.s32.totalorder %s27, %s43
    %p45 = scmp.eq.s32.totalorder %s19, 0
    %p46 = por %p44, %p45
    %s47 = ssub.s32 %s13, %s20
    %p48 = scmp.eq.s32.totalorder %s47, 0
    %s50 = sadd.s32 %s49, 1
    %s51 = scalar_select %p48, %s49, %s50
    %p54 = pneg %p48
    %p55 = scmp.eq.s32.totalorder %s13, 1
    %p56 = por %p54, %p55
    %p57 = scmp.ne.s32.totalorder %s49, %s52
    %p58 = scmp.eq.s32.totalorder %s13, 0
    %p59 = por %p57, %p58
    %p60 = scmp.ne.s32.totalorder %s49, %s52
    %p61 = scmp.eq.s32.totalorder %s18, 1
    %p62 = por %p60, %p61
    %p63 = scmp.ne.s32.totalorder %s52, %s53
    %p64 = scmp.eq.s32.totalorder %s18, 0
    %p65 = por %p63, %p64
    %p66 = scmp.ne.s32.totalorder %s52, %s53
    %p67 = scmp.eq.s32.totalorder %s19, 1
    %p68 = por %p66, %p67
    %p70 = scmp.ne.s32.totalorder %s53, %s69
    %p71 = scmp.eq.s32.totalorder %s19, 0
    %p72 = por %p70, %p71
    %s74 = sadd.s32 %s73, 1
    %p77 = scmp.eq.s32.totalorder %s13, 1
    %p78 = scmp.ne.s32.totalorder %s73, %s75
    %p79 = scmp.eq.s32.totalorder %s13, 0
    %p80 = por %p78, %p79
    %p81 = scmp.ne.s32.totalorder %s73, %s75
    %p82 = scmp.eq.s32.totalorder %s18, 1
    %p83 = por %p81, %p82
    %p84 = scmp.ne.s32.totalorder %s75, %s76
    %p85 = scmp.eq.s32.totalorder %s18, 0
    %p86 = por %p84, %p85
    %p87 = scmp.ne.s32.totalorder %s75, %s76
    %p88 = scmp.eq.s32.totalorder %s19, 1
    %p89 = por %p87, %p88
    %p91 = scmp.ne.s32.totalorder %s76, %s90
    %p92 = scmp.eq.s32.totalorder %s19, 0
    %p93 = por %p91, %p92
    %s95 = sadd.s32 %s94, 1
    %p98 = scmp.eq.s32.totalorder %s13, 1
    %p99 = scmp.ne.s32.totalorder %s94, %s96
    %p100 = scmp.eq.s32.totalorder %s13, 0
    %p101 = por %p99, %p100
    %p102 = scmp.ne.s32.totalorder %s94, %s96
    %p103 = scmp.eq.s32.totalorder %s18, 1
    %p104 = por %p102, %p103
    %p105 = scmp.ne.s32.totalorder %s96, %s97
    %p106 = scmp.eq.s32.totalorder %s18, 0
    %p107 = por %p105, %p106
    %p108 = scmp.ne.s32.totalorder %s96, %s97
    %p109 = scmp.eq.s32.totalorder %s19, 1
    %p110 = por %p108, %p109
    %p112 = scmp.ne.s32.totalorder %s97, %s111
    %p113 = scmp.eq.s32.totalorder %s19, 0
    %p114 = por %p112, %p113
    %s116 = sadd.s32 %s115, 1
    %p119 = scmp.eq.s32.totalorder %s13, 1
    %p120 = scmp.ne.s32.totalorder %s115, %s117
    %p121 = scmp.eq.s32.totalorder %s13, 0
    %p122 = por %p120, %p121
    %p123 = scmp.ne.s32.totalorder %s115, %s117
    %p124 = scmp.eq.s32.totalorder %s18, 1
    %p125 = por %p123, %p124
    %p126 = scmp.ne.s32.totalorder %s117, %s118
    %p127 = scmp.eq.s32.totalorder %s18, 0
    %p128 = por %p126, %p127
    %p129 = scmp.ne.s32.totalorder %s117, %s118
    %p130 = scmp.eq.s32.totalorder %s19, 1
    %p131 = por %p129, %p130
    %p133 = scmp.ne.s32.totalorder %s118, %s132
    %p134 = scmp.eq.s32.totalorder %s19, 0
    %p135 = por %p133, %p134
    %s137 = sadd.s32 %s136, 1
    %p140 = scmp.eq.s32.totalorder %s13, 1
    %p141 = scmp.ne.s32.totalorder %s136, %s138
    %p142 = scmp.eq.s32.totalorder %s13, 0
    %p143 = por %p141, %p142
    %p144 = scmp.ne.s32.totalorder %s136, %s138
    %p145 = scmp.eq.s32.totalorder %s18, 1
    %p146 = por %p144, %p145
    %p147 = scmp.ne.s32.totalorder %s138, %s139
    %p148 = scmp.eq.s32.totalorder %s18, 0
    %p149 = por %p147, %p148
    %p150 = scmp.ne.s32.totalorder %s138, %s139
    %p151 = scmp.eq.s32.totalorder %s19, 1
    %p152 = por %p150, %p151
    %p154 = scmp.ne.s32.totalorder %s139, %s153
    %p155 = scmp.eq.s32.totalorder %s19, 0
    %p156 = por %p154, %p155
    %s158 = sadd.s32 %s157, 1
    %p161 = scmp.eq.s32.totalorder %s13, 1
    %p162 = scmp.ne.s32.totalorder %s157, %s159
    %p163 = scmp.eq.s32.totalorder %s13, 0
    %p164 = por %p162, %p163
    %p165 = scmp.ne.s32.totalorder %s157, %s159
    %p166 = scmp.eq.s32.totalorder %s18, 1
    %p167 = por %p165, %p166
    %p168 = scmp.ne.s32.totalorder %s159, %s160
    %p169 = scmp.eq.s32.totalorder %s18, 0
    %p170 = por %p168, %p169
    %p171 = scmp.ne.s32.totalorder %s159, %s160
    %p172 = scmp.eq.s32.totalorder %s19, 1
    %p173 = por %p171, %p172
    %p175 = scmp.ne.s32.totalorder %s160, %s174
    %p176 = scmp.eq.s32.totalorder %s19, 0
    %p177 = por %p175, %p176
    %s178 = ssub.s32 %s13, %s20
    %p179 = scmp.eq.s32.totalorder %s178, 0
    %s181 = sadd.s32 %s180, 1
    %s182 = scalar_select %p179, %s180, %s181
    %p185 = pneg %p179
    %p186 = scmp.eq.s32.totalorder %s13, 1
    %p187 = por %p185, %p186
    %p188 = scmp.ne.s32.totalorder %s180, %s183
    %p189 = scmp.eq.s32.totalorder %s13, 0
    %p190 = por %p188, %p189
    %p191 = scmp.ne.s32.totalorder %s180, %s183
    %p192 = scmp.eq.s32.totalorder %s18, 1
    %p193 = por %p191, %p192
    %p194 = scmp.ne.s32.totalorder %s183, %s184
    %p195 = scmp.eq.s32.totalorder %s18, 0
    %p196 = por %p194, %p195
    %p197 = scmp.ne.s32.totalorder %s183, %s184
    %p198 = scmp.eq.s32.totalorder %s19, 1
    %p199 = por %p197, %p198
    %p201 = scmp.ne.s32.totalorder %s184, %s200
    %p202 = scmp.eq.s32.totalorder %s19, 0
    %p203 = por %p201, %p202
    %p204 = scmp.le.s32.totalorder 1, %s13
    %p205 = scmp.lt.s32.totalorder %s13, 3
    %p206 = pnand %p204, %p205
    %p207 = pneg %p206
    // Predicated region
    $region9: #{tpu_custom_call.1} parent=5 // pred_check
      _
    $region10: #{tpu_custom_call.1} parent=5 // pred_check_branch
      %209 = sbr.rel (%p206) target = $region12
    $region11: #{tpu_custom_call.1} parent=5 // pred_region
      %s210 = ssub.s32 %s13, 1
      // Predicated region
      $region13: #{tpu_custom_call.1} parent=11 // pred_check
        %p211 = pneg %p86
      $region14: #{tpu_custom_call.1} parent=11 // pred_check_branch
        %213 = sbr.rel (%p211) target = $region16
      $region15: #{tpu_custom_call.1} parent=11 // pred_region
        _
      $region16: #{tpu_custom_call.1} parent=11 // pred_fallthru
        _
      // Predicated region
      $region17: #{tpu_custom_call.1} parent=11 // pred_check
        %p214 = pneg %p107
      $region18: #{tpu_custom_call.1} parent=11 // pred_check_branch
        %216 = sbr.rel (%p214) target = $region20
      $region19: #{tpu_custom_call.1} parent=11 // pred_region
        _
      $region20: #{tpu_custom_call.1} parent=11 // pred_fallthru
        _
      // Predicated region
      $region21: #{tpu_custom_call.1} parent=11 // pred_check
        %p217 = pneg %p128
      $region22: #{tpu_custom_call.1} parent=11 // pred_check_branch
        %219 = sbr.rel (%p217) target = $region24
      $region23: #{tpu_custom_call.1} parent=11 // pred_region
        _
      $region24: #{tpu_custom_call.1} parent=11 // pred_fallthru
        _
      // Predicated region
      $region25: #{tpu_custom_call.1} parent=11 // pred_check
        %p220 = pneg %p149
      $region26: #{tpu_custom_call.1} parent=11 // pred_check_branch
        %222 = sbr.rel (%p220) target = $region28
      $region27: #{tpu_custom_call.1} parent=11 // pred_region
        _
      $region28: #{tpu_custom_call.1} parent=11 // pred_fallthru
        _
      // Predicated region
      $region29: #{tpu_custom_call.1} parent=11 // pred_check
        %p223 = pneg %p170
      $region30: #{tpu_custom_call.1} parent=11 // pred_check_branch
        %225 = sbr.rel (%p223) target = $region32
      $region31: #{tpu_custom_call.1} parent=11 // pred_region
        _
      $region32: #{tpu_custom_call.1} parent=11 // pred_fallthru
        _
    $region12: #{tpu_custom_call.1} parent=5 // pred_fallthru
      _
    %p226 = scmp.lt.s32.totalorder %s13, 2
    // Predicated region
    $region33: #{tpu_custom_call.1} parent=5 // pred_check
      %p227 = pneg %p226
    $region34: #{tpu_custom_call.1} parent=5 // pred_check_branch
      %229 = sbr.rel (%p227) target = $region36
    $region35: #{tpu_custom_call.1} parent=5 // pred_region
      // Predicated region
      $region37: #{tpu_custom_call.1} parent=35 // pred_check
        %p230 = pneg %p33
      $region38: #{tpu_custom_call.1} parent=35 // pred_check_branch
        %232 = sbr.rel (%p230) target = $region40
      $region39: #{tpu_custom_call.1} parent=35 // pred_region
        %p233 = scmp.lt.s32.totalorder %s13, 1
        %s234 = scalar_select %p233, %s13, 1
        %s235 = scalar_lea.vmem %s0, %s234
      $region40: #{tpu_custom_call.1} parent=35 // pred_fallthru
        _
      // Predicated region
      $region41: #{tpu_custom_call.1} parent=35 // pred_check
        %p236 = pneg %p59
      $region42: #{tpu_custom_call.1} parent=35 // pred_check_branch
        %238 = sbr.rel (%p236) target = $region44
      $region43: #{tpu_custom_call.1} parent=35 // pred_region
        %p239 = scmp.lt.s32.totalorder %s13, 1
        %s240 = scalar_select %p239, %s13, 1
        %s241 = smul.addr %s240, 27
        %s242 = smul.addr %s241, 8
        %s243 = scalar_lea.vmem %s1, %s242
      $region44: #{tpu_custom_call.1} parent=35 // pred_fallthru
        _
    $region36: #{tpu_custom_call.1} parent=5 // pred_fallthru
      _
    %p244 = scmp.le.s32.totalorder 1, %s13
    %p245 = scmp.lt.s32.totalorder %s13, 3
    %p246 = pnand %p244, %p245
    %p247 = pneg %p246
    // Predicated region
    $region45: #{tpu_custom_call.1} parent=5 // pred_check
      _
    $region46: #{tpu_custom_call.1} parent=5 // pred_check_branch
      %249 = sbr.rel (%p246) target = $region48
    $region47: #{tpu_custom_call.1} parent=5 // pred_region
      %s250 = ssub.s32 %s13, 1
      %p251 = scmp.lt.s32.totalorder %s18, 1
      %s252 = scalar_select %p251, %s18, 1
      %s253 = scalar_lea.vmem %s0, %s252
      %p254 = pneg %p39
      %p255 = pneg %p36
      %p256 = scmp.lt.s32.totalorder %s18, 1
      %s257 = scalar_select %p256, %s18, 1
      %s258 = smul.addr %s257, 27
      %s259 = smul.addr %s258, 8
      %s260 = scalar_lea.vmem %s1, %s259
      %p261 = pneg %p65
      %p262 = pneg %p62
      %p263 = pneg %p86
      %p264 = pneg %p83
      %p265 = pneg %p107
      %p266 = pneg %p104
      %p267 = pneg %p128
      %p268 = pneg %p125
      %p269 = pneg %p149
      %p270 = pneg %p146
      %p271 = pneg %p170
      %p272 = pneg %p167
      %p273 = pneg %p196
      %p274 = pneg %p193
      %p275 = scmp.lt.s32.totalorder %s18, 1
      %s276 = scalar_select %p275, %s18, 1
      %s277 = smul.addr %s276, 17
      %s278 = smul.addr %s277, 8
      %s279 = scalar_lea.vmem %s7, %s278
      %p280 = scmp.lt.s32.totalorder %s18, 1
      %s281 = scalar_select %p280, %s18, 1
      %s282 = scalar_lea.vmem %s0, %s281
      %p283 = scmp.lt.s32.totalorder %s18, 1
      %s284 = scalar_select %p283, %s18, 1
      %s285 = smul.addr %s284, 27
      %s286 = smul.addr %s285, 8
      %s287 = scalar_lea.vmem %s1, %s286
      %p288 = scmp.lt.s32.totalorder %s18, 1
      %s289 = scalar_select %p288, %s18, 1
      %s290 = smul.addr %s289, 17
      %s291 = smul.addr %s290, 8
      %s292 = scalar_lea.vmem %s7, %s291
      %v293 = vld [vmem:[%s282] sm:$0x1]
      %v294 = vsub.f32 0.0, %v293
      %v295 = vmul.f32 %v294, 1.442695
      %v296 = vpow.pop %v295
      %v297 = vadd.f32 %v296, 1.0
      %v298 = vrcp.pop %v297
      %v299 = vmul.f32 %v297, %v298
      %v300 = vsub.f32 1.0, %v299
      %v301 = vmul.f32 %v298, %v300
      %v302 = vadd.f32 %v298, %v301
      %vm303 = vweird.f32 %v297
      %vm304 = vweird.f32 %v298
      %vm305 = vmor %vm303, %vm304
      %v306 = vsel %vm305, %v298, %v302
      %v307 = vand.u32 2147483647, %v297
      %vm308 = vcmp.eq.f32.partialorder %v307, 8.507059e+37
      %v309 = vand.u32 %v297, 2147483648
      %v310 = vor.u32 1.1754944e-38, %v309
      %v311 = vsel %vm308, %v310, %v306
      %v312 = vmul.f32 1.0, %v311
      %v313 = vmul.f32 %v293, %v312
      %v314 = vld [vmem:[%s4] sm:$0xff]
      %v315 = vld [vmem:[%s4 + $0x8] sm:$0xff]
      %v316 = vld [vmem:[%s4 + $0x10] sm:$0xff]
      %v317 = vld [vmem:[%s4 + $0x18] sm:$0xff]
      %v318 = vld [vmem:[%s5] sm:$0x1]
      %vm319 = vcmask 261120
      %v321 = vsel %vm319, %v313, 0
      %323 = vmatpush.msra.mxu0 0.0
      %324 = vmatpush.msra.mxu0 0.0
      %325 = vmatpush.msra.mxu0 0.0
      %326 = vmatpush.msra.mxu0 0.0
      %327 = vmatpush.msra.mxu0 0.0
      %328 = vmatpush.msra.mxu0 0.0
      %329 = vmatpush.msra.mxu0 0.0
      %330 = vmatpush.msra.mxu0 0.0
      %331 = vmatpush.msra.mxu0 0.0
      %332 = vmatpush.msra.mxu0 0.0
      %333 = vmatpush.msra.mxu0 0.0
      %334 = vmatpush.msra.mxu0 0.0
      %335 = vmatpush.msra.mxu0 %v317
      %336 = vmatpush.msra.mxu0 %v316
      %337 = vmatpush.msra.mxu0 %v315
      %338 = vmatpush.msra.mxu0 %v314
      %339 = vmatmul.f32.gmra.mxu0 %v321
      %v340 = vpop.f32.mrf.mxu0
      %v341 = vadd.f32 %v318, %v340
      %342 = vdwg.mxu0
      %v343 = vld [vmem:[%s287] sm:$0xff]
      %v344 = vld [vmem:[%s287 + $0x8] sm:$0xff]
      %v345 = vld [vmem:[%s287 + $0x10] sm:$0xff]
      %v346 = vld [vmem:[%s287 + $0x18] sm:$0xff]
      %v347 = vld [vmem:[%s287 + $0x20] sm:$0xff]
      %v348 = vld [vmem:[%s287 + $0x28] sm:$0xff]
      %v349 = vld [vmem:[%s287 + $0x30] sm:$0xff]
      %v350 = vld [vmem:[%s287 + $0x38] sm:$0xff]
      %v351 = vld [vmem:[%s287 + $0x40] sm:$0xff]
      %v352 = vld [vmem:[%s287 + $0x48] sm:$0xff]
      %v353 = vld [vmem:[%s287 + $0x50] sm:$0xff]
      %v354 = vld [vmem:[%s287 + $0x58] sm:$0xff]
      %v355 = vld [vmem:[%s287 + $0x60] sm:$0xff]
      %v356 = vld [vmem:[%s287 + $0x68] sm:$0xff]
      %v357 = vld [vmem:[%s287 + $0x70] sm:$0xff]
      %v358 = vld [vmem:[%s287 + $0x78] sm:$0xff]
      %v359 = vld [vmem:[%s287 + $0x80] sm:$0x3]
      %v360 = vld [vmem:[%s2] sm:$0xff]
      %v361 = vld [vmem:[%s287 + $0x1] sm:$0xff]
      %v362 = vld [vmem:[%s287 + $0x9] sm:$0xff]
      %v363 = vld [vmem:[%s287 + $0x11] sm:$0xff]
      %v364 = vld [vmem:[%s287 + $0x19] sm:$0xff]
      %v365 = vld [vmem:[%s287 + $0x21] sm:$0xff]
      %v366 = vld [vmem:[%s287 + $0x29] sm:$0xff]
      %v367 = vld [vmem:[%s287 + $0x31] sm:$0xff]
      %v368 = vld [vmem:[%s287 + $0x39] sm:$0xff]
      %v369 = vld [vmem:[%s287 + $0x41] sm:$0xff]
      %v370 = vld [vmem:[%s287 + $0x49] sm:$0xff]
      %v371 = vld [vmem:[%s287 + $0x51] sm:$0xff]
      %v372 = vld [vmem:[%s287 + $0x59] sm:$0xff]
      %v373 = vld [vmem:[%s287 + $0x61] sm:$0xff]
      %v374 = vld [vmem:[%s287 + $0x69] sm:$0xff]
      %v375 = vld [vmem:[%s287 + $0x71] sm:$0xff]
      %v376 = vld [vmem:[%s287 + $0x79] sm:$0xff]
      %v377 = vld [vmem:[%s287 + $0x81] sm:$0x3]
      %s378 = scalar_lea.vmem %s2, 8
      %v379 = vld [vmem:[%s378] sm:$0xff]
      %vm380 = vcmask 64512
      %v382 = vsel %vm380, %v361, 0
      %v385 = vsel %vm380, %v362, 0
      %v388 = vsel %vm380, %v363, 0
      %v391 = vsel %vm380, %v364, 0
      %v394 = vsel %vm380, %v365, 0
      %v397 = vsel %vm380, %v366, 0
      %v400 = vsel %vm380, %v367, 0
      %v403 = vsel %vm380, %v368, 0
      %v406 = vsel %vm380, %v369, 0
      %v409 = vsel %vm380, %v370, 0
      %v412 = vsel %vm380, %v371, 0
      %v415 = vsel %vm380, %v372, 0
      %v418 = vsel %vm380, %v373, 0
      %v421 = vsel %vm380, %v374, 0
      %v424 = vsel %vm380, %v375, 0
      %v427 = vsel %vm380, %v376, 0
      %v430 = vsel %vm380, %v377, 0
      %432 = vmatpush.msra.mxu0 0.0
      %433 = vmatpush.msra.mxu0 0.0
      %434 = vmatpush.msra.mxu0 0.0
      %435 = vmatpush.msra.mxu0 0.0
      %436 = vmatpush.msra.mxu0 0.0
      %437 = vmatpush.msra.mxu0 0.0
      %438 = vmatpush.msra.mxu0 0.0
      %439 = vmatpush.msra.mxu0 0.0
      %440 = vmatpush.msra.mxu0 0.0
      %441 = vmatpush.msra.mxu0 0.0
      %442 = vmatpush.msra.mxu0 0.0
      %443 = vmatpush.msra.mxu0 0.0
      %444 = vmatpush.msra.mxu0 0.0
      %445 = vmatpush.msra.mxu0 0.0
      %446 = vmatpush.msra.mxu0 0.0
      %447 = vmatpush.msra.mxu0 %v379
      %448 = vmatmul.f32.gmra.mxu0 %v382
      %v449 = vpop.f32.mrf.mxu0
      %v450 = vadd.f32 0.0, %v449
      %451 = vmatmul.f32.gmra.mxu0 %v385
      %v452 = vpop.f32.mrf.mxu0
      %v453 = vadd.f32 0.0, %v452
      %454 = vmatmul.f32.gmra.mxu0 %v388
      %v455 = vpop.f32.mrf.mxu0
      %v456 = vadd.f32 0.0, %v455
      %457 = vmatmul.f32.gmra.mxu0 %v391
      %v458 = vpop.f32.mrf.mxu0
      %v459 = vadd.f32 0.0, %v458
      %460 = vmatmul.f32.gmra.mxu0 %v394
      %v461 = vpop.f32.mrf.mxu0
      %v462 = vadd.f32 0.0, %v461
      %463 = vmatmul.f32.gmra.mxu0 %v397
      %v464 = vpop.f32.mrf.mxu0
      %v465 = vadd.f32 0.0, %v464
      %466 = vmatmul.f32.gmra.mxu0 %v400
      %v467 = vpop.f32.mrf.mxu0
      %v468 = vadd.f32 0.0, %v467
      %469 = vmatmul.f32.gmra.mxu0 %v403
      %v470 = vpop.f32.mrf.mxu0
      %v471 = vadd.f32 0.0, %v470
      %472 = vmatmul.f32.gmra.mxu0 %v406
      %v473 = vpop.f32.mrf.mxu0
      %v474 = vadd.f32 0.0, %v473
      %475 = vmatmul.f32.gmra.mxu0 %v409
      %v476 = vpop.f32.mrf.mxu0
      %v477 = vadd.f32 0.0, %v476
      %478 = vmatmul.f32.gmra.mxu0 %v412
      %v479 = vpop.f32.mrf.mxu0
      %v480 = vadd.f32 0.0, %v479
      %481 = vmatmul.f32.gmra.mxu0 %v415
      %v482 = vpop.f32.mrf.mxu0
      %v483 = vadd.f32 0.0, %v482
      %484 = vmatmul.f32.gmra.mxu0 %v418
      %v485 = vpop.f32.mrf.mxu0
      %v486 = vadd.f32 0.0, %v485
      %487 = vmatmul.f32.gmra.mxu0 %v421
      %v488 = vpop.f32.mrf.mxu0
      %v489 = vadd.f32 0.0, %v488
      %490 = vmatmul.f32.gmra.mxu0 %v424
      %v491 = vpop.f32.mrf.mxu0
      %v492 = vadd.f32 0.0, %v491
      %493 = vmatmul.f32.gmra.mxu0 %v427
      %v494 = vpop.f32.mrf.mxu0
      %v495 = vadd.f32 0.0, %v494
      %496 = vmatmul.f32.gmra.mxu0 %v430
      %v497 = vpop.f32.mrf.mxu0
      %v498 = vadd.f32 0.0, %v497
      %499 = vdwg.mxu0
      %v501 = vsel %vm380, %v343, 0
      %v504 = vsel %vm380, %v344, 0
      %v507 = vsel %vm380, %v345, 0
      %v510 = vsel %vm380, %v346, 0
      %v513 = vsel %vm380, %v347, 0
      %v516 = vsel %vm380, %v348, 0
      %v519 = vsel %vm380, %v349, 0
      %v522 = vsel %vm380, %v350, 0
      %v525 = vsel %vm380, %v351, 0
      %v528 = vsel %vm380, %v352, 0
      %v531 = vsel %vm380, %v353, 0
      %v534 = vsel %vm380, %v354, 0
      %v537 = vsel %vm380, %v355, 0
      %v540 = vsel %vm380, %v356, 0
      %v543 = vsel %vm380, %v357, 0
      %v546 = vsel %vm380, %v358, 0
      %v549 = vsel %vm380, %v359, 0
      %551 = vmatpush.msra.mxu0 0.0
      %552 = vmatpush.msra.mxu0 0.0
      %553 = vmatpush.msra.mxu0 0.0
      %554 = vmatpush.msra.mxu0 0.0
      %555 = vmatpush.msra.mxu0 0.0
      %556 = vmatpush.msra.mxu0 0.0
      %557 = vmatpush.msra.mxu0 0.0
      %558 = vmatpush.msra.mxu0 0.0
      %559 = vmatpush.msra.mxu0 0.0
      %560 = vmatpush.msra.mxu0 0.0
      %561 = vmatpush.msra.mxu0 0.0
      %562 = vmatpush.msra.mxu0 0.0
      %563 = vmatpush.msra.mxu0 0.0
      %564 = vmatpush.msra.mxu0 0.0
      %565 = vmatpush.msra.mxu0 0.0
      %566 = vmatpush.msra.mxu0 %v360
      %567 = vmatmul.f32.gmra.mxu0 %v501
      %v568 = vpop.f32.mrf.mxu0
      %v569 = vadd.f32 %v450, %v568
      %570 = vmatmul.f32.gmra.mxu0 %v504
      %v571 = vpop.f32.mrf.mxu0
      %v572 = vadd.f32 %v453, %v571
      %573 = vmatmul.f32.gmra.mxu0 %v507
      %v574 = vpop.f32.mrf.mxu0
      %v575 = vadd.f32 %v456, %v574
      %576 = vmatmul.f32.gmra.mxu0 %v510
      %v577 = vpop.f32.mrf.mxu0
      %v578 = vadd.f32 %v459, %v577
      %579 = vmatmul.f32.gmra.mxu0 %v513
      %v580 = vpop.f32.mrf.mxu0
      %v581 = vadd.f32 %v462, %v580
      %582 = vmatmul.f32.gmra.mxu0 %v516
      %v583 = vpop.f32.mrf.mxu0
      %v584 = vadd.f32 %v465, %v583
      %585 = vmatmul.f32.gmra.mxu0 %v519
      %v586 = vpop.f32.mrf.mxu0
      %v587 = vadd.f32 %v468, %v586
      %588 = vmatmul.f32.gmra.mxu0 %v522
      %v589 = vpop.f32.mrf.mxu0
      %v590 = vadd.f32 %v471, %v589
      %591 = vmatmul.f32.gmra.mxu0 %v525
      %v592 = vpop.f32.mrf.mxu0
      %v593 = vadd.f32 %v474, %v592
      %594 = vmatmul.f32.gmra.mxu0 %v528
      %v595 = vpop.f32.mrf.mxu0
      %v596 = vadd.f32 %v477, %v595
      %597 = vmatmul.f32.gmra.mxu0 %v531
      %v598 = vpop.f32.mrf.mxu0
      %v599 = vadd.f32 %v480, %v598
      %600 = vmatmul.f32.gmra.mxu0 %v534
      %v601 = vpop.f32.mrf.mxu0
      %v602 = vadd.f32 %v483, %v601
      %603 = vmatmul.f32.gmra.mxu0 %v537
      %v604 = vpop.f32.mrf.mxu0
      %v605 = vadd.f32 %v486, %v604
      %606 = vmatmul.f32.gmra.mxu0 %v540
      %v607 = vpop.f32.mrf.mxu0
      %v608 = vadd.f32 %v489, %v607
      %609 = vmatmul.f32.gmra.mxu0 %v543
      %v610 = vpop.f32.mrf.mxu0
      %v611 = vadd.f32 %v492, %v610
      %612 = vmatmul.f32.gmra.mxu0 %v546
      %v613 = vpop.f32.mrf.mxu0
      %v614 = vadd.f32 %v495, %v613
      %615 = vmatmul.f32.gmra.mxu0 %v549
      %v616 = vpop.f32.mrf.mxu0
      %v617 = vadd.f32 %v498, %v616
      %618 = vdwg.mxu0
      %v619 = vld [vmem:[%s287 + $0x2] sm:$0xff]
      %v620 = vld [vmem:[%s287 + $0xa] sm:$0xff]
      %v621 = vld [vmem:[%s287 + $0x12] sm:$0xff]
      %v622 = vld [vmem:[%s287 + $0x1a] sm:$0xff]
      %v623 = vld [vmem:[%s287 + $0x22] sm:$0xff]
      %v624 = vld [vmem:[%s287 + $0x2a] sm:$0xff]
      %v625 = vld [vmem:[%s287 + $0x32] sm:$0xff]
      %v626 = vld [vmem:[%s287 + $0x3a] sm:$0xff]
      %v627 = vld [vmem:[%s287 + $0x42] sm:$0xff]
      %v628 = vld [vmem:[%s287 + $0x4a] sm:$0xff]
      %v629 = vld [vmem:[%s287 + $0x52] sm:$0xff]
      %v630 = vld [vmem:[%s287 + $0x5a] sm:$0xff]
      %v631 = vld [vmem:[%s287 + $0x62] sm:$0xff]
      %v632 = vld [vmem:[%s287 + $0x6a] sm:$0xff]
      %v633 = vld [vmem:[%s287 + $0x72] sm:$0xff]
      %v634 = vld [vmem:[%s287 + $0x7a] sm:$0xff]
      %v635 = vld [vmem:[%s287 + $0x82] sm:$0x3]
      %s636 = scalar_lea.vmem %s2, 16
      %v637 = vld [vmem:[%s636] sm:$0xff]
      %v639 = vsel %vm380, %v619, 0
      %v642 = vsel %vm380, %v620, 0
      %v645 = vsel %vm380, %v621, 0
      %v648 = vsel %vm380, %v622, 0
      %v651 = vsel %vm380, %v623, 0
      %v654 = vsel %vm380, %v624, 0
      %v657 = vsel %vm380, %v625, 0
      %v660 = vsel %vm380, %v626, 0
      %v663 = vsel %vm380, %v627, 0
      %v666 = vsel %vm380, %v628, 0
      %v669 = vsel %vm380, %v629, 0
      %v672 = vsel %vm380, %v630, 0
      %v675 = vsel %vm380, %v631, 0
      %v678 = vsel %vm380, %v632, 0
      %v681 = vsel %vm380, %v633, 0
      %v684 = vsel %vm380, %v634, 0
      %v687 = vsel %vm380, %v635, 0
      %689 = vmatpush.msra.mxu0 0.0
      %690 = vmatpush.msra.mxu0 0.0
      %691 = vmatpush.msra.mxu0 0.0
      %692 = vmatpush.msra.mxu0 0.0
      %693 = vmatpush.msra.mxu0 0.0
      %694 = vmatpush.msra.mxu0 0.0
      %695 = vmatpush.msra.mxu0 0.0
      %696 = vmatpush.msra.mxu0 0.0
      %697 = vmatpush.msra.mxu0 0.0
      %698 = vmatpush.msra.mxu0 0.0
      %699 = vmatpush.msra.mxu0 0.0
      %700 = vmatpush.msra.mxu0 0.0
      %701 = vmatpush.msra.mxu0 0.0
      %702 = vmatpush.msra.mxu0 0.0
      %703 = vmatpush.msra.mxu0 0.0
      %704 = vmatpush.msra.mxu0 %v637
      %705 = vmatmul.f32.gmra.mxu0 %v639
      %v706 = vpop.f32.mrf.mxu0
      %v707 = vadd.f32 0.0, %v706
      %708 = vmatmul.f32.gmra.mxu0 %v642
      %v709 = vpop.f32.mrf.mxu0
      %v710 = vadd.f32 0.0, %v709
      %711 = vmatmul.f32.gmra.mxu0 %v645
      %v712 = vpop.f32.mrf.mxu0
      %v713 = vadd.f32 0.0, %v712
      %714 = vmatmul.f32.gmra.mxu0 %v648
      %v715 = vpop.f32.mrf.mxu0
      %v716 = vadd.f32 0.0, %v715
      %717 = vmatmul.f32.gmra.mxu0 %v651
      %v718 = vpop.f32.mrf.mxu0
      %v719 = vadd.f32 0.0, %v718
      %720 = vmatmul.f32.gmra.mxu0 %v654
      %v721 = vpop.f32.mrf.mxu0
      %v722 = vadd.f32 0.0, %v721
      %723 = vmatmul.f32.gmra.mxu0 %v657
      %v724 = vpop.f32.mrf.mxu0
      %v725 = vadd.f32 0.0, %v724
      %726 = vmatmul.f32.gmra.mxu0 %v660
      %v727 = vpop.f32.mrf.mxu0
      %v728 = vadd.f32 0.0, %v727
      %729 = vmatmul.f32.gmra.mxu0 %v663
      %v730 = vpop.f32.mrf.mxu0
      %v731 = vadd.f32 0.0, %v730
      %732 = vmatmul.f32.gmra.mxu0 %v666
      %v733 = vpop.f32.mrf.mxu0
      %v734 = vadd.f32 0.0, %v733
      %735 = vmatmul.f32.gmra.mxu0 %v669
      %v736 = vpop.f32.mrf.mxu0
      %v737 = vadd.f32 0.0, %v736
      %738 = vmatmul.f32.gmra.mxu0 %v672
      %v739 = vpop.f32.mrf.mxu0
      %v740 = vadd.f32 0.0, %v739
      %741 = vmatmul.f32.gmra.mxu0 %v675
      %v742 = vpop.f32.mrf.mxu0
      %v743 = vadd.f32 0.0, %v742
      %744 = vmatmul.f32.gmra.mxu0 %v678
      %v745 = vpop.f32.mrf.mxu0
      %v746 = vadd.f32 0.0, %v745
      %747 = vmatmul.f32.gmra.mxu0 %v681
      %v748 = vpop.f32.mrf.mxu0
      %v749 = vadd.f32 0.0, %v748
      %750 = vmatmul.f32.gmra.mxu0 %v684
      %v751 = vpop.f32.mrf.mxu0
      %v752 = vadd.f32 0.0, %v751
      %753 = vmatmul.f32.gmra.mxu0 %v687
      %v754 = vpop.f32.mrf.mxu0
      %v755 = vadd.f32 0.0, %v754
      %756 = vdwg.mxu0
      %v757 = vadd.f32 %v569, %v707
      %v758 = vadd.f32 %v572, %v710
      %v759 = vadd.f32 %v575, %v713
      %v760 = vadd.f32 %v578, %v716
      %v761 = vadd.f32 %v581, %v719
      %v762 = vadd.f32 %v584, %v722
      %v763 = vadd.f32 %v587, %v725
      %v764 = vadd.f32 %v590, %v728
      %v765 = vadd.f32 %v593, %v731
      %v766 = vadd.f32 %v596, %v734
      %v767 = vadd.f32 %v599, %v737
      %v768 = vadd.f32 %v602, %v740
      %v769 = vadd.f32 %v605, %v743
      %v770 = vadd.f32 %v608, %v746
      %v771 = vadd.f32 %v611, %v749
      %v772 = vadd.f32 %v614, %v752
      %v773 = vadd.f32 %v617, %v755
      %v774 = vld [vmem:[%s287 + $0x6] sm:$0xff]
      %v775 = vld [vmem:[%s287 + $0xe] sm:$0xff]
      %v776 = vld [vmem:[%s287 + $0x16] sm:$0xff]
      %v777 = vld [vmem:[%s287 + $0x1e] sm:$0xff]
      %v778 = vld [vmem:[%s287 + $0x26] sm:$0xff]
      %v779 = vld [vmem:[%s287 + $0x2e] sm:$0xff]
      %v780 = vld [vmem:[%s287 + $0x36] sm:$0xff]
      %v781 = vld [vmem:[%s287 + $0x3e] sm:$0xff]
      %v782 = vld [vmem:[%s287 + $0x46] sm:$0xff]
      %v783 = vld [vmem:[%s287 + $0x4e] sm:$0xff]
      %v784 = vld [vmem:[%s287 + $0x56] sm:$0xff]
      %v785 = vld [vmem:[%s287 + $0x5e] sm:$0xff]
      %v786 = vld [vmem:[%s287 + $0x66] sm:$0xff]
      %v787 = vld [vmem:[%s287 + $0x6e] sm:$0xff]
      %v788 = vld [vmem:[%s287 + $0x76] sm:$0xff]
      %v789 = vld [vmem:[%s287 + $0x7e] sm:$0xff]
      %v790 = vld [vmem:[%s287 + $0x86] sm:$0x3]
      %s791 = scalar_lea.vmem %s2, 24
      %v792 = vld [vmem:[%s791] sm:$0xff]
      %v794 = vsel %vm380, %v774, 0
      %v797 = vsel %vm380, %v775, 0
      %v800 = vsel %vm380, %v776, 0
      %v803 = vsel %vm380, %v777, 0
      %v806 = vsel %vm380, %v778, 0
      %v809 = vsel %vm380, %v779, 0
      %v812 = vsel %vm380, %v780, 0
      %v815 = vsel %vm380, %v781, 0
      %v818 = vsel %vm380, %v782, 0
      %v821 = vsel %vm380, %v783, 0
      %v824 = vsel %vm380, %v784, 0
      %v827 = vsel %vm380, %v785, 0
      %v830 = vsel %vm380, %v786, 0
      %v833 = vsel %vm380, %v787, 0
      %v836 = vsel %vm380, %v788, 0
      %v839 = vsel %vm380, %v789, 0
      %v842 = vsel %vm380, %v790, 0
      %844 = vmatpush.msra.mxu0 0.0
      %845 = vmatpush.msra.mxu0 0.0
      %846 = vmatpush.msra.mxu0 0.0
      %847 = vmatpush.msra.mxu0 0.0
      %848 = vmatpush.msra.mxu0 0.0
      %849 = vmatpush.msra.mxu0 0.0
      %850 = vmatpush.msra.mxu0 0.0
      %851 = vmatpush.msra.mxu0 0.0
      %852 = vmatpush.msra.mxu0 0.0
      %853 = vmatpush.msra.mxu0 0.0
      %854 = vmatpush.msra.mxu0 0.0
      %855 = vmatpush.msra.mxu0 0.0
      %856 = vmatpush.msra.mxu0 0.0
      %857 = vmatpush.msra.mxu0 0.0
      %858 = vmatpush.msra.mxu0 0.0
      %859 = vmatpush.msra.mxu0 %v792
      %860 = vmatmul.f32.gmra.mxu0 %v794
      %v861 = vpop.f32.mrf.mxu0
      %v862 = vadd.f32 0.0, %v861
      %863 = vmatmul.f32.gmra.mxu0 %v797
      %v864 = vpop.f32.mrf.mxu0
      %v865 = vadd.f32 0.0, %v864
      %866 = vmatmul.f32.gmra.mxu0 %v800
      %v867 = vpop.f32.mrf.mxu0
      %v868 = vadd.f32 0.0, %v867
      %869 = vmatmul.f32.gmra.mxu0 %v803
      %v870 = vpop.f32.mrf.mxu0
      %v871 = vadd.f32 0.0, %v870
      %872 = vmatmul.f32.gmra.mxu0 %v806
      %v873 = vpop.f32.mrf.mxu0
      %v874 = vadd.f32 0.0, %v873
      %875 = vmatmul.f32.gmra.mxu0 %v809
      %v876 = vpop.f32.mrf.mxu0
      %v877 = vadd.f32 0.0, %v876
      %878 = vmatmul.f32.gmra.mxu0 %v812
      %v879 = vpop.f32.mrf.mxu0
      %v880 = vadd.f32 0.0, %v879
      %881 = vmatmul.f32.gmra.mxu0 %v815
      %v882 = vpop.f32.mrf.mxu0
      %v883 = vadd.f32 0.0, %v882
      %884 = vmatmul.f32.gmra.mxu0 %v818
      %v885 = vpop.f32.mrf.mxu0
      %v886 = vadd.f32 0.0, %v885
      %887 = vmatmul.f32.gmra.mxu0 %v821
      %v888 = vpop.f32.mrf.mxu0
      %v889 = vadd.f32 0.0, %v888
      %890 = vmatmul.f32.gmra.mxu0 %v824
      %v891 = vpop.f32.mrf.mxu0
      %v892 = vadd.f32 0.0, %v891
      %893 = vmatmul.f32.gmra.mxu0 %v827
      %v894 = vpop.f32.mrf.mxu0
      %v895 = vadd.f32 0.0, %v894
      %896 = vmatmul.f32.gmra.mxu0 %v830
      %v897 = vpop.f32.mrf.mxu0
      %v898 = vadd.f32 0.0, %v897
      %899 = vmatmul.f32.gmra.mxu0 %v833
      %v900 = vpop.f32.mrf.mxu0
      %v901 = vadd.f32 0.0, %v900
      %902 = vmatmul.f32.gmra.mxu0 %v836
      %v903 = vpop.f32.mrf.mxu0
      %v904 = vadd.f32 0.0, %v903
      %905 = vmatmul.f32.gmra.mxu0 %v839
      %v906 = vpop.f32.mrf.mxu0
      %v907 = vadd.f32 0.0, %v906
      %908 = vmatmul.f32.gmra.mxu0 %v842
      %v909 = vpop.f32.mrf.mxu0
      %v910 = vadd.f32 0.0, %v909
      %911 = vdwg.mxu0
      %v912 = vadd.f32 %v757, %v862
      %v913 = vadd.f32 %v758, %v865
      %v914 = vadd.f32 %v759, %v868
      %v915 = vadd.f32 %v760, %v871
      %v916 = vadd.f32 %v761, %v874
      %v917 = vadd.f32 %v762, %v877
      %v918 = vadd.f32 %v763, %v880
      %v919 = vadd.f32 %v764, %v883
      %v920 = vadd.f32 %v765, %v886
      %v921 = vadd.f32 %v766, %v889
      %v922 = vadd.f32 %v767, %v892
      %v923 = vadd.f32 %v768, %v895
      %v924 = vadd.f32 %v769, %v898
      %v925 = vadd.f32 %v770, %v901
      %v926 = vadd.f32 %v771, %v904
      %v927 = vadd.f32 %v772, %v907
      %v928 = vadd.f32 %v773, %v910
      %v929 = vld [vmem:[%s287 + $0x7] sm:$0xff]
      %v930 = vld [vmem:[%s287 + $0xf] sm:$0xff]
      %v931 = vld [vmem:[%s287 + $0x17] sm:$0xff]
      %v932 = vld [vmem:[%s287 + $0x1f] sm:$0xff]
      %v933 = vld [vmem:[%s287 + $0x27] sm:$0xff]
      %v934 = vld [vmem:[%s287 + $0x2f] sm:$0xff]
      %v935 = vld [vmem:[%s287 + $0x37] sm:$0xff]
      %v936 = vld [vmem:[%s287 + $0x3f] sm:$0xff]
      %v937 = vld [vmem:[%s287 + $0x47] sm:$0xff]
      %v938 = vld [vmem:[%s287 + $0x4f] sm:$0xff]
      %v939 = vld [vmem:[%s287 + $0x57] sm:$0xff]
      %v940 = vld [vmem:[%s287 + $0x5f] sm:$0xff]
      %v941 = vld [vmem:[%s287 + $0x67] sm:$0xff]
      %v942 = vld [vmem:[%s287 + $0x6f] sm:$0xff]
      %v943 = vld [vmem:[%s287 + $0x77] sm:$0xff]
      %v944 = vld [vmem:[%s287 + $0x7f] sm:$0xff]
      %v945 = vld [vmem:[%s287 + $0x87] sm:$0x3]
      %s946 = scalar_lea.vmem %s2, 32
      %v947 = vld [vmem:[%s946] sm:$0xff]
      %v949 = vsel %vm380, %v929, 0
      %v952 = vsel %vm380, %v930, 0
      %v955 = vsel %vm380, %v931, 0
      %v958 = vsel %vm380, %v932, 0
      %v961 = vsel %vm380, %v933, 0
      %v964 = vsel %vm380, %v934, 0
      %v967 = vsel %vm380, %v935, 0
      %v970 = vsel %vm380, %v936, 0
      %v973 = vsel %vm380, %v937, 0
      %v976 = vsel %vm380, %v938, 0
      %v979 = vsel %vm380, %v939, 0
      %v982 = vsel %vm380, %v940, 0
      %v985 = vsel %vm380, %v941, 0
      %v988 = vsel %vm380, %v942, 0
      %v991 = vsel %vm380, %v943, 0
      %v994 = vsel %vm380, %v944, 0
      %v997 = vsel %vm380, %v945, 0
      %999 = vmatpush.msra.mxu0 0.0
      %1000 = vmatpush.msra.mxu0 0.0
      %1001 = vmatpush.msra.mxu0 0.0
      %1002 = vmatpush.msra.mxu0 0.0
      %1003 = vmatpush.msra.mxu0 0.0
      %1004 = vmatpush.msra.mxu0 0.0
      %1005 = vmatpush.msra.mxu0 0.0
      %1006 = vmatpush.msra.mxu0 0.0
      %1007 = vmatpush.msra.mxu0 0.0
      %1008 = vmatpush.msra.mxu0 0.0
      %1009 = vmatpush.msra.mxu0 0.0
      %1010 = vmatpush.msra.mxu0 0.0
      %1011 = vmatpush.msra.mxu0 0.0
      %1012 = vmatpush.msra.mxu0 0.0
      %1013 = vmatpush.msra.mxu0 0.0
      %1014 = vmatpush.msra.mxu0 %v947
      %1015 = vmatmul.f32.gmra.mxu0 %v949
      %v1016 = vpop.f32.mrf.mxu0
      %v1017 = vadd.f32 0.0, %v1016
      %1018 = vmatmul.f32.gmra.mxu0 %v952
      %v1019 = vpop.f32.mrf.mxu0
      %v1020 = vadd.f32 0.0, %v1019
      %1021 = vmatmul.f32.gmra.mxu0 %v955
      %v1022 = vpop.f32.mrf.mxu0
      %v1023 = vadd.f32 0.0, %v1022
      %1024 = vmatmul.f32.gmra.mxu0 %v958
      %v1025 = vpop.f32.mrf.mxu0
      %v1026 = vadd.f32 0.0, %v1025
      %1027 = vmatmul.f32.gmra.mxu0 %v961
      %v1028 = vpop.f32.mrf.mxu0
      %v1029 = vadd.f32 0.0, %v1028
      %1030 = vmatmul.f32.gmra.mxu0 %v964
      %v1031 = vpop.f32.mrf.mxu0
      %v1032 = vadd.f32 0.0, %v1031
      %1033 = vmatmul.f32.gmra.mxu0 %v967
      %v1034 = vpop.f32.mrf.mxu0
      %v1035 = vadd.f32 0.0, %v1034
      %1036 = vmatmul.f32.gmra.mxu0 %v970
      %v1037 = vpop.f32.mrf.mxu0
      %v1038 = vadd.f32 0.0, %v1037
      %1039 = vmatmul.f32.gmra.mxu0 %v973
      %v1040 = vpop.f32.mrf.mxu0
      %v1041 = vadd.f32 0.0, %v1040
      %1042 = vmatmul.f32.gmra.mxu0 %v976
      %v1043 = vpop.f32.mrf.mxu0
      %v1044 = vadd.f32 0.0, %v1043
      %1045 = vmatmul.f32.gmra.mxu0 %v979
      %v1046 = vpop.f32.mrf.mxu0
      %v1047 = vadd.f32 0.0, %v1046
      %1048 = vmatmul.f32.gmra.mxu0 %v982
      %v1049 = vpop.f32.mrf.mxu0
      %v1050 = vadd.f32 0.0, %v1049
      %1051 = vmatmul.f32.gmra.mxu0 %v985
      %v1052 = vpop.f32.mrf.mxu0
      %v1053 = vadd.f32 0.0, %v1052
      %1054 = vmatmul.f32.gmra.mxu0 %v988
      %v1055 = vpop.f32.mrf.mxu0
      %v1056 = vadd.f32 0.0, %v1055
      %1057 = vmatmul.f32.gmra.mxu0 %v991
      %v1058 = vpop.f32.mrf.mxu0
      %v1059 = vadd.f32 0.0, %v1058
      %1060 = vmatmul.f32.gmra.mxu0 %v994
      %v1061 = vpop.f32.mrf.mxu0
      %v1062 = vadd.f32 0.0, %v1061
      %1063 = vmatmul.f32.gmra.mxu0 %v997
      %v1064 = vpop.f32.mrf.mxu0
      %v1065 = vadd.f32 0.0, %v1064
      %1066 = vdwg.mxu0
      %v1067 = vadd.f32 %v912, %v1017
      %v1068 = vadd.f32 %v913, %v1020
      %v1069 = vadd.f32 %v914, %v1023
      %v1070 = vadd.f32 %v915, %v1026
      %v1071 = vadd.f32 %v916, %v1029
      %v1072 = vadd.f32 %v917, %v1032
      %v1073 = vadd.f32 %v918, %v1035
      %v1074 = vadd.f32 %v919, %v1038
      %v1075 = vadd.f32 %v920, %v1041
      %v1076 = vadd.f32 %v921, %v1044
      %v1077 = vadd.f32 %v922, %v1047
      %v1078 = vadd.f32 %v923, %v1050
      %v1079 = vadd.f32 %v924, %v1053
      %v1080 = vadd.f32 %v925, %v1056
      %v1081 = vadd.f32 %v926, %v1059
      %v1082 = vadd.f32 %v927, %v1062
      %v1083 = vadd.f32 %v928, %v1065
      %v1084 = vld [vmem:[%s287 + $0x8] sm:$0xff]
      %v1085 = vld [vmem:[%s287 + $0x10] sm:$0xff]
      %v1086 = vld [vmem:[%s287 + $0x18] sm:$0xff]
      %v1087 = vld [vmem:[%s287 + $0x20] sm:$0xff]
      %v1088 = vld [vmem:[%s287 + $0x28] sm:$0xff]
      %v1089 = vld [vmem:[%s287 + $0x30] sm:$0xff]
      %v1090 = vld [vmem:[%s287 + $0x38] sm:$0xff]
      %v1091 = vld [vmem:[%s287 + $0x40] sm:$0xff]
      %v1092 = vld [vmem:[%s287 + $0x48] sm:$0xff]
      %v1093 = vld [vmem:[%s287 + $0x50] sm:$0xff]
      %v1094 = vld [vmem:[%s287 + $0x58] sm:$0xff]
      %v1095 = vld [vmem:[%s287 + $0x60] sm:$0xff]
      %v1096 = vld [vmem:[%s287 + $0x68] sm:$0xff]
      %v1097 = vld [vmem:[%s287 + $0x70] sm:$0xff]
      %v1098 = vld [vmem:[%s287 + $0x78] sm:$0xff]
      %v1099 = vld [vmem:[%s287 + $0x80] sm:$0xff]
      %v1100 = vld [vmem:[%s287 + $0x88] sm:$0x3]
      %s1101 = scalar_lea.vmem %s2, 40
      %v1102 = vld [vmem:[%s1101] sm:$0xff]
      %v1104 = vsel %vm380, %v1084, 0
      %v1107 = vsel %vm380, %v1085, 0
      %v1110 = vsel %vm380, %v1086, 0
      %v1113 = vsel %vm380, %v1087, 0
      %v1116 = vsel %vm380, %v1088, 0
      %v1119 = vsel %vm380, %v1089, 0
      %v1122 = vsel %vm380, %v1090, 0
      %v1125 = vsel %vm380, %v1091, 0
      %v1128 = vsel %vm380, %v1092, 0
      %v1131 = vsel %vm380, %v1093, 0
      %v1134 = vsel %vm380, %v1094, 0
      %v1137 = vsel %vm380, %v1095, 0
      %v1140 = vsel %vm380, %v1096, 0
      %v1143 = vsel %vm380, %v1097, 0
      %v1146 = vsel %vm380, %v1098, 0
      %v1149 = vsel %vm380, %v1099, 0
      %v1152 = vsel %vm380, %v1100, 0
      %1154 = vmatpush.msra.mxu0 0.0
      %1155 = vmatpush.msra.mxu0 0.0
      %1156 = vmatpush.msra.mxu0 0.0
      %1157 = vmatpush.msra.mxu0 0.0
      %1158 = vmatpush.msra.mxu0 0.0
      %1159 = vmatpush.msra.mxu0 0.0
      %1160 = vmatpush.msra.mxu0 0.0
      %1161 = vmatpush.msra.mxu0 0.0
      %1162 = vmatpush.msra.mxu0 0.0
      %1163 = vmatpush.msra.mxu0 0.0
      %1164 = vmatpush.msra.mxu0 0.0
      %1165 = vmatpush.msra.mxu0 0.0
      %1166 = vmatpush.msra.mxu0 0.0
      %1167 = vmatpush.msra.mxu0 0.0
      %1168 = vmatpush.msra.mxu0 0.0
      %1169 = vmatpush.msra.mxu0 %v1102
      %1170 = vmatmul.f32.gmra.mxu0 %v1104
      %v1171 = vpop.f32.mrf.mxu0
      %v1172 = vadd.f32 0.0, %v1171
      %1173 = vmatmul.f32.gmra.mxu0 %v1107
      %v1174 = vpop.f32.mrf.mxu0
      %v1175 = vadd.f32 0.0, %v1174
      %1176 = vmatmul.f32.gmra.mxu0 %v1110
      %v1177 = vpop.f32.mrf.mxu0
      %v1178 = vadd.f32 0.0, %v1177
      %1179 = vmatmul.f32.gmra.mxu0 %v1113
      %v1180 = vpop.f32.mrf.mxu0
      %v1181 = vadd.f32 0.0, %v1180
      %1182 = vmatmul.f32.gmra.mxu0 %v1116
      %v1183 = vpop.f32.mrf.mxu0
      %v1184 = vadd.f32 0.0, %v1183
      %1185 = vmatmul.f32.gmra.mxu0 %v1119
      %v1186 = vpop.f32.mrf.mxu0
      %v1187 = vadd.f32 0.0, %v1186
      %1188 = vmatmul.f32.gmra.mxu0 %v1122
      %v1189 = vpop.f32.mrf.mxu0
      %v1190 = vadd.f32 0.0, %v1189
      %1191 = vmatmul.f32.gmra.mxu0 %v1125
      %v1192 = vpop.f32.mrf.mxu0
      %v1193 = vadd.f32 0.0, %v1192
      %1194 = vmatmul.f32.gmra.mxu0 %v1128
      %v1195 = vpop.f32.mrf.mxu0
      %v1196 = vadd.f32 0.0, %v1195
      %1197 = vmatmul.f32.gmra.mxu0 %v1131
      %v1198 = vpop.f32.mrf.mxu0
      %v1199 = vadd.f32 0.0, %v1198
      %1200 = vmatmul.f32.gmra.mxu0 %v1134
      %v1201 = vpop.f32.mrf.mxu0
      %v1202 = vadd.f32 0.0, %v1201
      %1203 = vmatmul.f32.gmra.mxu0 %v1137
      %v1204 = vpop.f32.mrf.mxu0
      %v1205 = vadd.f32 0.0, %v1204
      %1206 = vmatmul.f32.gmra.mxu0 %v1140
      %v1207 = vpop.f32.mrf.mxu0
      %v1208 = vadd.f32 0.0, %v1207
      %1209 = vmatmul.f32.gmra.mxu0 %v1143
      %v1210 = vpop.f32.mrf.mxu0
      %v1211 = vadd.f32 0.0, %v1210
      %1212 = vmatmul.f32.gmra.mxu0 %v1146
      %v1213 = vpop.f32.mrf.mxu0
      %v1214 = vadd.f32 0.0, %v1213
      %1215 = vmatmul.f32.gmra.mxu0 %v1149
      %v1216 = vpop.f32.mrf.mxu0
      %v1217 = vadd.f32 0.0, %v1216
      %1218 = vmatmul.f32.gmra.mxu0 %v1152
      %v1219 = vpop.f32.mrf.mxu0
      %v1220 = vadd.f32 0.0, %v1219
      %1221 = vdwg.mxu0
      %v1222 = vadd.f32 %v1067, %v1172
      %v1223 = vadd.f32 %v1068, %v1175
      %v1224 = vadd.f32 %v1069, %v1178
      %v1225 = vadd.f32 %v1070, %v1181
      %v1226 = vadd.f32 %v1071, %v1184
      %v1227 = vadd.f32 %v1072, %v1187
      %v1228 = vadd.f32 %v1073, %v1190
      %v1229 = vadd.f32 %v1074, %v1193
      %v1230 = vadd.f32 %v1075, %v1196
      %v1231 = vadd.f32 %v1076, %v1199
      %v1232 = vadd.f32 %v1077, %v1202
      %v1233 = vadd.f32 %v1078, %v1205
      %v1234 = vadd.f32 %v1079, %v1208
      %v1235 = vadd.f32 %v1080, %v1211
      %v1236 = vadd.f32 %v1081, %v1214
      %v1237 = vadd.f32 %v1082, %v1217
      %v1238 = vadd.f32 %v1083, %v1220
      %v1239 = vld [vmem:[%s287 + $0xc] sm:$0xff]
      %v1240 = vld [vmem:[%s287 + $0x14] sm:$0xff]
      %v1241 = vld [vmem:[%s287 + $0x1c] sm:$0xff]
      %v1242 = vld [vmem:[%s287 + $0x24] sm:$0xff]
      %v1243 = vld [vmem:[%s287 + $0x2c] sm:$0xff]
      %v1244 = vld [vmem:[%s287 + $0x34] sm:$0xff]
      %v1245 = vld [vmem:[%s287 + $0x3c] sm:$0xff]
      %v1246 = vld [vmem:[%s287 + $0x44] sm:$0xff]
      %v1247 = vld [vmem:[%s287 + $0x4c] sm:$0xff]
      %v1248 = vld [vmem:[%s287 + $0x54] sm:$0xff]
      %v1249 = vld [vmem:[%s287 + $0x5c] sm:$0xff]
      %v1250 = vld [vmem:[%s287 + $0x64] sm:$0xff]
      %v1251 = vld [vmem:[%s287 + $0x6c] sm:$0xff]
      %v1252 = vld [vmem:[%s287 + $0x74] sm:$0xff]
      %v1253 = vld [vmem:[%s287 + $0x7c] sm:$0xff]
      %v1254 = vld [vmem:[%s287 + $0x84] sm:$0xff]
      %v1255 = vld [vmem:[%s287 + $0x8c] sm:$0x3]
      %s1256 = scalar_lea.vmem %s2, 48
      %v1257 = vld [vmem:[%s1256] sm:$0xff]
      %v1259 = vsel %vm380, %v1239, 0
      %v1262 = vsel %vm380, %v1240, 0
      %v1265 = vsel %vm380, %v1241, 0
      %v1268 = vsel %vm380, %v1242, 0
      %v1271 = vsel %vm380, %v1243, 0
      %v1274 = vsel %vm380, %v1244, 0
      %v1277 = vsel %vm380, %v1245, 0
      %v1280 = vsel %vm380, %v1246, 0
      %v1283 = vsel %vm380, %v1247, 0
      %v1286 = vsel %vm380, %v1248, 0
      %v1289 = vsel %vm380, %v1249, 0
      %v1292 = vsel %vm380, %v1250, 0
      %v1295 = vsel %vm380, %v1251, 0
      %v1298 = vsel %vm380, %v1252, 0
      %v1301 = vsel %vm380, %v1253, 0
      %v1304 = vsel %vm380, %v1254, 0
      %v1307 = vsel %vm380, %v1255, 0
      %1309 = vmatpush.msra.mxu0 0.0
      %1310 = vmatpush.msra.mxu0 0.0
      %1311 = vmatpush.msra.mxu0 0.0
      %1312 = vmatpush.msra.mxu0 0.0
      %1313 = vmatpush.msra.mxu0 0.0
      %1314 = vmatpush.msra.mxu0 0.0
      %1315 = vmatpush.msra.mxu0 0.0
      %1316 = vmatpush.msra.mxu0 0.0
      %1317 = vmatpush.msra.mxu0 0.0
      %1318 = vmatpush.msra.mxu0 0.0
      %1319 = vmatpush.msra.mxu0 0.0
      %1320 = vmatpush.msra.mxu0 0.0
      %1321 = vmatpush.msra.mxu0 0.0
      %1322 = vmatpush.msra.mxu0 0.0
      %1323 = vmatpush.msra.mxu0 0.0
      %1324 = vmatpush.msra.mxu0 %v1257
      %1325 = vmatmul.f32.gmra.mxu0 %v1259
      %v1326 = vpop.f32.mrf.mxu0
      %v1327 = vadd.f32 0.0, %v1326
      %1328 = vmatmul.f32.gmra.mxu0 %v1262
      %v1329 = vpop.f32.mrf.mxu0
      %v1330 = vadd.f32 0.0, %v1329
      %1331 = vmatmul.f32.gmra.mxu0 %v1265
      %v1332 = vpop.f32.mrf.mxu0
      %v1333 = vadd.f32 0.0, %v1332
      %1334 = vmatmul.f32.gmra.mxu0 %v1268
      %v1335 = vpop.f32.mrf.mxu0
      %v1336 = vadd.f32 0.0, %v1335
      %1337 = vmatmul.f32.gmra.mxu0 %v1271
      %v1338 = vpop.f32.mrf.mxu0
      %v1339 = vadd.f32 0.0, %v1338
      %1340 = vmatmul.f32.gmra.mxu0 %v1274
      %v1341 = vpop.f32.mrf.mxu0
      %v1342 = vadd.f32 0.0, %v1341
      %1343 = vmatmul.f32.gmra.mxu0 %v1277
      %v1344 = vpop.f32.mrf.mxu0
      %v1345 = vadd.f32 0.0, %v1344
      %1346 = vmatmul.f32.gmra.mxu0 %v1280
      %v1347 = vpop.f32.mrf.mxu0
      %v1348 = vadd.f32 0.0, %v1347
      %1349 = vmatmul.f32.gmra.mxu0 %v1283
      %v1350 = vpop.f32.mrf.mxu0
      %v1351 = vadd.f32 0.0, %v1350
      %1352 = vmatmul.f32.gmra.mxu0 %v1286
      %v1353 = vpop.f32.mrf.mxu0
      %v1354 = vadd.f32 0.0, %v1353
      %1355 = vmatmul.f32.gmra.mxu0 %v1289
      %v1356 = vpop.f32.mrf.mxu0
      %v1357 = vadd.f32 0.0, %v1356
      %1358 = vmatmul.f32.gmra.mxu0 %v1292
      %v1359 = vpop.f32.mrf.mxu0
      %v1360 = vadd.f32 0.0, %v1359
      %1361 = vmatmul.f32.gmra.mxu0 %v1295
      %v1362 = vpop.f32.mrf.mxu0
      %v1363 = vadd.f32 0.0, %v1362
      %1364 = vmatmul.f32.gmra.mxu0 %v1298
      %v1365 = vpop.f32.mrf.mxu0
      %v1366 = vadd.f32 0.0, %v1365
      %1367 = vmatmul.f32.gmra.mxu0 %v1301
      %v1368 = vpop.f32.mrf.mxu0
      %v1369 = vadd.f32 0.0, %v1368
      %1370 = vmatmul.f32.gmra.mxu0 %v1304
      %v1371 = vpop.f32.mrf.mxu0
      %v1372 = vadd.f32 0.0, %v1371
      %1373 = vmatmul.f32.gmra.mxu0 %v1307
      %v1374 = vpop.f32.mrf.mxu0
      %v1375 = vadd.f32 0.0, %v1374
      %1376 = vdwg.mxu0
      %v1377 = vadd.f32 %v1222, %v1327
      %v1378 = vadd.f32 %v1223, %v1330
      %v1379 = vadd.f32 %v1224, %v1333
      %v1380 = vadd.f32 %v1225, %v1336
      %v1381 = vadd.f32 %v1226, %v1339
      %v1382 = vadd.f32 %v1227, %v1342
      %v1383 = vadd.f32 %v1228, %v1345
      %v1384 = vadd.f32 %v1229, %v1348
      %v1385 = vadd.f32 %v1230, %v1351
      %v1386 = vadd.f32 %v1231, %v1354
      %v1387 = vadd.f32 %v1232, %v1357
      %v1388 = vadd.f32 %v1233, %v1360
      %v1389 = vadd.f32 %v1234, %v1363
      %v1390 = vadd.f32 %v1235, %v1366
      %v1391 = vadd.f32 %v1236, %v1369
      %v1392 = vadd.f32 %v1237, %v1372
      %v1393 = vadd.f32 %v1238, %v1375
      %v1394 = vld [vmem:[%s287 + $0xd] sm:$0xff]
      %v1395 = vld [vmem:[%s287 + $0x15] sm:$0xff]
      %v1396 = vld [vmem:[%s287 + $0x1d] sm:$0xff]
      %v1397 = vld [vmem:[%s287 + $0x25] sm:$0xff]
      %v1398 = vld [vmem:[%s287 + $0x2d] sm:$0xff]
      %v1399 = vld [vmem:[%s287 + $0x35] sm:$0xff]
      %v1400 = vld [vmem:[%s287 + $0x3d] sm:$0xff]
      %v1401 = vld [vmem:[%s287 + $0x45] sm:$0xff]
      %v1402 = vld [vmem:[%s287 + $0x4d] sm:$0xff]
      %v1403 = vld [vmem:[%s287 + $0x55] sm:$0xff]
      %v1404 = vld [vmem:[%s287 + $0x5d] sm:$0xff]
      %v1405 = vld [vmem:[%s287 + $0x65] sm:$0xff]
      %v1406 = vld [vmem:[%s287 + $0x6d] sm:$0xff]
      %v1407 = vld [vmem:[%s287 + $0x75] sm:$0xff]
      %v1408 = vld [vmem:[%s287 + $0x7d] sm:$0xff]
      %v1409 = vld [vmem:[%s287 + $0x85] sm:$0xff]
      %v1410 = vld [vmem:[%s287 + $0x8d] sm:$0x3]
      %s1411 = scalar_lea.vmem %s2, 56
      %v1412 = vld [vmem:[%s1411] sm:$0xff]
      %v1414 = vsel %vm380, %v1394, 0
      %v1417 = vsel %vm380, %v1395, 0
      %v1420 = vsel %vm380, %v1396, 0
      %v1423 = vsel %vm380, %v1397, 0
      %v1426 = vsel %vm380, %v1398, 0
      %v1429 = vsel %vm380, %v1399, 0
      %v1432 = vsel %vm380, %v1400, 0
      %v1435 = vsel %vm380, %v1401, 0
      %v1438 = vsel %vm380, %v1402, 0
      %v1441 = vsel %vm380, %v1403, 0
      %v1444 = vsel %vm380, %v1404, 0
      %v1447 = vsel %vm380, %v1405, 0
      %v1450 = vsel %vm380, %v1406, 0
      %v1453 = vsel %vm380, %v1407, 0
      %v1456 = vsel %vm380, %v1408, 0
      %v1459 = vsel %vm380, %v1409, 0
      %v1462 = vsel %vm380, %v1410, 0
      %1464 = vmatpush.msra.mxu0 0.0
      %1465 = vmatpush.msra.mxu0 0.0
      %1466 = vmatpush.msra.mxu0 0.0
      %1467 = vmatpush.msra.mxu0 0.0
      %1468 = vmatpush.msra.mxu0 0.0
      %1469 = vmatpush.msra.mxu0 0.0
      %1470 = vmatpush.msra.mxu0 0.0
      %1471 = vmatpush.msra.mxu0 0.0
      %1472 = vmatpush.msra.mxu0 0.0
      %1473 = vmatpush.msra.mxu0 0.0
      %1474 = vmatpush.msra.mxu0 0.0
      %1475 = vmatpush.msra.mxu0 0.0
      %1476 = vmatpush.msra.mxu0 0.0
      %1477 = vmatpush.msra.mxu0 0.0
      %1478 = vmatpush.msra.mxu0 0.0
      %1479 = vmatpush.msra.mxu0 %v1412
      %1480 = vmatmul.f32.gmra.mxu0 %v1414
      %v1481 = vpop.f32.mrf.mxu0
      %v1482 = vadd.f32 0.0, %v1481
      %1483 = vmatmul.f32.gmra.mxu0 %v1417
      %v1484 = vpop.f32.mrf.mxu0
      %v1485 = vadd.f32 0.0, %v1484
      %1486 = vmatmul.f32.gmra.mxu0 %v1420
      %v1487 = vpop.f32.mrf.mxu0
      %v1488 = vadd.f32 0.0, %v1487
      %1489 = vmatmul.f32.gmra.mxu0 %v1423
      %v1490 = vpop.f32.mrf.mxu0
      %v1491 = vadd.f32 0.0, %v1490
      %1492 = vmatmul.f32.gmra.mxu0 %v1426
      %v1493 = vpop.f32.mrf.mxu0
      %v1494 = vadd.f32 0.0, %v1493
      %1495 = vmatmul.f32.gmra.mxu0 %v1429
      %v1496 = vpop.f32.mrf.mxu0
      %v1497 = vadd.f32 0.0, %v1496
      %1498 = vmatmul.f32.gmra.mxu0 %v1432
      %v1499 = vpop.f32.mrf.mxu0
      %v1500 = vadd.f32 0.0, %v1499
      %1501 = vmatmul.f32.gmra.mxu0 %v1435
      %v1502 = vpop.f32.mrf.mxu0
      %v1503 = vadd.f32 0.0, %v1502
      %1504 = vmatmul.f32.gmra.mxu0 %v1438
      %v1505 = vpop.f32.mrf.mxu0
      %v1506 = vadd.f32 0.0, %v1505
      %1507 = vmatmul.f32.gmra.mxu0 %v1441
      %v1508 = vpop.f32.mrf.mxu0
      %v1509 = vadd.f32 0.0, %v1508
      %1510 = vmatmul.f32.gmra.mxu0 %v1444
      %v1511 = vpop.f32.mrf.mxu0
      %v1512 = vadd.f32 0.0, %v1511
      %1513 = vmatmul.f32.gmra.mxu0 %v1447
      %v1514 = vpop.f32.mrf.mxu0
      %v1515 = vadd.f32 0.0, %v1514
      %1516 = vmatmul.f32.gmra.mxu0 %v1450
      %v1517 = vpop.f32.mrf.mxu0
      %v1518 = vadd.f32 0.0, %v1517
      %1519 = vmatmul.f32.gmra.mxu0 %v1453
      %v1520 = vpop.f32.mrf.mxu0
      %v1521 = vadd.f32 0.0, %v1520
      %1522 = vmatmul.f32.gmra.mxu0 %v1456
      %v1523 = vpop.f32.mrf.mxu0
      %v1524 = vadd.f32 0.0, %v1523
      %1525 = vmatmul.f32.gmra.mxu0 %v1459
      %v1526 = vpop.f32.mrf.mxu0
      %v1527 = vadd.f32 0.0, %v1526
      %1528 = vmatmul.f32.gmra.mxu0 %v1462
      %v1529 = vpop.f32.mrf.mxu0
      %v1530 = vadd.f32 0.0, %v1529
      %1531 = vdwg.mxu0
      %v1532 = vadd.f32 %v1377, %v1482
      %v1533 = vadd.f32 %v1378, %v1485
      %v1534 = vadd.f32 %v1379, %v1488
      %v1535 = vadd.f32 %v1380, %v1491
      %v1536 = vadd.f32 %v1381, %v1494
      %v1537 = vadd.f32 %v1382, %v1497
      %v1538 = vadd.f32 %v1383, %v1500
      %v1539 = vadd.f32 %v1384, %v1503
      %v1540 = vadd.f32 %v1385, %v1506
      %v1541 = vadd.f32 %v1386, %v1509
      %v1542 = vadd.f32 %v1387, %v1512
      %v1543 = vadd.f32 %v1388, %v1515
      %v1544 = vadd.f32 %v1389, %v1518
      %v1545 = vadd.f32 %v1390, %v1521
      %v1546 = vadd.f32 %v1391, %v1524
      %v1547 = vadd.f32 %v1392, %v1527
      %v1548 = vadd.f32 %v1393, %v1530
      %v1549 = vld [vmem:[%s287 + $0xe] sm:$0xff]
      %v1550 = vld [vmem:[%s287 + $0x16] sm:$0xff]
      %v1551 = vld [vmem:[%s287 + $0x1e] sm:$0xff]
      %v1552 = vld [vmem:[%s287 + $0x26] sm:$0xff]
      %v1553 = vld [vmem:[%s287 + $0x2e] sm:$0xff]
      %v1554 = vld [vmem:[%s287 + $0x36] sm:$0xff]
      %v1555 = vld [vmem:[%s287 + $0x3e] sm:$0xff]
      %v1556 = vld [vmem:[%s287 + $0x46] sm:$0xff]
      %v1557 = vld [vmem:[%s287 + $0x4e] sm:$0xff]
      %v1558 = vld [vmem:[%s287 + $0x56] sm:$0xff]
      %v1559 = vld [vmem:[%s287 + $0x5e] sm:$0xff]
      %v1560 = vld [vmem:[%s287 + $0x66] sm:$0xff]
      %v1561 = vld [vmem:[%s287 + $0x6e] sm:$0xff]
      %v1562 = vld [vmem:[%s287 + $0x76] sm:$0xff]
      %v1563 = vld [vmem:[%s287 + $0x7e] sm:$0xff]
      %v1564 = vld [vmem:[%s287 + $0x86] sm:$0xff]
      %v1565 = vld [vmem:[%s287 + $0x8e] sm:$0x3]
      %s1566 = scalar_lea.vmem %s2, 64
      %v1567 = vld [vmem:[%s1566] sm:$0xff]
      %v1569 = vsel %vm380, %v1549, 0
      %v1572 = vsel %vm380, %v1550, 0
      %v1575 = vsel %vm380, %v1551, 0
      %v1578 = vsel %vm380, %v1552, 0
      %v1581 = vsel %vm380, %v1553, 0
      %v1584 = vsel %vm380, %v1554, 0
      %v1587 = vsel %vm380, %v1555, 0
      %v1590 = vsel %vm380, %v1556, 0
      %v1593 = vsel %vm380, %v1557, 0
      %v1596 = vsel %vm380, %v1558, 0
      %v1599 = vsel %vm380, %v1559, 0
      %v1602 = vsel %vm380, %v1560, 0
      %v1605 = vsel %vm380, %v1561, 0
      %v1608 = vsel %vm380, %v1562, 0
      %v1611 = vsel %vm380, %v1563, 0
      %v1614 = vsel %vm380, %v1564, 0
      %v1617 = vsel %vm380, %v1565, 0
      %1619 = vmatpush.msra.mxu0 0.0
      %1620 = vmatpush.msra.mxu0 0.0
      %1621 = vmatpush.msra.mxu0 0.0
      %1622 = vmatpush.msra.mxu0 0.0
      %1623 = vmatpush.msra.mxu0 0.0
      %1624 = vmatpush.msra.mxu0 0.0
      %1625 = vmatpush.msra.mxu0 0.0
      %1626 = vmatpush.msra.mxu0 0.0
      %1627 = vmatpush.msra.mxu0 0.0
      %1628 = vmatpush.msra.mxu0 0.0
      %1629 = vmatpush.msra.mxu0 0.0
      %1630 = vmatpush.msra.mxu0 0.0
      %1631 = vmatpush.msra.mxu0 0.0
      %1632 = vmatpush.msra.mxu0 0.0
      %1633 = vmatpush.msra.mxu0 0.0
      %1634 = vmatpush.msra.mxu0 %v1567
      %1635 = vmatmul.f32.gmra.mxu0 %v1569
      %v1636 = vpop.f32.mrf.mxu0
      %v1637 = vadd.f32 0.0, %v1636
      %1638 = vmatmul.f32.gmra.mxu0 %v1572
      %v1639 = vpop.f32.mrf.mxu0
      %v1640 = vadd.f32 0.0, %v1639
      %1641 = vmatmul.f32.gmra.mxu0 %v1575
      %v1642 = vpop.f32.mrf.mxu0
      %v1643 = vadd.f32 0.0, %v1642
      %1644 = vmatmul.f32.gmra.mxu0 %v1578
      %v1645 = vpop.f32.mrf.mxu0
      %v1646 = vadd.f32 0.0, %v1645
      %1647 = vmatmul.f32.gmra.mxu0 %v1581
      %v1648 = vpop.f32.mrf.mxu0
      %v1649 = vadd.f32 0.0, %v1648
      %1650 = vmatmul.f32.gmra.mxu0 %v1584
      %v1651 = vpop.f32.mrf.mxu0
      %v1652 = vadd.f32 0.0, %v1651
      %1653 = vmatmul.f32.gmra.mxu0 %v1587
      %v1654 = vpop.f32.mrf.mxu0
      %v1655 = vadd.f32 0.0, %v1654
      %1656 = vmatmul.f32.gmra.mxu0 %v1590
      %v1657 = vpop.f32.mrf.mxu0
      %v1658 = vadd.f32 0.0, %v1657
      %1659 = vmatmul.f32.gmra.mxu0 %v1593
      %v1660 = vpop.f32.mrf.mxu0
      %v1661 = vadd.f32 0.0, %v1660
      %1662 = vmatmul.f32.gmra.mxu0 %v1596
      %v1663 = vpop.f32.mrf.mxu0
      %v1664 = vadd.f32 0.0, %v1663
      %1665 = vmatmul.f32.gmra.mxu0 %v1599
      %v1666 = vpop.f32.mrf.mxu0
      %v1667 = vadd.f32 0.0, %v1666
      %1668 = vmatmul.f32.gmra.mxu0 %v1602
      %v1669 = vpop.f32.mrf.mxu0
      %v1670 = vadd.f32 0.0, %v1669
      %1671 = vmatmul.f32.gmra.mxu0 %v1605
      %v1672 = vpop.f32.mrf.mxu0
      %v1673 = vadd.f32 0.0, %v1672
      %1674 = vmatmul.f32.gmra.mxu0 %v1608
      %v1675 = vpop.f32.mrf.mxu0
      %v1676 = vadd.f32 0.0, %v1675
      %1677 = vmatmul.f32.gmra.mxu0 %v1611
      %v1678 = vpop.f32.mrf.mxu0
      %v1679 = vadd.f32 0.0, %v1678
      %1680 = vmatmul.f32.gmra.mxu0 %v1614
      %v1681 = vpop.f32.mrf.mxu0
      %v1682 = vadd.f32 0.0, %v1681
      %1683 = vmatmul.f32.gmra.mxu0 %v1617
      %v1684 = vpop.f32.mrf.mxu0
      %v1685 = vadd.f32 0.0, %v1684
      %1686 = vdwg.mxu0
      %v1687 = vadd.f32 %v1532, %v1637
      %v1688 = vadd.f32 %v1533, %v1640
      %v1689 = vadd.f32 %v1534, %v1643
      %v1690 = vadd.f32 %v1535, %v1646
      %v1691 = vadd.f32 %v1536, %v1649
      %v1692 = vadd.f32 %v1537, %v1652
      %v1693 = vadd.f32 %v1538, %v1655
      %v1694 = vadd.f32 %v1539, %v1658
      %v1695 = vadd.f32 %v1540, %v1661
      %v1696 = vadd.f32 %v1541, %v1664
      %v1697 = vadd.f32 %v1542, %v1667
      %v1698 = vadd.f32 %v1543, %v1670
      %v1699 = vadd.f32 %v1544, %v1673
      %v1700 = vadd.f32 %v1545, %v1676
      %v1701 = vadd.f32 %v1546, %v1679
      %v1702 = vadd.f32 %v1547, %v1682
      %v1703 = vadd.f32 %v1548, %v1685
      %v1704 = vld [vmem:[%s287 + $0x24] sm:$0xff]
      %v1705 = vld [vmem:[%s287 + $0x2c] sm:$0xff]
      %v1706 = vld [vmem:[%s287 + $0x34] sm:$0xff]
      %v1707 = vld [vmem:[%s287 + $0x3c] sm:$0xff]
      %v1708 = vld [vmem:[%s287 + $0x44] sm:$0xff]
      %v1709 = vld [vmem:[%s287 + $0x4c] sm:$0xff]
      %v1710 = vld [vmem:[%s287 + $0x54] sm:$0xff]
      %v1711 = vld [vmem:[%s287 + $0x5c] sm:$0xff]
      %v1712 = vld [vmem:[%s287 + $0x64] sm:$0xff]
      %v1713 = vld [vmem:[%s287 + $0x6c] sm:$0xff]
      %v1714 = vld [vmem:[%s287 + $0x74] sm:$0xff]
      %v1715 = vld [vmem:[%s287 + $0x7c] sm:$0xff]
      %v1716 = vld [vmem:[%s287 + $0x84] sm:$0xff]
      %v1717 = vld [vmem:[%s287 + $0x8c] sm:$0xff]
      %v1718 = vld [vmem:[%s287 + $0x94] sm:$0xff]
      %v1719 = vld [vmem:[%s287 + $0x9c] sm:$0xff]
      %v1720 = vld [vmem:[%s287 + $0xa4] sm:$0x3]
      %s1721 = scalar_lea.vmem %s2, 72
      %v1722 = vld [vmem:[%s1721] sm:$0xff]
      %v1724 = vsel %vm380, %v1704, 0
      %v1727 = vsel %vm380, %v1705, 0
      %v1730 = vsel %vm380, %v1706, 0
      %v1733 = vsel %vm380, %v1707, 0
      %v1736 = vsel %vm380, %v1708, 0
      %v1739 = vsel %vm380, %v1709, 0
      %v1742 = vsel %vm380, %v1710, 0
      %v1745 = vsel %vm380, %v1711, 0
      %v1748 = vsel %vm380, %v1712, 0
      %v1751 = vsel %vm380, %v1713, 0
      %v1754 = vsel %vm380, %v1714, 0
      %v1757 = vsel %vm380, %v1715, 0
      %v1760 = vsel %vm380, %v1716, 0
      %v1763 = vsel %vm380, %v1717, 0
      %v1766 = vsel %vm380, %v1718, 0
      %v1769 = vsel %vm380, %v1719, 0
      %v1772 = vsel %vm380, %v1720, 0
      %1774 = vmatpush.msra.mxu0 0.0
      %1775 = vmatpush.msra.mxu0 0.0
      %1776 = vmatpush.msra.mxu0 0.0
      %1777 = vmatpush.msra.mxu0 0.0
      %1778 = vmatpush.msra.mxu0 0.0
      %1779 = vmatpush.msra.mxu0 0.0
      %1780 = vmatpush.msra.mxu0 0.0
      %1781 = vmatpush.msra.mxu0 0.0
      %1782 = vmatpush.msra.mxu0 0.0
      %1783 = vmatpush.msra.mxu0 0.0
      %1784 = vmatpush.msra.mxu0 0.0
      %1785 = vmatpush.msra.mxu0 0.0
      %1786 = vmatpush.msra.mxu0 0.0
      %1787 = vmatpush.msra.mxu0 0.0
      %1788 = vmatpush.msra.mxu0 0.0
      %1789 = vmatpush.msra.mxu0 %v1722
      %1790 = vmatmul.f32.gmra.mxu0 %v1724
      %v1791 = vpop.f32.mrf.mxu0
      %v1792 = vadd.f32 0.0, %v1791
      %1793 = vmatmul.f32.gmra.mxu0 %v1727
      %v1794 = vpop.f32.mrf.mxu0
      %v1795 = vadd.f32 0.0, %v1794
      %1796 = vmatmul.f32.gmra.mxu0 %v1730
      %v1797 = vpop.f32.mrf.mxu0
      %v1798 = vadd.f32 0.0, %v1797
      %1799 = vmatmul.f32.gmra.mxu0 %v1733
      %v1800 = vpop.f32.mrf.mxu0
      %v1801 = vadd.f32 0.0, %v1800
      %1802 = vmatmul.f32.gmra.mxu0 %v1736
      %v1803 = vpop.f32.mrf.mxu0
      %v1804 = vadd.f32 0.0, %v1803
      %1805 = vmatmul.f32.gmra.mxu0 %v1739
      %v1806 = vpop.f32.mrf.mxu0
      %v1807 = vadd.f32 0.0, %v1806
      %1808 = vmatmul.f32.gmra.mxu0 %v1742
      %v1809 = vpop.f32.mrf.mxu0
      %v1810 = vadd.f32 0.0, %v1809
      %1811 = vmatmul.f32.gmra.mxu0 %v1745
      %v1812 = vpop.f32.mrf.mxu0
      %v1813 = vadd.f32 0.0, %v1812
      %1814 = vmatmul.f32.gmra.mxu0 %v1748
      %v1815 = vpop.f32.mrf.mxu0
      %v1816 = vadd.f32 0.0, %v1815
      %1817 = vmatmul.f32.gmra.mxu0 %v1751
      %v1818 = vpop.f32.mrf.mxu0
      %v1819 = vadd.f32 0.0, %v1818
      %1820 = vmatmul.f32.gmra.mxu0 %v1754
      %v1821 = vpop.f32.mrf.mxu0
      %v1822 = vadd.f32 0.0, %v1821
      %1823 = vmatmul.f32.gmra.mxu0 %v1757
      %v1824 = vpop.f32.mrf.mxu0
      %v1825 = vadd.f32 0.0, %v1824
      %1826 = vmatmul.f32.gmra.mxu0 %v1760
      %v1827 = vpop.f32.mrf.mxu0
      %v1828 = vadd.f32 0.0, %v1827
      %1829 = vmatmul.f32.gmra.mxu0 %v1763
      %v1830 = vpop.f32.mrf.mxu0
      %v1831 = vadd.f32 0.0, %v1830
      %1832 = vmatmul.f32.gmra.mxu0 %v1766
      %v1833 = vpop.f32.mrf.mxu0
      %v1834 = vadd.f32 0.0, %v1833
      %1835 = vmatmul.f32.gmra.mxu0 %v1769
      %v1836 = vpop.f32.mrf.mxu0
      %v1837 = vadd.f32 0.0, %v1836
      %1838 = vmatmul.f32.gmra.mxu0 %v1772
      %v1839 = vpop.f32.mrf.mxu0
      %v1840 = vadd.f32 0.0, %v1839
      %1841 = vdwg.mxu0
      %v1842 = vadd.f32 %v1687, %v1792
      %v1843 = vadd.f32 %v1688, %v1795
      %v1844 = vadd.f32 %v1689, %v1798
      %v1845 = vadd.f32 %v1690, %v1801
      %v1846 = vadd.f32 %v1691, %v1804
      %v1847 = vadd.f32 %v1692, %v1807
      %v1848 = vadd.f32 %v1693, %v1810
      %v1849 = vadd.f32 %v1694, %v1813
      %v1850 = vadd.f32 %v1695, %v1816
      %v1851 = vadd.f32 %v1696, %v1819
      %v1852 = vadd.f32 %v1697, %v1822
      %v1853 = vadd.f32 %v1698, %v1825
      %v1854 = vadd.f32 %v1699, %v1828
      %v1855 = vadd.f32 %v1700, %v1831
      %v1856 = vadd.f32 %v1701, %v1834
      %v1857 = vadd.f32 %v1702, %v1837
      %v1858 = vadd.f32 %v1703, %v1840
      %v1859 = vld [vmem:[%s287 + $0x25] sm:$0xff]
      %v1860 = vld [vmem:[%s287 + $0x2d] sm:$0xff]
      %v1861 = vld [vmem:[%s287 + $0x35] sm:$0xff]
      %v1862 = vld [vmem:[%s287 + $0x3d] sm:$0xff]
      %v1863 = vld [vmem:[%s287 + $0x45] sm:$0xff]
      %v1864 = vld [vmem:[%s287 + $0x4d] sm:$0xff]
      %v1865 = vld [vmem:[%s287 + $0x55] sm:$0xff]
      %v1866 = vld [vmem:[%s287 + $0x5d] sm:$0xff]
      %v1867 = vld [vmem:[%s287 + $0x65] sm:$0xff]
      %v1868 = vld [vmem:[%s287 + $0x6d] sm:$0xff]
      %v1869 = vld [vmem:[%s287 + $0x75] sm:$0xff]
      %v1870 = vld [vmem:[%s287 + $0x7d] sm:$0xff]
      %v1871 = vld [vmem:[%s287 + $0x85] sm:$0xff]
      %v1872 = vld [vmem:[%s287 + $0x8d] sm:$0xff]
      %v1873 = vld [vmem:[%s287 + $0x95] sm:$0xff]
      %v1874 = vld [vmem:[%s287 + $0x9d] sm:$0xff]
      %v1875 = vld [vmem:[%s287 + $0xa5] sm:$0x3]
      %s1876 = scalar_lea.vmem %s2, 80
      %v1877 = vld [vmem:[%s1876] sm:$0xff]
      %v1879 = vsel %vm380, %v1859, 0
      %v1882 = vsel %vm380, %v1860, 0
      %v1885 = vsel %vm380, %v1861, 0
      %v1888 = vsel %vm380, %v1862, 0
      %v1891 = vsel %vm380, %v1863, 0
      %v1894 = vsel %vm380, %v1864, 0
      %v1897 = vsel %vm380, %v1865, 0
      %v1900 = vsel %vm380, %v1866, 0
      %v1903 = vsel %vm380, %v1867, 0
      %v1906 = vsel %vm380, %v1868, 0
      %v1909 = vsel %vm380, %v1869, 0
      %v1912 = vsel %vm380, %v1870, 0
      %v1915 = vsel %vm380, %v1871, 0
      %v1918 = vsel %vm380, %v1872, 0
      %v1921 = vsel %vm380, %v1873, 0
      %v1924 = vsel %vm380, %v1874, 0
      %v1927 = vsel %vm380, %v1875, 0
      %1929 = vmatpush.msra.mxu0 0.0
      %1930 = vmatpush.msra.mxu0 0.0
      %1931 = vmatpush.msra.mxu0 0.0
      %1932 = vmatpush.msra.mxu0 0.0
      %1933 = vmatpush.msra.mxu0 0.0
      %1934 = vmatpush.msra.mxu0 0.0
      %1935 = vmatpush.msra.mxu0 0.0
      %1936 = vmatpush.msra.mxu0 0.0
      %1937 = vmatpush.msra.mxu0 0.0
      %1938 = vmatpush.msra.mxu0 0.0
      %1939 = vmatpush.msra.mxu0 0.0
      %1940 = vmatpush.msra.mxu0 0.0
      %1941 = vmatpush.msra.mxu0 0.0
      %1942 = vmatpush.msra.mxu0 0.0
      %1943 = vmatpush.msra.mxu0 0.0
      %1944 = vmatpush.msra.mxu0 %v1877
      %1945 = vmatmul.f32.gmra.mxu0 %v1879
      %v1946 = vpop.f32.mrf.mxu0
      %v1947 = vadd.f32 0.0, %v1946
      %1948 = vmatmul.f32.gmra.mxu0 %v1882
      %v1949 = vpop.f32.mrf.mxu0
      %v1950 = vadd.f32 0.0, %v1949
      %1951 = vmatmul.f32.gmra.mxu0 %v1885
      %v1952 = vpop.f32.mrf.mxu0
      %v1953 = vadd.f32 0.0, %v1952
      %1954 = vmatmul.f32.gmra.mxu0 %v1888
      %v1955 = vpop.f32.mrf.mxu0
      %v1956 = vadd.f32 0.0, %v1955
      %1957 = vmatmul.f32.gmra.mxu0 %v1891
      %v1958 = vpop.f32.mrf.mxu0
      %v1959 = vadd.f32 0.0, %v1958
      %1960 = vmatmul.f32.gmra.mxu0 %v1894
      %v1961 = vpop.f32.mrf.mxu0
      %v1962 = vadd.f32 0.0, %v1961
      %1963 = vmatmul.f32.gmra.mxu0 %v1897
      %v1964 = vpop.f32.mrf.mxu0
      %v1965 = vadd.f32 0.0, %v1964
      %1966 = vmatmul.f32.gmra.mxu0 %v1900
      %v1967 = vpop.f32.mrf.mxu0
      %v1968 = vadd.f32 0.0, %v1967
      %1969 = vmatmul.f32.gmra.mxu0 %v1903
      %v1970 = vpop.f32.mrf.mxu0
      %v1971 = vadd.f32 0.0, %v1970
      %1972 = vmatmul.f32.gmra.mxu0 %v1906
      %v1973 = vpop.f32.mrf.mxu0
      %v1974 = vadd.f32 0.0, %v1973
      %1975 = vmatmul.f32.gmra.mxu0 %v1909
      %v1976 = vpop.f32.mrf.mxu0
      %v1977 = vadd.f32 0.0, %v1976
      %1978 = vmatmul.f32.gmra.mxu0 %v1912
      %v1979 = vpop.f32.mrf.mxu0
      %v1980 = vadd.f32 0.0, %v1979
      %1981 = vmatmul.f32.gmra.mxu0 %v1915
      %v1982 = vpop.f32.mrf.mxu0
      %v1983 = vadd.f32 0.0, %v1982
      %1984 = vmatmul.f32.gmra.mxu0 %v1918
      %v1985 = vpop.f32.mrf.mxu0
      %v1986 = vadd.f32 0.0, %v1985
      %1987 = vmatmul.f32.gmra.mxu0 %v1921
      %v1988 = vpop.f32.mrf.mxu0
      %v1989 = vadd.f32 0.0, %v1988
      %1990 = vmatmul.f32.gmra.mxu0 %v1924
      %v1991 = vpop.f32.mrf.mxu0
      %v1992 = vadd.f32 0.0, %v1991
      %1993 = vmatmul.f32.gmra.mxu0 %v1927
      %v1994 = vpop.f32.mrf.mxu0
      %v1995 = vadd.f32 0.0, %v1994
      %1996 = vdwg.mxu0
      %v1997 = vadd.f32 %v1842, %v1947
      %v1998 = vadd.f32 %v1843, %v1950
      %v1999 = vadd.f32 %v1844, %v1953
      %v2000 = vadd.f32 %v1845, %v1956
      %v2001 = vadd.f32 %v1846, %v1959
      %v2002 = vadd.f32 %v1847, %v1962
      %v2003 = vadd.f32 %v1848, %v1965
      %v2004 = vadd.f32 %v1849, %v1968
      %v2005 = vadd.f32 %v1850, %v1971
      %v2006 = vadd.f32 %v1851, %v1974
      %v2007 = vadd.f32 %v1852, %v1977
      %v2008 = vadd.f32 %v1853, %v1980
      %v2009 = vadd.f32 %v1854, %v1983
      %v2010 = vadd.f32 %v1855, %v1986
      %v2011 = vadd.f32 %v1856, %v1989
      %v2012 = vadd.f32 %v1857, %v1992
      %v2013 = vadd.f32 %v1858, %v1995
      %v2014 = vld [vmem:[%s287 + $0x26] sm:$0xff]
      %v2015 = vld [vmem:[%s287 + $0x2e] sm:$0xff]
      %v2016 = vld [vmem:[%s287 + $0x36] sm:$0xff]
      %v2017 = vld [vmem:[%s287 + $0x3e] sm:$0xff]
      %v2018 = vld [vmem:[%s287 + $0x46] sm:$0xff]
      %v2019 = vld [vmem:[%s287 + $0x4e] sm:$0xff]
      %v2020 = vld [vmem:[%s287 + $0x56] sm:$0xff]
      %v2021 = vld [vmem:[%s287 + $0x5e] sm:$0xff]
      %v2022 = vld [vmem:[%s287 + $0x66] sm:$0xff]
      %v2023 = vld [vmem:[%s287 + $0x6e] sm:$0xff]
      %v2024 = vld [vmem:[%s287 + $0x76] sm:$0xff]
      %v2025 = vld [vmem:[%s287 + $0x7e] sm:$0xff]
      %v2026 = vld [vmem:[%s287 + $0x86] sm:$0xff]
      %v2027 = vld [vmem:[%s287 + $0x8e] sm:$0xff]
      %v2028 = vld [vmem:[%s287 + $0x96] sm:$0xff]
      %v2029 = vld [vmem:[%s287 + $0x9e] sm:$0xff]
      %v2030 = vld [vmem:[%s287 + $0xa6] sm:$0x3]
      %s2031 = scalar_lea.vmem %s2, 88
      %v2032 = vld [vmem:[%s2031] sm:$0xff]
      %v2034 = vsel %vm380, %v2014, 0
      %v2037 = vsel %vm380, %v2015, 0
      %v2040 = vsel %vm380, %v2016, 0
      %v2043 = vsel %vm380, %v2017, 0
      %v2046 = vsel %vm380, %v2018, 0
      %v2049 = vsel %vm380, %v2019, 0
      %v2052 = vsel %vm380, %v2020, 0
      %v2055 = vsel %vm380, %v2021, 0
      %v2058 = vsel %vm380, %v2022, 0
      %v2061 = vsel %vm380, %v2023, 0
      %v2064 = vsel %vm380, %v2024, 0
      %v2067 = vsel %vm380, %v2025, 0
      %v2070 = vsel %vm380, %v2026, 0
      %v2073 = vsel %vm380, %v2027, 0
      %v2076 = vsel %vm380, %v2028, 0
      %v2079 = vsel %vm380, %v2029, 0
      %v2082 = vsel %vm380, %v2030, 0
      %2084 = vmatpush.msra.mxu0 0.0
      %2085 = vmatpush.msra.mxu0 0.0
      %2086 = vmatpush.msra.mxu0 0.0
      %2087 = vmatpush.msra.mxu0 0.0
      %2088 = vmatpush.msra.mxu0 0.0
      %2089 = vmatpush.msra.mxu0 0.0
      %2090 = vmatpush.msra.mxu0 0.0
      %2091 = vmatpush.msra.mxu0 0.0
      %2092 = vmatpush.msra.mxu0 0.0
      %2093 = vmatpush.msra.mxu0 0.0
      %2094 = vmatpush.msra.mxu0 0.0
      %2095 = vmatpush.msra.mxu0 0.0
      %2096 = vmatpush.msra.mxu0 0.0
      %2097 = vmatpush.msra.mxu0 0.0
      %2098 = vmatpush.msra.mxu0 0.0
      %2099 = vmatpush.msra.mxu0 %v2032
      %2100 = vmatmul.f32.gmra.mxu0 %v2034
      %v2101 = vpop.f32.mrf.mxu0
      %v2102 = vadd.f32 0.0, %v2101
      %2103 = vmatmul.f32.gmra.mxu0 %v2037
      %v2104 = vpop.f32.mrf.mxu0
      %v2105 = vadd.f32 0.0, %v2104
      %2106 = vmatmul.f32.gmra.mxu0 %v2040
      %v2107 = vpop.f32.mrf.mxu0
      %v2108 = vadd.f32 0.0, %v2107
      %2109 = vmatmul.f32.gmra.mxu0 %v2043
      %v2110 = vpop.f32.mrf.mxu0
      %v2111 = vadd.f32 0.0, %v2110
      %2112 = vmatmul.f32.gmra.mxu0 %v2046
      %v2113 = vpop.f32.mrf.mxu0
      %v2114 = vadd.f32 0.0, %v2113
      %2115 = vmatmul.f32.gmra.mxu0 %v2049
      %v2116 = vpop.f32.mrf.mxu0
      %v2117 = vadd.f32 0.0, %v2116
      %2118 = vmatmul.f32.gmra.mxu0 %v2052
      %v2119 = vpop.f32.mrf.mxu0
      %v2120 = vadd.f32 0.0, %v2119
      %2121 = vmatmul.f32.gmra.mxu0 %v2055
      %v2122 = vpop.f32.mrf.mxu0
      %v2123 = vadd.f32 0.0, %v2122
      %2124 = vmatmul.f32.gmra.mxu0 %v2058
      %v2125 = vpop.f32.mrf.mxu0
      %v2126 = vadd.f32 0.0, %v2125
      %2127 = vmatmul.f32.gmra.mxu0 %v2061
      %v2128 = vpop.f32.mrf.mxu0
      %v2129 = vadd.f32 0.0, %v2128
      %2130 = vmatmul.f32.gmra.mxu0 %v2064
      %v2131 = vpop.f32.mrf.mxu0
      %v2132 = vadd.f32 0.0, %v2131
      %2133 = vmatmul.f32.gmra.mxu0 %v2067
      %v2134 = vpop.f32.mrf.mxu0
      %v2135 = vadd.f32 0.0, %v2134
      %2136 = vmatmul.f32.gmra.mxu0 %v2070
      %v2137 = vpop.f32.mrf.mxu0
      %v2138 = vadd.f32 0.0, %v2137
      %2139 = vmatmul.f32.gmra.mxu0 %v2073
      %v2140 = vpop.f32.mrf.mxu0
      %v2141 = vadd.f32 0.0, %v2140
      %2142 = vmatmul.f32.gmra.mxu0 %v2076
      %v2143 = vpop.f32.mrf.mxu0
      %v2144 = vadd.f32 0.0, %v2143
      %2145 = vmatmul.f32.gmra.mxu0 %v2079
      %v2146 = vpop.f32.mrf.mxu0
      %v2147 = vadd.f32 0.0, %v2146
      %2148 = vmatmul.f32.gmra.mxu0 %v2082
      %v2149 = vpop.f32.mrf.mxu0
      %v2150 = vadd.f32 0.0, %v2149
      %2151 = vdwg.mxu0
      %v2152 = vadd.f32 %v1997, %v2102
      %v2153 = vadd.f32 %v1998, %v2105
      %v2154 = vadd.f32 %v1999, %v2108
      %v2155 = vadd.f32 %v2000, %v2111
      %v2156 = vadd.f32 %v2001, %v2114
      %v2157 = vadd.f32 %v2002, %v2117
      %v2158 = vadd.f32 %v2003, %v2120
      %v2159 = vadd.f32 %v2004, %v2123
      %v2160 = vadd.f32 %v2005, %v2126
      %v2161 = vadd.f32 %v2006, %v2129
      %v2162 = vadd.f32 %v2007, %v2132
      %v2163 = vadd.f32 %v2008, %v2135
      %v2164 = vadd.f32 %v2009, %v2138
      %v2165 = vadd.f32 %v2010, %v2141
      %v2166 = vadd.f32 %v2011, %v2144
      %v2167 = vadd.f32 %v2012, %v2147
      %v2168 = vadd.f32 %v2013, %v2150
      %v2169 = vld [vmem:[%s287 + $0x2a] sm:$0xff]
      %v2170 = vld [vmem:[%s287 + $0x32] sm:$0xff]
      %v2171 = vld [vmem:[%s287 + $0x3a] sm:$0xff]
      %v2172 = vld [vmem:[%s287 + $0x42] sm:$0xff]
      %v2173 = vld [vmem:[%s287 + $0x4a] sm:$0xff]
      %v2174 = vld [vmem:[%s287 + $0x52] sm:$0xff]
      %v2175 = vld [vmem:[%s287 + $0x5a] sm:$0xff]
      %v2176 = vld [vmem:[%s287 + $0x62] sm:$0xff]
      %v2177 = vld [vmem:[%s287 + $0x6a] sm:$0xff]
      %v2178 = vld [vmem:[%s287 + $0x72] sm:$0xff]
      %v2179 = vld [vmem:[%s287 + $0x7a] sm:$0xff]
      %v2180 = vld [vmem:[%s287 + $0x82] sm:$0xff]
      %v2181 = vld [vmem:[%s287 + $0x8a] sm:$0xff]
      %v2182 = vld [vmem:[%s287 + $0x92] sm:$0xff]
      %v2183 = vld [vmem:[%s287 + $0x9a] sm:$0xff]
      %v2184 = vld [vmem:[%s287 + $0xa2] sm:$0xff]
      %v2185 = vld [vmem:[%s287 + $0xaa] sm:$0x3]
      %s2186 = scalar_lea.vmem %s2, 96
      %v2187 = vld [vmem:[%s2186] sm:$0xff]
      %v2189 = vsel %vm380, %v2169, 0
      %v2192 = vsel %vm380, %v2170, 0
      %v2195 = vsel %vm380, %v2171, 0
      %v2198 = vsel %vm380, %v2172, 0
      %v2201 = vsel %vm380, %v2173, 0
      %v2204 = vsel %vm380, %v2174, 0
      %v2207 = vsel %vm380, %v2175, 0
      %v2210 = vsel %vm380, %v2176, 0
      %v2213 = vsel %vm380, %v2177, 0
      %v2216 = vsel %vm380, %v2178, 0
      %v2219 = vsel %vm380, %v2179, 0
      %v2222 = vsel %vm380, %v2180, 0
      %v2225 = vsel %vm380, %v2181, 0
      %v2228 = vsel %vm380, %v2182, 0
      %v2231 = vsel %vm380, %v2183, 0
      %v2234 = vsel %vm380, %v2184, 0
      %v2237 = vsel %vm380, %v2185, 0
      %2239 = vmatpush.msra.mxu0 0.0
      %2240 = vmatpush.msra.mxu0 0.0
      %2241 = vmatpush.msra.mxu0 0.0
      %2242 = vmatpush.msra.mxu0 0.0
      %2243 = vmatpush.msra.mxu0 0.0
      %2244 = vmatpush.msra.mxu0 0.0
      %2245 = vmatpush.msra.mxu0 0.0
      %2246 = vmatpush.msra.mxu0 0.0
      %2247 = vmatpush.msra.mxu0 0.0
      %2248 = vmatpush.msra.mxu0 0.0
      %2249 = vmatpush.msra.mxu0 0.0
      %2250 = vmatpush.msra.mxu0 0.0
      %2251 = vmatpush.msra.mxu0 0.0
      %2252 = vmatpush.msra.mxu0 0.0
      %2253 = vmatpush.msra.mxu0 0.0
      %2254 = vmatpush.msra.mxu0 %v2187
      %2255 = vmatmul.f32.gmra.mxu0 %v2189
      %v2256 = vpop.f32.mrf.mxu0
      %v2257 = vadd.f32 0.0, %v2256
      %2258 = vmatmul.f32.gmra.mxu0 %v2192
      %v2259 = vpop.f32.mrf.mxu0
      %v2260 = vadd.f32 0.0, %v2259
      %2261 = vmatmul.f32.gmra.mxu0 %v2195
      %v2262 = vpop.f32.mrf.mxu0
      %v2263 = vadd.f32 0.0, %v2262
      %2264 = vmatmul.f32.gmra.mxu0 %v2198
      %v2265 = vpop.f32.mrf.mxu0
      %v2266 = vadd.f32 0.0, %v2265
      %2267 = vmatmul.f32.gmra.mxu0 %v2201
      %v2268 = vpop.f32.mrf.mxu0
      %v2269 = vadd.f32 0.0, %v2268
      %2270 = vmatmul.f32.gmra.mxu0 %v2204
      %v2271 = vpop.f32.mrf.mxu0
      %v2272 = vadd.f32 0.0, %v2271
      %2273 = vmatmul.f32.gmra.mxu0 %v2207
      %v2274 = vpop.f32.mrf.mxu0
      %v2275 = vadd.f32 0.0, %v2274
      %2276 = vmatmul.f32.gmra.mxu0 %v2210
      %v2277 = vpop.f32.mrf.mxu0
      %v2278 = vadd.f32 0.0, %v2277
      %2279 = vmatmul.f32.gmra.mxu0 %v2213
      %v2280 = vpop.f32.mrf.mxu0
      %v2281 = vadd.f32 0.0, %v2280
      %2282 = vmatmul.f32.gmra.mxu0 %v2216
      %v2283 = vpop.f32.mrf.mxu0
      %v2284 = vadd.f32 0.0, %v2283
      %2285 = vmatmul.f32.gmra.mxu0 %v2219
      %v2286 = vpop.f32.mrf.mxu0
      %v2287 = vadd.f32 0.0, %v2286
      %2288 = vmatmul.f32.gmra.mxu0 %v2222
      %v2289 = vpop.f32.mrf.mxu0
      %v2290 = vadd.f32 0.0, %v2289
      %2291 = vmatmul.f32.gmra.mxu0 %v2225
      %v2292 = vpop.f32.mrf.mxu0
      %v2293 = vadd.f32 0.0, %v2292
      %2294 = vmatmul.f32.gmra.mxu0 %v2228
      %v2295 = vpop.f32.mrf.mxu0
      %v2296 = vadd.f32 0.0, %v2295
      %2297 = vmatmul.f32.gmra.mxu0 %v2231
      %v2298 = vpop.f32.mrf.mxu0
      %v2299 = vadd.f32 0.0, %v2298
      %2300 = vmatmul.f32.gmra.mxu0 %v2234
      %v2301 = vpop.f32.mrf.mxu0
      %v2302 = vadd.f32 0.0, %v2301
      %2303 = vmatmul.f32.gmra.mxu0 %v2237
      %v2304 = vpop.f32.mrf.mxu0
      %v2305 = vadd.f32 0.0, %v2304
      %2306 = vdwg.mxu0
      %v2307 = vadd.f32 %v2152, %v2257
      %v2308 = vadd.f32 %v2153, %v2260
      %v2309 = vadd.f32 %v2154, %v2263
      %v2310 = vadd.f32 %v2155, %v2266
      %v2311 = vadd.f32 %v2156, %v2269
      %v2312 = vadd.f32 %v2157, %v2272
      %v2313 = vadd.f32 %v2158, %v2275
      %v2314 = vadd.f32 %v2159, %v2278
      %v2315 = vadd.f32 %v2160, %v2281
      %v2316 = vadd.f32 %v2161, %v2284
      %v2317 = vadd.f32 %v2162, %v2287
      %v2318 = vadd.f32 %v2163, %v2290
      %v2319 = vadd.f32 %v2164, %v2293
      %v2320 = vadd.f32 %v2165, %v2296
      %v2321 = vadd.f32 %v2166, %v2299
      %v2322 = vadd.f32 %v2167, %v2302
      %v2323 = vadd.f32 %v2168, %v2305
      %v2324 = vld [vmem:[%s287 + $0x2b] sm:$0xff]
      %v2325 = vld [vmem:[%s287 + $0x33] sm:$0xff]
      %v2326 = vld [vmem:[%s287 + $0x3b] sm:$0xff]
      %v2327 = vld [vmem:[%s287 + $0x43] sm:$0xff]
      %v2328 = vld [vmem:[%s287 + $0x4b] sm:$0xff]
      %v2329 = vld [vmem:[%s287 + $0x53] sm:$0xff]
      %v2330 = vld [vmem:[%s287 + $0x5b] sm:$0xff]
      %v2331 = vld [vmem:[%s287 + $0x63] sm:$0xff]
      %v2332 = vld [vmem:[%s287 + $0x6b] sm:$0xff]
      %v2333 = vld [vmem:[%s287 + $0x73] sm:$0xff]
      %v2334 = vld [vmem:[%s287 + $0x7b] sm:$0xff]
      %v2335 = vld [vmem:[%s287 + $0x83] sm:$0xff]
      %v2336 = vld [vmem:[%s287 + $0x8b] sm:$0xff]
      %v2337 = vld [vmem:[%s287 + $0x93] sm:$0xff]
      %v2338 = vld [vmem:[%s287 + $0x9b] sm:$0xff]
      %v2339 = vld [vmem:[%s287 + $0xa3] sm:$0xff]
      %v2340 = vld [vmem:[%s287 + $0xab] sm:$0x3]
      %s2341 = scalar_lea.vmem %s2, 104
      %v2342 = vld [vmem:[%s2341] sm:$0xff]
      %v2344 = vsel %vm380, %v2324, 0
      %v2347 = vsel %vm380, %v2325, 0
      %v2350 = vsel %vm380, %v2326, 0
      %v2353 = vsel %vm380, %v2327, 0
      %v2356 = vsel %vm380, %v2328, 0
      %v2359 = vsel %vm380, %v2329, 0
      %v2362 = vsel %vm380, %v2330, 0
      %v2365 = vsel %vm380, %v2331, 0
      %v2368 = vsel %vm380, %v2332, 0
      %v2371 = vsel %vm380, %v2333, 0
      %v2374 = vsel %vm380, %v2334, 0
      %v2377 = vsel %vm380, %v2335, 0
      %v2380 = vsel %vm380, %v2336, 0
      %v2383 = vsel %vm380, %v2337, 0
      %v2386 = vsel %vm380, %v2338, 0
      %v2389 = vsel %vm380, %v2339, 0
      %v2392 = vsel %vm380, %v2340, 0
      %2394 = vmatpush.msra.mxu0 0.0
      %2395 = vmatpush.msra.mxu0 0.0
      %2396 = vmatpush.msra.mxu0 0.0
      %2397 = vmatpush.msra.mxu0 0.0
      %2398 = vmatpush.msra.mxu0 0.0
      %2399 = vmatpush.msra.mxu0 0.0
      %2400 = vmatpush.msra.mxu0 0.0
      %2401 = vmatpush.msra.mxu0 0.0
      %2402 = vmatpush.msra.mxu0 0.0
      %2403 = vmatpush.msra.mxu0 0.0
      %2404 = vmatpush.msra.mxu0 0.0
      %2405 = vmatpush.msra.mxu0 0.0
      %2406 = vmatpush.msra.mxu0 0.0
      %2407 = vmatpush.msra.mxu0 0.0
      %2408 = vmatpush.msra.mxu0 0.0
      %2409 = vmatpush.msra.mxu0 %v2342
      %2410 = vmatmul.f32.gmra.mxu0 %v2344
      %v2411 = vpop.f32.mrf.mxu0
      %v2412 = vadd.f32 0.0, %v2411
      %2413 = vmatmul.f32.gmra.mxu0 %v2347
      %v2414 = vpop.f32.mrf.mxu0
      %v2415 = vadd.f32 0.0, %v2414
      %2416 = vmatmul.f32.gmra.mxu0 %v2350
      %v2417 = vpop.f32.mrf.mxu0
      %v2418 = vadd.f32 0.0, %v2417
      %2419 = vmatmul.f32.gmra.mxu0 %v2353
      %v2420 = vpop.f32.mrf.mxu0
      %v2421 = vadd.f32 0.0, %v2420
      %2422 = vmatmul.f32.gmra.mxu0 %v2356
      %v2423 = vpop.f32.mrf.mxu0
      %v2424 = vadd.f32 0.0, %v2423
      %2425 = vmatmul.f32.gmra.mxu0 %v2359
      %v2426 = vpop.f32.mrf.mxu0
      %v2427 = vadd.f32 0.0, %v2426
      %2428 = vmatmul.f32.gmra.mxu0 %v2362
      %v2429 = vpop.f32.mrf.mxu0
      %v2430 = vadd.f32 0.0, %v2429
      %2431 = vmatmul.f32.gmra.mxu0 %v2365
      %v2432 = vpop.f32.mrf.mxu0
      %v2433 = vadd.f32 0.0, %v2432
      %2434 = vmatmul.f32.gmra.mxu0 %v2368
      %v2435 = vpop.f32.mrf.mxu0
      %v2436 = vadd.f32 0.0, %v2435
      %2437 = vmatmul.f32.gmra.mxu0 %v2371
      %v2438 = vpop.f32.mrf.mxu0
      %v2439 = vadd.f32 0.0, %v2438
      %2440 = vmatmul.f32.gmra.mxu0 %v2374
      %v2441 = vpop.f32.mrf.mxu0
      %v2442 = vadd.f32 0.0, %v2441
      %2443 = vmatmul.f32.gmra.mxu0 %v2377
      %v2444 = vpop.f32.mrf.mxu0
      %v2445 = vadd.f32 0.0, %v2444
      %2446 = vmatmul.f32.gmra.mxu0 %v2380
      %v2447 = vpop.f32.mrf.mxu0
      %v2448 = vadd.f32 0.0, %v2447
      %2449 = vmatmul.f32.gmra.mxu0 %v2383
      %v2450 = vpop.f32.mrf.mxu0
      %v2451 = vadd.f32 0.0, %v2450
      %2452 = vmatmul.f32.gmra.mxu0 %v2386
      %v2453 = vpop.f32.mrf.mxu0
      %v2454 = vadd.f32 0.0, %v2453
      %2455 = vmatmul.f32.gmra.mxu0 %v2389
      %v2456 = vpop.f32.mrf.mxu0
      %v2457 = vadd.f32 0.0, %v2456
      %2458 = vmatmul.f32.gmra.mxu0 %v2392
      %v2459 = vpop.f32.mrf.mxu0
      %v2460 = vadd.f32 0.0, %v2459
      %2461 = vdwg.mxu0
      %v2462 = vadd.f32 %v2307, %v2412
      %v2463 = vadd.f32 %v2308, %v2415
      %v2464 = vadd.f32 %v2309, %v2418
      %v2465 = vadd.f32 %v2310, %v2421
      %v2466 = vadd.f32 %v2311, %v2424
      %v2467 = vadd.f32 %v2312, %v2427
      %v2468 = vadd.f32 %v2313, %v2430
      %v2469 = vadd.f32 %v2314, %v2433
      %v2470 = vadd.f32 %v2315, %v2436
      %v2471 = vadd.f32 %v2316, %v2439
      %v2472 = vadd.f32 %v2317, %v2442
      %v2473 = vadd.f32 %v2318, %v2445
      %v2474 = vadd.f32 %v2319, %v2448
      %v2475 = vadd.f32 %v2320, %v2451
      %v2476 = vadd.f32 %v2321, %v2454
      %v2477 = vadd.f32 %v2322, %v2457
      %v2478 = vadd.f32 %v2323, %v2460
      %v2479 = vld [vmem:[%s287 + $0x2c] sm:$0xff]
      %v2480 = vld [vmem:[%s287 + $0x34] sm:$0xff]
      %v2481 = vld [vmem:[%s287 + $0x3c] sm:$0xff]
      %v2482 = vld [vmem:[%s287 + $0x44] sm:$0xff]
      %v2483 = vld [vmem:[%s287 + $0x4c] sm:$0xff]
      %v2484 = vld [vmem:[%s287 + $0x54] sm:$0xff]
      %v2485 = vld [vmem:[%s287 + $0x5c] sm:$0xff]
      %v2486 = vld [vmem:[%s287 + $0x64] sm:$0xff]
      %v2487 = vld [vmem:[%s287 + $0x6c] sm:$0xff]
      %v2488 = vld [vmem:[%s287 + $0x74] sm:$0xff]
      %v2489 = vld [vmem:[%s287 + $0x7c] sm:$0xff]
      %v2490 = vld [vmem:[%s287 + $0x84] sm:$0xff]
      %v2491 = vld [vmem:[%s287 + $0x8c] sm:$0xff]
      %v2492 = vld [vmem:[%s287 + $0x94] sm:$0xff]
      %v2493 = vld [vmem:[%s287 + $0x9c] sm:$0xff]
      %v2494 = vld [vmem:[%s287 + $0xa4] sm:$0xff]
      %v2495 = vld [vmem:[%s287 + $0xac] sm:$0x3]
      %s2496 = scalar_lea.vmem %s2, 112
      %v2497 = vld [vmem:[%s2496] sm:$0xff]
      %v2499 = vsel %vm380, %v2479, 0
      %v2502 = vsel %vm380, %v2480, 0
      %v2505 = vsel %vm380, %v2481, 0
      %v2508 = vsel %vm380, %v2482, 0
      %v2511 = vsel %vm380, %v2483, 0
      %v2514 = vsel %vm380, %v2484, 0
      %v2517 = vsel %vm380, %v2485, 0
      %v2520 = vsel %vm380, %v2486, 0
      %v2523 = vsel %vm380, %v2487, 0
      %v2526 = vsel %vm380, %v2488, 0
      %v2529 = vsel %vm380, %v2489, 0
      %v2532 = vsel %vm380, %v2490, 0
      %v2535 = vsel %vm380, %v2491, 0
      %v2538 = vsel %vm380, %v2492, 0
      %v2541 = vsel %vm380, %v2493, 0
      %v2544 = vsel %vm380, %v2494, 0
      %v2547 = vsel %vm380, %v2495, 0
      %2549 = vmatpush.msra.mxu0 0.0
      %2550 = vmatpush.msra.mxu0 0.0
      %2551 = vmatpush.msra.mxu0 0.0
      %2552 = vmatpush.msra.mxu0 0.0
      %2553 = vmatpush.msra.mxu0 0.0
      %2554 = vmatpush.msra.mxu0 0.0
      %2555 = vmatpush.msra.mxu0 0.0
      %2556 = vmatpush.msra.mxu0 0.0
      %2557 = vmatpush.msra.mxu0 0.0
      %2558 = vmatpush.msra.mxu0 0.0
      %2559 = vmatpush.msra.mxu0 0.0
      %2560 = vmatpush.msra.mxu0 0.0
      %2561 = vmatpush.msra.mxu0 0.0
      %2562 = vmatpush.msra.mxu0 0.0
      %2563 = vmatpush.msra.mxu0 0.0
      %2564 = vmatpush.msra.mxu0 %v2497
      %2565 = vmatmul.f32.gmra.mxu0 %v2499
      %v2566 = vpop.f32.mrf.mxu0
      %v2567 = vadd.f32 0.0, %v2566
      %2568 = vmatmul.f32.gmra.mxu0 %v2502
      %v2569 = vpop.f32.mrf.mxu0
      %v2570 = vadd.f32 0.0, %v2569
      %2571 = vmatmul.f32.gmra.mxu0 %v2505
      %v2572 = vpop.f32.mrf.mxu0
      %v2573 = vadd.f32 0.0, %v2572
      %2574 = vmatmul.f32.gmra.mxu0 %v2508
      %v2575 = vpop.f32.mrf.mxu0
      %v2576 = vadd.f32 0.0, %v2575
      %2577 = vmatmul.f32.gmra.mxu0 %v2511
      %v2578 = vpop.f32.mrf.mxu0
      %v2579 = vadd.f32 0.0, %v2578
      %2580 = vmatmul.f32.gmra.mxu0 %v2514
      %v2581 = vpop.f32.mrf.mxu0
      %v2582 = vadd.f32 0.0, %v2581
      %2583 = vmatmul.f32.gmra.mxu0 %v2517
      %v2584 = vpop.f32.mrf.mxu0
      %v2585 = vadd.f32 0.0, %v2584
      %2586 = vmatmul.f32.gmra.mxu0 %v2520
      %v2587 = vpop.f32.mrf.mxu0
      %v2588 = vadd.f32 0.0, %v2587
      %2589 = vmatmul.f32.gmra.mxu0 %v2523
      %v2590 = vpop.f32.mrf.mxu0
      %v2591 = vadd.f32 0.0, %v2590
      %2592 = vmatmul.f32.gmra.mxu0 %v2526
      %v2593 = vpop.f32.mrf.mxu0
      %v2594 = vadd.f32 0.0, %v2593
      %2595 = vmatmul.f32.gmra.mxu0 %v2529
      %v2596 = vpop.f32.mrf.mxu0
      %v2597 = vadd.f32 0.0, %v2596
      %2598 = vmatmul.f32.gmra.mxu0 %v2532
      %v2599 = vpop.f32.mrf.mxu0
      %v2600 = vadd.f32 0.0, %v2599
      %2601 = vmatmul.f32.gmra.mxu0 %v2535
      %v2602 = vpop.f32.mrf.mxu0
      %v2603 = vadd.f32 0.0, %v2602
      %2604 = vmatmul.f32.gmra.mxu0 %v2538
      %v2605 = vpop.f32.mrf.mxu0
      %v2606 = vadd.f32 0.0, %v2605
      %2607 = vmatmul.f32.gmra.mxu0 %v2541
      %v2608 = vpop.f32.mrf.mxu0
      %v2609 = vadd.f32 0.0, %v2608
      %2610 = vmatmul.f32.gmra.mxu0 %v2544
      %v2611 = vpop.f32.mrf.mxu0
      %v2612 = vadd.f32 0.0, %v2611
      %2613 = vmatmul.f32.gmra.mxu0 %v2547
      %v2614 = vpop.f32.mrf.mxu0
      %v2615 = vadd.f32 0.0, %v2614
      %2616 = vdwg.mxu0
      %v2617 = vadd.f32 %v2462, %v2567
      %v2618 = vadd.f32 %v2463, %v2570
      %v2619 = vadd.f32 %v2464, %v2573
      %v2620 = vadd.f32 %v2465, %v2576
      %v2621 = vadd.f32 %v2466, %v2579
      %v2622 = vadd.f32 %v2467, %v2582
      %v2623 = vadd.f32 %v2468, %v2585
      %v2624 = vadd.f32 %v2469, %v2588
      %v2625 = vadd.f32 %v2470, %v2591
      %v2626 = vadd.f32 %v2471, %v2594
      %v2627 = vadd.f32 %v2472, %v2597
      %v2628 = vadd.f32 %v2473, %v2600
      %v2629 = vadd.f32 %v2474, %v2603
      %v2630 = vadd.f32 %v2475, %v2606
      %v2631 = vadd.f32 %v2476, %v2609
      %v2632 = vadd.f32 %v2477, %v2612
      %v2633 = vadd.f32 %v2478, %v2615
      %v2634 = vld [vmem:[%s287 + $0x30] sm:$0xff]
      %v2635 = vld [vmem:[%s287 + $0x38] sm:$0xff]
      %v2636 = vld [vmem:[%s287 + $0x40] sm:$0xff]
      %v2637 = vld [vmem:[%s287 + $0x48] sm:$0xff]
      %v2638 = vld [vmem:[%s287 + $0x50] sm:$0xff]
      %v2639 = vld [vmem:[%s287 + $0x58] sm:$0xff]
      %v2640 = vld [vmem:[%s287 + $0x60] sm:$0xff]
      %v2641 = vld [vmem:[%s287 + $0x68] sm:$0xff]
      %v2642 = vld [vmem:[%s287 + $0x70] sm:$0xff]
      %v2643 = vld [vmem:[%s287 + $0x78] sm:$0xff]
      %v2644 = vld [vmem:[%s287 + $0x80] sm:$0xff]
      %v2645 = vld [vmem:[%s287 + $0x88] sm:$0xff]
      %v2646 = vld [vmem:[%s287 + $0x90] sm:$0xff]
      %v2647 = vld [vmem:[%s287 + $0x98] sm:$0xff]
      %v2648 = vld [vmem:[%s287 + $0xa0] sm:$0xff]
      %v2649 = vld [vmem:[%s287 + $0xa8] sm:$0xff]
      %v2650 = vld [vmem:[%s287 + $0xb0] sm:$0x3]
      %s2651 = scalar_lea.vmem %s2, 120
      %v2652 = vld [vmem:[%s2651] sm:$0xff]
      %v2654 = vsel %vm380, %v2634, 0
      %v2657 = vsel %vm380, %v2635, 0
      %v2660 = vsel %vm380, %v2636, 0
      %v2663 = vsel %vm380, %v2637, 0
      %v2666 = vsel %vm380, %v2638, 0
      %v2669 = vsel %vm380, %v2639, 0
      %v2672 = vsel %vm380, %v2640, 0
      %v2675 = vsel %vm380, %v2641, 0
      %v2678 = vsel %vm380, %v2642, 0
      %v2681 = vsel %vm380, %v2643, 0
      %v2684 = vsel %vm380, %v2644, 0
      %v2687 = vsel %vm380, %v2645, 0
      %v2690 = vsel %vm380, %v2646, 0
      %v2693 = vsel %vm380, %v2647, 0
      %v2696 = vsel %vm380, %v2648, 0
      %v2699 = vsel %vm380, %v2649, 0
      %v2702 = vsel %vm380, %v2650, 0
      %2704 = vmatpush.msra.mxu0 0.0
      %2705 = vmatpush.msra.mxu0 0.0
      %2706 = vmatpush.msra.mxu0 0.0
      %2707 = vmatpush.msra.mxu0 0.0
      %2708 = vmatpush.msra.mxu0 0.0
      %2709 = vmatpush.msra.mxu0 0.0
      %2710 = vmatpush.msra.mxu0 0.0
      %2711 = vmatpush.msra.mxu0 0.0
      %2712 = vmatpush.msra.mxu0 0.0
      %2713 = vmatpush.msra.mxu0 0.0
      %2714 = vmatpush.msra.mxu0 0.0
      %2715 = vmatpush.msra.mxu0 0.0
      %2716 = vmatpush.msra.mxu0 0.0
      %2717 = vmatpush.msra.mxu0 0.0
      %2718 = vmatpush.msra.mxu0 0.0
      %2719 = vmatpush.msra.mxu0 %v2652
      %2720 = vmatmul.f32.gmra.mxu0 %v2654
      %v2721 = vpop.f32.mrf.mxu0
      %v2722 = vadd.f32 0.0, %v2721
      %2723 = vmatmul.f32.gmra.mxu0 %v2657
      %v2724 = vpop.f32.mrf.mxu0
      %v2725 = vadd.f32 0.0, %v2724
      %2726 = vmatmul.f32.gmra.mxu0 %v2660
      %v2727 = vpop.f32.mrf.mxu0
      %v2728 = vadd.f32 0.0, %v2727
      %2729 = vmatmul.f32.gmra.mxu0 %v2663
      %v2730 = vpop.f32.mrf.mxu0
      %v2731 = vadd.f32 0.0, %v2730
      %2732 = vmatmul.f32.gmra.mxu0 %v2666
      %v2733 = vpop.f32.mrf.mxu0
      %v2734 = vadd.f32 0.0, %v2733
      %2735 = vmatmul.f32.gmra.mxu0 %v2669
      %v2736 = vpop.f32.mrf.mxu0
      %v2737 = vadd.f32 0.0, %v2736
      %2738 = vmatmul.f32.gmra.mxu0 %v2672
      %v2739 = vpop.f32.mrf.mxu0
      %v2740 = vadd.f32 0.0, %v2739
      %2741 = vmatmul.f32.gmra.mxu0 %v2675
      %v2742 = vpop.f32.mrf.mxu0
      %v2743 = vadd.f32 0.0, %v2742
      %2744 = vmatmul.f32.gmra.mxu0 %v2678
      %v2745 = vpop.f32.mrf.mxu0
      %v2746 = vadd.f32 0.0, %v2745
      %2747 = vmatmul.f32.gmra.mxu0 %v2681
      %v2748 = vpop.f32.mrf.mxu0
      %v2749 = vadd.f32 0.0, %v2748
      %2750 = vmatmul.f32.gmra.mxu0 %v2684
      %v2751 = vpop.f32.mrf.mxu0
      %v2752 = vadd.f32 0.0, %v2751
      %2753 = vmatmul.f32.gmra.mxu0 %v2687
      %v2754 = vpop.f32.mrf.mxu0
      %v2755 = vadd.f32 0.0, %v2754
      %2756 = vmatmul.f32.gmra.mxu0 %v2690
      %v2757 = vpop.f32.mrf.mxu0
      %v2758 = vadd.f32 0.0, %v2757
      %2759 = vmatmul.f32.gmra.mxu0 %v2693
      %v2760 = vpop.f32.mrf.mxu0
      %v2761 = vadd.f32 0.0, %v2760
      %2762 = vmatmul.f32.gmra.mxu0 %v2696
      %v2763 = vpop.f32.mrf.mxu0
      %v2764 = vadd.f32 0.0, %v2763
      %2765 = vmatmul.f32.gmra.mxu0 %v2699
      %v2766 = vpop.f32.mrf.mxu0
      %v2767 = vadd.f32 0.0, %v2766
      %2768 = vmatmul.f32.gmra.mxu0 %v2702
      %v2769 = vpop.f32.mrf.mxu0
      %v2770 = vadd.f32 0.0, %v2769
      %2771 = vdwg.mxu0
      %v2772 = vadd.f32 %v2617, %v2722
      %v2773 = vadd.f32 %v2618, %v2725
      %v2774 = vadd.f32 %v2619, %v2728
      %v2775 = vadd.f32 %v2620, %v2731
      %v2776 = vadd.f32 %v2621, %v2734
      %v2777 = vadd.f32 %v2622, %v2737
      %v2778 = vadd.f32 %v2623, %v2740
      %v2779 = vadd.f32 %v2624, %v2743
      %v2780 = vadd.f32 %v2625, %v2746
      %v2781 = vadd.f32 %v2626, %v2749
      %v2782 = vadd.f32 %v2627, %v2752
      %v2783 = vadd.f32 %v2628, %v2755
      %v2784 = vadd.f32 %v2629, %v2758
      %v2785 = vadd.f32 %v2630, %v2761
      %v2786 = vadd.f32 %v2631, %v2764
      %v2787 = vadd.f32 %v2632, %v2767
      %v2788 = vadd.f32 %v2633, %v2770
      %v2789 = vld [vmem:[%s287 + $0x31] sm:$0xff]
      %v2790 = vld [vmem:[%s287 + $0x39] sm:$0xff]
      %v2791 = vld [vmem:[%s287 + $0x41] sm:$0xff]
      %v2792 = vld [vmem:[%s287 + $0x49] sm:$0xff]
      %v2793 = vld [vmem:[%s287 + $0x51] sm:$0xff]
      %v2794 = vld [vmem:[%s287 + $0x59] sm:$0xff]
      %v2795 = vld [vmem:[%s287 + $0x61] sm:$0xff]
      %v2796 = vld [vmem:[%s287 + $0x69] sm:$0xff]
      %v2797 = vld [vmem:[%s287 + $0x71] sm:$0xff]
      %v2798 = vld [vmem:[%s287 + $0x79] sm:$0xff]
      %v2799 = vld [vmem:[%s287 + $0x81] sm:$0xff]
      %v2800 = vld [vmem:[%s287 + $0x89] sm:$0xff]
      %v2801 = vld [vmem:[%s287 + $0x91] sm:$0xff]
      %v2802 = vld [vmem:[%s287 + $0x99] sm:$0xff]
      %v2803 = vld [vmem:[%s287 + $0xa1] sm:$0xff]
      %v2804 = vld [vmem:[%s287 + $0xa9] sm:$0xff]
      %v2805 = vld [vmem:[%s287 + $0xb1] sm:$0x3]
      %s2806 = scalar_lea.vmem %s2, 128
      %v2807 = vld [vmem:[%s2806] sm:$0xff]
      %v2809 = vsel %vm380, %v2789, 0
      %v2812 = vsel %vm380, %v2790, 0
      %v2815 = vsel %vm380, %v2791, 0
      %v2818 = vsel %vm380, %v2792, 0
      %v2821 = vsel %vm380, %v2793, 0
      %v2824 = vsel %vm380, %v2794, 0
      %v2827 = vsel %vm380, %v2795, 0
      %v2830 = vsel %vm380, %v2796, 0
      %v2833 = vsel %vm380, %v2797, 0
      %v2836 = vsel %vm380, %v2798, 0
      %v2839 = vsel %vm380, %v2799, 0
      %v2842 = vsel %vm380, %v2800, 0
      %v2845 = vsel %vm380, %v2801, 0
      %v2848 = vsel %vm380, %v2802, 0
      %v2851 = vsel %vm380, %v2803, 0
      %v2854 = vsel %vm380, %v2804, 0
      %v2857 = vsel %vm380, %v2805, 0
      %2859 = vmatpush.msra.mxu0 0.0
      %2860 = vmatpush.msra.mxu0 0.0
      %2861 = vmatpush.msra.mxu0 0.0
      %2862 = vmatpush.msra.mxu0 0.0
      %2863 = vmatpush.msra.mxu0 0.0
      %2864 = vmatpush.msra.mxu0 0.0
      %2865 = vmatpush.msra.mxu0 0.0
      %2866 = vmatpush.msra.mxu0 0.0
      %2867 = vmatpush.msra.mxu0 0.0
      %2868 = vmatpush.msra.mxu0 0.0
      %2869 = vmatpush.msra.mxu0 0.0
      %2870 = vmatpush.msra.mxu0 0.0
      %2871 = vmatpush.msra.mxu0 0.0
      %2872 = vmatpush.msra.mxu0 0.0
      %2873 = vmatpush.msra.mxu0 0.0
      %2874 = vmatpush.msra.mxu0 %v2807
      %2875 = vmatmul.f32.gmra.mxu0 %v2809
      %v2876 = vpop.f32.mrf.mxu0
      %v2877 = vadd.f32 0.0, %v2876
      %2878 = vmatmul.f32.gmra.mxu0 %v2812
      %v2879 = vpop.f32.mrf.mxu0
      %v2880 = vadd.f32 0.0, %v2879
      %2881 = vmatmul.f32.gmra.mxu0 %v2815
      %v2882 = vpop.f32.mrf.mxu0
      %v2883 = vadd.f32 0.0, %v2882
      %2884 = vmatmul.f32.gmra.mxu0 %v2818
      %v2885 = vpop.f32.mrf.mxu0
      %v2886 = vadd.f32 0.0, %v2885
      %2887 = vmatmul.f32.gmra.mxu0 %v2821
      %v2888 = vpop.f32.mrf.mxu0
      %v2889 = vadd.f32 0.0, %v2888
      %2890 = vmatmul.f32.gmra.mxu0 %v2824
      %v2891 = vpop.f32.mrf.mxu0
      %v2892 = vadd.f32 0.0, %v2891
      %2893 = vmatmul.f32.gmra.mxu0 %v2827
      %v2894 = vpop.f32.mrf.mxu0
      %v2895 = vadd.f32 0.0, %v2894
      %2896 = vmatmul.f32.gmra.mxu0 %v2830
      %v2897 = vpop.f32.mrf.mxu0
      %v2898 = vadd.f32 0.0, %v2897
      %2899 = vmatmul.f32.gmra.mxu0 %v2833
      %v2900 = vpop.f32.mrf.mxu0
      %v2901 = vadd.f32 0.0, %v2900
      %2902 = vmatmul.f32.gmra.mxu0 %v2836
      %v2903 = vpop.f32.mrf.mxu0
      %v2904 = vadd.f32 0.0, %v2903
      %2905 = vmatmul.f32.gmra.mxu0 %v2839
      %v2906 = vpop.f32.mrf.mxu0
      %v2907 = vadd.f32 0.0, %v2906
      %2908 = vmatmul.f32.gmra.mxu0 %v2842
      %v2909 = vpop.f32.mrf.mxu0
      %v2910 = vadd.f32 0.0, %v2909
      %2911 = vmatmul.f32.gmra.mxu0 %v2845
      %v2912 = vpop.f32.mrf.mxu0
      %v2913 = vadd.f32 0.0, %v2912
      %2914 = vmatmul.f32.gmra.mxu0 %v2848
      %v2915 = vpop.f32.mrf.mxu0
      %v2916 = vadd.f32 0.0, %v2915
      %2917 = vmatmul.f32.gmra.mxu0 %v2851
      %v2918 = vpop.f32.mrf.mxu0
      %v2919 = vadd.f32 0.0, %v2918
      %2920 = vmatmul.f32.gmra.mxu0 %v2854
      %v2921 = vpop.f32.mrf.mxu0
      %v2922 = vadd.f32 0.0, %v2921
      %2923 = vmatmul.f32.gmra.mxu0 %v2857
      %v2924 = vpop.f32.mrf.mxu0
      %v2925 = vadd.f32 0.0, %v2924
      %2926 = vdwg.mxu0
      %v2927 = vadd.f32 %v2772, %v2877
      %v2928 = vadd.f32 %v2773, %v2880
      %v2929 = vadd.f32 %v2774, %v2883
      %v2930 = vadd.f32 %v2775, %v2886
      %v2931 = vadd.f32 %v2776, %v2889
      %v2932 = vadd.f32 %v2777, %v2892
      %v2933 = vadd.f32 %v2778, %v2895
      %v2934 = vadd.f32 %v2779, %v2898
      %v2935 = vadd.f32 %v2780, %v2901
      %v2936 = vadd.f32 %v2781, %v2904
      %v2937 = vadd.f32 %v2782, %v2907
      %v2938 = vadd.f32 %v2783, %v2910
      %v2939 = vadd.f32 %v2784, %v2913
      %v2940 = vadd.f32 %v2785, %v2916
      %v2941 = vadd.f32 %v2786, %v2919
      %v2942 = vadd.f32 %v2787, %v2922
      %v2943 = vadd.f32 %v2788, %v2925
      %v2944 = vld [vmem:[%s287 + $0x32] sm:$0xff]
      %v2945 = vld [vmem:[%s287 + $0x3a] sm:$0xff]
      %v2946 = vld [vmem:[%s287 + $0x42] sm:$0xff]
      %v2947 = vld [vmem:[%s287 + $0x4a] sm:$0xff]
      %v2948 = vld [vmem:[%s287 + $0x52] sm:$0xff]
      %v2949 = vld [vmem:[%s287 + $0x5a] sm:$0xff]
      %v2950 = vld [vmem:[%s287 + $0x62] sm:$0xff]
      %v2951 = vld [vmem:[%s287 + $0x6a] sm:$0xff]
      %v2952 = vld [vmem:[%s287 + $0x72] sm:$0xff]
      %v2953 = vld [vmem:[%s287 + $0x7a] sm:$0xff]
      %v2954 = vld [vmem:[%s287 + $0x82] sm:$0xff]
      %v2955 = vld [vmem:[%s287 + $0x8a] sm:$0xff]
      %v2956 = vld [vmem:[%s287 + $0x92] sm:$0xff]
      %v2957 = vld [vmem:[%s287 + $0x9a] sm:$0xff]
      %v2958 = vld [vmem:[%s287 + $0xa2] sm:$0xff]
      %v2959 = vld [vmem:[%s287 + $0xaa] sm:$0xff]
      %v2960 = vld [vmem:[%s287 + $0xb2] sm:$0x3]
      %s2961 = scalar_lea.vmem %s2, 136
      %v2962 = vld [vmem:[%s2961] sm:$0xff]
      %v2964 = vsel %vm380, %v2944, 0
      %v2967 = vsel %vm380, %v2945, 0
      %v2970 = vsel %vm380, %v2946, 0
      %v2973 = vsel %vm380, %v2947, 0
      %v2976 = vsel %vm380, %v2948, 0
      %v2979 = vsel %vm380, %v2949, 0
      %v2982 = vsel %vm380, %v2950, 0
      %v2985 = vsel %vm380, %v2951, 0
      %v2988 = vsel %vm380, %v2952, 0
      %v2991 = vsel %vm380, %v2953, 0
      %v2994 = vsel %vm380, %v2954, 0
      %v2997 = vsel %vm380, %v2955, 0
      %v3000 = vsel %vm380, %v2956, 0
      %v3003 = vsel %vm380, %v2957, 0
      %v3006 = vsel %vm380, %v2958, 0
      %v3009 = vsel %vm380, %v2959, 0
      %v3012 = vsel %vm380, %v2960, 0
      %3014 = vmatpush.msra.mxu0 0.0
      %3015 = vmatpush.msra.mxu0 0.0
      %3016 = vmatpush.msra.mxu0 0.0
      %3017 = vmatpush.msra.mxu0 0.0
      %3018 = vmatpush.msra.mxu0 0.0
      %3019 = vmatpush.msra.mxu0 0.0
      %3020 = vmatpush.msra.mxu0 0.0
      %3021 = vmatpush.msra.mxu0 0.0
      %3022 = vmatpush.msra.mxu0 0.0
      %3023 = vmatpush.msra.mxu0 0.0
      %3024 = vmatpush.msra.mxu0 0.0
      %3025 = vmatpush.msra.mxu0 0.0
      %3026 = vmatpush.msra.mxu0 0.0
      %3027 = vmatpush.msra.mxu0 0.0
      %3028 = vmatpush.msra.mxu0 0.0
      %3029 = vmatpush.msra.mxu0 %v2962
      %3030 = vmatmul.f32.gmra.mxu0 %v2964
      %v3031 = vpop.f32.mrf.mxu0
      %v3032 = vadd.f32 0.0, %v3031
      %3033 = vmatmul.f32.gmra.mxu0 %v2967
      %v3034 = vpop.f32.mrf.mxu0
      %v3035 = vadd.f32 0.0, %v3034
      %3036 = vmatmul.f32.gmra.mxu0 %v2970
      %v3037 = vpop.f32.mrf.mxu0
      %v3038 = vadd.f32 0.0, %v3037
      %3039 = vmatmul.f32.gmra.mxu0 %v2973
      %v3040 = vpop.f32.mrf.mxu0
      %v3041 = vadd.f32 0.0, %v3040
      %3042 = vmatmul.f32.gmra.mxu0 %v2976
      %v3043 = vpop.f32.mrf.mxu0
      %v3044 = vadd.f32 0.0, %v3043
      %3045 = vmatmul.f32.gmra.mxu0 %v2979
      %v3046 = vpop.f32.mrf.mxu0
      %v3047 = vadd.f32 0.0, %v3046
      %3048 = vmatmul.f32.gmra.mxu0 %v2982
      %v3049 = vpop.f32.mrf.mxu0
      %v3050 = vadd.f32 0.0, %v3049
      %3051 = vmatmul.f32.gmra.mxu0 %v2985
      %v3052 = vpop.f32.mrf.mxu0
      %v3053 = vadd.f32 0.0, %v3052
      %3054 = vmatmul.f32.gmra.mxu0 %v2988
      %v3055 = vpop.f32.mrf.mxu0
      %v3056 = vadd.f32 0.0, %v3055
      %3057 = vmatmul.f32.gmra.mxu0 %v2991
      %v3058 = vpop.f32.mrf.mxu0
      %v3059 = vadd.f32 0.0, %v3058
      %3060 = vmatmul.f32.gmra.mxu0 %v2994
      %v3061 = vpop.f32.mrf.mxu0
      %v3062 = vadd.f32 0.0, %v3061
      %3063 = vmatmul.f32.gmra.mxu0 %v2997
      %v3064 = vpop.f32.mrf.mxu0
      %v3065 = vadd.f32 0.0, %v3064
      %3066 = vmatmul.f32.gmra.mxu0 %v3000
      %v3067 = vpop.f32.mrf.mxu0
      %v3068 = vadd.f32 0.0, %v3067
      %3069 = vmatmul.f32.gmra.mxu0 %v3003
      %v3070 = vpop.f32.mrf.mxu0
      %v3071 = vadd.f32 0.0, %v3070
      %3072 = vmatmul.f32.gmra.mxu0 %v3006
      %v3073 = vpop.f32.mrf.mxu0
      %v3074 = vadd.f32 0.0, %v3073
      %3075 = vmatmul.f32.gmra.mxu0 %v3009
      %v3076 = vpop.f32.mrf.mxu0
      %v3077 = vadd.f32 0.0, %v3076
      %3078 = vmatmul.f32.gmra.mxu0 %v3012
      %v3079 = vpop.f32.mrf.mxu0
      %v3080 = vadd.f32 0.0, %v3079
      %3081 = vdwg.mxu0
      %v3082 = vadd.f32 %v2927, %v3032
      %v3083 = vadd.f32 %v2928, %v3035
      %v3084 = vadd.f32 %v2929, %v3038
      %v3085 = vadd.f32 %v2930, %v3041
      %v3086 = vadd.f32 %v2931, %v3044
      %v3087 = vadd.f32 %v2932, %v3047
      %v3088 = vadd.f32 %v2933, %v3050
      %v3089 = vadd.f32 %v2934, %v3053
      %v3090 = vadd.f32 %v2935, %v3056
      %v3091 = vadd.f32 %v2936, %v3059
      %v3092 = vadd.f32 %v2937, %v3062
      %v3093 = vadd.f32 %v2938, %v3065
      %v3094 = vadd.f32 %v2939, %v3068
      %v3095 = vadd.f32 %v2940, %v3071
      %v3096 = vadd.f32 %v2941, %v3074
      %v3097 = vadd.f32 %v2942, %v3077
      %v3098 = vadd.f32 %v2943, %v3080
      %v3099 = vld [vmem:[%s287 + $0x48] sm:$0xff]
      %v3100 = vld [vmem:[%s287 + $0x50] sm:$0xff]
      %v3101 = vld [vmem:[%s287 + $0x58] sm:$0xff]
      %v3102 = vld [vmem:[%s287 + $0x60] sm:$0xff]
      %v3103 = vld [vmem:[%s287 + $0x68] sm:$0xff]
      %v3104 = vld [vmem:[%s287 + $0x70] sm:$0xff]
      %v3105 = vld [vmem:[%s287 + $0x78] sm:$0xff]
      %v3106 = vld [vmem:[%s287 + $0x80] sm:$0xff]
      %v3107 = vld [vmem:[%s287 + $0x88] sm:$0xff]
      %v3108 = vld [vmem:[%s287 + $0x90] sm:$0xff]
      %v3109 = vld [vmem:[%s287 + $0x98] sm:$0xff]
      %v3110 = vld [vmem:[%s287 + $0xa0] sm:$0xff]
      %v3111 = vld [vmem:[%s287 + $0xa8] sm:$0xff]
      %v3112 = vld [vmem:[%s287 + $0xb0] sm:$0xff]
      %v3113 = vld [vmem:[%s287 + $0xb8] sm:$0xff]
      %v3114 = vld [vmem:[%s287 + $0xc0] sm:$0xff]
      %v3115 = vld [vmem:[%s287 + $0xc8] sm:$0x3]
      %s3116 = scalar_lea.vmem %s2, 144
      %v3117 = vld [vmem:[%s3116] sm:$0xff]
      %v3119 = vsel %vm380, %v3099, 0
      %v3122 = vsel %vm380, %v3100, 0
      %v3125 = vsel %vm380, %v3101, 0
      %v3128 = vsel %vm380, %v3102, 0
      %v3131 = vsel %vm380, %v3103, 0
      %v3134 = vsel %vm380, %v3104, 0
      %v3137 = vsel %vm380, %v3105, 0
      %v3140 = vsel %vm380, %v3106, 0
      %v3143 = vsel %vm380, %v3107, 0
      %v3146 = vsel %vm380, %v3108, 0
      %v3149 = vsel %vm380, %v3109, 0
      %v3152 = vsel %vm380, %v3110, 0
      %v3155 = vsel %vm380, %v3111, 0
      %v3158 = vsel %vm380, %v3112, 0
      %v3161 = vsel %vm380, %v3113, 0
      %v3164 = vsel %vm380, %v3114, 0
      %v3167 = vsel %vm380, %v3115, 0
      %3169 = vmatpush.msra.mxu0 0.0
      %3170 = vmatpush.msra.mxu0 0.0
      %3171 = vmatpush.msra.mxu0 0.0
      %3172 = vmatpush.msra.mxu0 0.0
      %3173 = vmatpush.msra.mxu0 0.0
      %3174 = vmatpush.msra.mxu0 0.0
      %3175 = vmatpush.msra.mxu0 0.0
      %3176 = vmatpush.msra.mxu0 0.0
      %3177 = vmatpush.msra.mxu0 0.0
      %3178 = vmatpush.msra.mxu0 0.0
      %3179 = vmatpush.msra.mxu0 0.0
      %3180 = vmatpush.msra.mxu0 0.0
      %3181 = vmatpush.msra.mxu0 0.0
      %3182 = vmatpush.msra.mxu0 0.0
      %3183 = vmatpush.msra.mxu0 0.0
      %3184 = vmatpush.msra.mxu0 %v3117
      %3185 = vmatmul.f32.gmra.mxu0 %v3119
      %v3186 = vpop.f32.mrf.mxu0
      %v3187 = vadd.f32 0.0, %v3186
      %3188 = vmatmul.f32.gmra.mxu0 %v3122
      %v3189 = vpop.f32.mrf.mxu0
      %v3190 = vadd.f32 0.0, %v3189
      %3191 = vmatmul.f32.gmra.mxu0 %v3125
      %v3192 = vpop.f32.mrf.mxu0
      %v3193 = vadd.f32 0.0, %v3192
      %3194 = vmatmul.f32.gmra.mxu0 %v3128
      %v3195 = vpop.f32.mrf.mxu0
      %v3196 = vadd.f32 0.0, %v3195
      %3197 = vmatmul.f32.gmra.mxu0 %v3131
      %v3198 = vpop.f32.mrf.mxu0
      %v3199 = vadd.f32 0.0, %v3198
      %3200 = vmatmul.f32.gmra.mxu0 %v3134
      %v3201 = vpop.f32.mrf.mxu0
      %v3202 = vadd.f32 0.0, %v3201
      %3203 = vmatmul.f32.gmra.mxu0 %v3137
      %v3204 = vpop.f32.mrf.mxu0
      %v3205 = vadd.f32 0.0, %v3204
      %3206 = vmatmul.f32.gmra.mxu0 %v3140
      %v3207 = vpop.f32.mrf.mxu0
      %v3208 = vadd.f32 0.0, %v3207
      %3209 = vmatmul.f32.gmra.mxu0 %v3143
      %v3210 = vpop.f32.mrf.mxu0
      %v3211 = vadd.f32 0.0, %v3210
      %3212 = vmatmul.f32.gmra.mxu0 %v3146
      %v3213 = vpop.f32.mrf.mxu0
      %v3214 = vadd.f32 0.0, %v3213
      %3215 = vmatmul.f32.gmra.mxu0 %v3149
      %v3216 = vpop.f32.mrf.mxu0
      %v3217 = vadd.f32 0.0, %v3216
      %3218 = vmatmul.f32.gmra.mxu0 %v3152
      %v3219 = vpop.f32.mrf.mxu0
      %v3220 = vadd.f32 0.0, %v3219
      %3221 = vmatmul.f32.gmra.mxu0 %v3155
      %v3222 = vpop.f32.mrf.mxu0
      %v3223 = vadd.f32 0.0, %v3222
      %3224 = vmatmul.f32.gmra.mxu0 %v3158
      %v3225 = vpop.f32.mrf.mxu0
      %v3226 = vadd.f32 0.0, %v3225
      %3227 = vmatmul.f32.gmra.mxu0 %v3161
      %v3228 = vpop.f32.mrf.mxu0
      %v3229 = vadd.f32 0.0, %v3228
      %3230 = vmatmul.f32.gmra.mxu0 %v3164
      %v3231 = vpop.f32.mrf.mxu0
      %v3232 = vadd.f32 0.0, %v3231
      %3233 = vmatmul.f32.gmra.mxu0 %v3167
      %v3234 = vpop.f32.mrf.mxu0
      %v3235 = vadd.f32 0.0, %v3234
      %3236 = vdwg.mxu0
      %v3237 = vadd.f32 %v3082, %v3187
      %v3238 = vadd.f32 %v3083, %v3190
      %v3239 = vadd.f32 %v3084, %v3193
      %v3240 = vadd.f32 %v3085, %v3196
      %v3241 = vadd.f32 %v3086, %v3199
      %v3242 = vadd.f32 %v3087, %v3202
      %v3243 = vadd.f32 %v3088, %v3205
      %v3244 = vadd.f32 %v3089, %v3208
      %v3245 = vadd.f32 %v3090, %v3211
      %v3246 = vadd.f32 %v3091, %v3214
      %v3247 = vadd.f32 %v3092, %v3217
      %v3248 = vadd.f32 %v3093, %v3220
      %v3249 = vadd.f32 %v3094, %v3223
      %v3250 = vadd.f32 %v3095, %v3226
      %v3251 = vadd.f32 %v3096, %v3229
      %v3252 = vadd.f32 %v3097, %v3232
      %v3253 = vadd.f32 %v3098, %v3235
      %v3254 = vld [vmem:[%s287 + $0x49] sm:$0xff]
      %v3255 = vld [vmem:[%s287 + $0x51] sm:$0xff]
      %v3256 = vld [vmem:[%s287 + $0x59] sm:$0xff]
      %v3257 = vld [vmem:[%s287 + $0x61] sm:$0xff]
      %v3258 = vld [vmem:[%s287 + $0x69] sm:$0xff]
      %v3259 = vld [vmem:[%s287 + $0x71] sm:$0xff]
      %v3260 = vld [vmem:[%s287 + $0x79] sm:$0xff]
      %v3261 = vld [vmem:[%s287 + $0x81] sm:$0xff]
      %v3262 = vld [vmem:[%s287 + $0x89] sm:$0xff]
      %v3263 = vld [vmem:[%s287 + $0x91] sm:$0xff]
      %v3264 = vld [vmem:[%s287 + $0x99] sm:$0xff]
      %v3265 = vld [vmem:[%s287 + $0xa1] sm:$0xff]
      %v3266 = vld [vmem:[%s287 + $0xa9] sm:$0xff]
      %v3267 = vld [vmem:[%s287 + $0xb1] sm:$0xff]
      %v3268 = vld [vmem:[%s287 + $0xb9] sm:$0xff]
      %v3269 = vld [vmem:[%s287 + $0xc1] sm:$0xff]
      %v3270 = vld [vmem:[%s287 + $0xc9] sm:$0x3]
      %s3271 = scalar_lea.vmem %s2, 152
      %v3272 = vld [vmem:[%s3271] sm:$0xff]
      %v3274 = vsel %vm380, %v3254, 0
      %v3277 = vsel %vm380, %v3255, 0
      %v3280 = vsel %vm380, %v3256, 0
      %v3283 = vsel %vm380, %v3257, 0
      %v3286 = vsel %vm380, %v3258, 0
      %v3289 = vsel %vm380, %v3259, 0
      %v3292 = vsel %vm380, %v3260, 0
      %v3295 = vsel %vm380, %v3261, 0
      %v3298 = vsel %vm380, %v3262, 0
      %v3301 = vsel %vm380, %v3263, 0
      %v3304 = vsel %vm380, %v3264, 0
      %v3307 = vsel %vm380, %v3265, 0
      %v3310 = vsel %vm380, %v3266, 0
      %v3313 = vsel %vm380, %v3267, 0
      %v3316 = vsel %vm380, %v3268, 0
      %v3319 = vsel %vm380, %v3269, 0
      %v3322 = vsel %vm380, %v3270, 0
      %3324 = vmatpush.msra.mxu0 0.0
      %3325 = vmatpush.msra.mxu0 0.0
      %3326 = vmatpush.msra.mxu0 0.0
      %3327 = vmatpush.msra.mxu0 0.0
      %3328 = vmatpush.msra.mxu0 0.0
      %3329 = vmatpush.msra.mxu0 0.0
      %3330 = vmatpush.msra.mxu0 0.0
      %3331 = vmatpush.msra.mxu0 0.0
      %3332 = vmatpush.msra.mxu0 0.0
      %3333 = vmatpush.msra.mxu0 0.0
      %3334 = vmatpush.msra.mxu0 0.0
      %3335 = vmatpush.msra.mxu0 0.0
      %3336 = vmatpush.msra.mxu0 0.0
      %3337 = vmatpush.msra.mxu0 0.0
      %3338 = vmatpush.msra.mxu0 0.0
      %3339 = vmatpush.msra.mxu0 %v3272
      %3340 = vmatmul.f32.gmra.mxu0 %v3274
      %v3341 = vpop.f32.mrf.mxu0
      %v3342 = vadd.f32 0.0, %v3341
      %3343 = vmatmul.f32.gmra.mxu0 %v3277
      %v3344 = vpop.f32.mrf.mxu0
      %v3345 = vadd.f32 0.0, %v3344
      %3346 = vmatmul.f32.gmra.mxu0 %v3280
      %v3347 = vpop.f32.mrf.mxu0
      %v3348 = vadd.f32 0.0, %v3347
      %3349 = vmatmul.f32.gmra.mxu0 %v3283
      %v3350 = vpop.f32.mrf.mxu0
      %v3351 = vadd.f32 0.0, %v3350
      %3352 = vmatmul.f32.gmra.mxu0 %v3286
      %v3353 = vpop.f32.mrf.mxu0
      %v3354 = vadd.f32 0.0, %v3353
      %3355 = vmatmul.f32.gmra.mxu0 %v3289
      %v3356 = vpop.f32.mrf.mxu0
      %v3357 = vadd.f32 0.0, %v3356
      %3358 = vmatmul.f32.gmra.mxu0 %v3292
      %v3359 = vpop.f32.mrf.mxu0
      %v3360 = vadd.f32 0.0, %v3359
      %3361 = vmatmul.f32.gmra.mxu0 %v3295
      %v3362 = vpop.f32.mrf.mxu0
      %v3363 = vadd.f32 0.0, %v3362
      %3364 = vmatmul.f32.gmra.mxu0 %v3298
      %v3365 = vpop.f32.mrf.mxu0
      %v3366 = vadd.f32 0.0, %v3365
      %3367 = vmatmul.f32.gmra.mxu0 %v3301
      %v3368 = vpop.f32.mrf.mxu0
      %v3369 = vadd.f32 0.0, %v3368
      %3370 = vmatmul.f32.gmra.mxu0 %v3304
      %v3371 = vpop.f32.mrf.mxu0
      %v3372 = vadd.f32 0.0, %v3371
      %3373 = vmatmul.f32.gmra.mxu0 %v3307
      %v3374 = vpop.f32.mrf.mxu0
      %v3375 = vadd.f32 0.0, %v3374
      %3376 = vmatmul.f32.gmra.mxu0 %v3310
      %v3377 = vpop.f32.mrf.mxu0
      %v3378 = vadd.f32 0.0, %v3377
      %3379 = vmatmul.f32.gmra.mxu0 %v3313
      %v3380 = vpop.f32.mrf.mxu0
      %v3381 = vadd.f32 0.0, %v3380
      %3382 = vmatmul.f32.gmra.mxu0 %v3316
      %v3383 = vpop.f32.mrf.mxu0
      %v3384 = vadd.f32 0.0, %v3383
      %3385 = vmatmul.f32.gmra.mxu0 %v3319
      %v3386 = vpop.f32.mrf.mxu0
      %v3387 = vadd.f32 0.0, %v3386
      %3388 = vmatmul.f32.gmra.mxu0 %v3322
      %v3389 = vpop.f32.mrf.mxu0
      %v3390 = vadd.f32 0.0, %v3389
      %3391 = vdwg.mxu0
      %v3392 = vadd.f32 %v3237, %v3342
      %v3393 = vadd.f32 %v3238, %v3345
      %v3394 = vadd.f32 %v3239, %v3348
      %v3395 = vadd.f32 %v3240, %v3351
      %v3396 = vadd.f32 %v3241, %v3354
      %v3397 = vadd.f32 %v3242, %v3357
      %v3398 = vadd.f32 %v3243, %v3360
      %v3399 = vadd.f32 %v3244, %v3363
      %v3400 = vadd.f32 %v3245, %v3366
      %v3401 = vadd.f32 %v3246, %v3369
      %v3402 = vadd.f32 %v3247, %v3372
      %v3403 = vadd.f32 %v3248, %v3375
      %v3404 = vadd.f32 %v3249, %v3378
      %v3405 = vadd.f32 %v3250, %v3381
      %v3406 = vadd.f32 %v3251, %v3384
      %v3407 = vadd.f32 %v3252, %v3387
      %v3408 = vadd.f32 %v3253, %v3390
      %v3409 = vld [vmem:[%s287 + $0x4a] sm:$0xff]
      %v3410 = vld [vmem:[%s287 + $0x52] sm:$0xff]
      %v3411 = vld [vmem:[%s287 + $0x5a] sm:$0xff]
      %v3412 = vld [vmem:[%s287 + $0x62] sm:$0xff]
      %v3413 = vld [vmem:[%s287 + $0x6a] sm:$0xff]
      %v3414 = vld [vmem:[%s287 + $0x72] sm:$0xff]
      %v3415 = vld [vmem:[%s287 + $0x7a] sm:$0xff]
      %v3416 = vld [vmem:[%s287 + $0x82] sm:$0xff]
      %v3417 = vld [vmem:[%s287 + $0x8a] sm:$0xff]
      %v3418 = vld [vmem:[%s287 + $0x92] sm:$0xff]
      %v3419 = vld [vmem:[%s287 + $0x9a] sm:$0xff]
      %v3420 = vld [vmem:[%s287 + $0xa2] sm:$0xff]
      %v3421 = vld [vmem:[%s287 + $0xaa] sm:$0xff]
      %v3422 = vld [vmem:[%s287 + $0xb2] sm:$0xff]
      %v3423 = vld [vmem:[%s287 + $0xba] sm:$0xff]
      %v3424 = vld [vmem:[%s287 + $0xc2] sm:$0xff]
      %v3425 = vld [vmem:[%s287 + $0xca] sm:$0x3]
      %s3426 = scalar_lea.vmem %s2, 160
      %v3427 = vld [vmem:[%s3426] sm:$0xff]
      %v3429 = vsel %vm380, %v3409, 0
      %v3432 = vsel %vm380, %v3410, 0
      %v3435 = vsel %vm380, %v3411, 0
      %v3438 = vsel %vm380, %v3412, 0
      %v3441 = vsel %vm380, %v3413, 0
      %v3444 = vsel %vm380, %v3414, 0
      %v3447 = vsel %vm380, %v3415, 0
      %v3450 = vsel %vm380, %v3416, 0
      %v3453 = vsel %vm380, %v3417, 0
      %v3456 = vsel %vm380, %v3418, 0
      %v3459 = vsel %vm380, %v3419, 0
      %v3462 = vsel %vm380, %v3420, 0
      %v3465 = vsel %vm380, %v3421, 0
      %v3468 = vsel %vm380, %v3422, 0
      %v3471 = vsel %vm380, %v3423, 0
      %v3474 = vsel %vm380, %v3424, 0
      %v3477 = vsel %vm380, %v3425, 0
      %3479 = vmatpush.msra.mxu0 0.0
      %3480 = vmatpush.msra.mxu0 0.0
      %3481 = vmatpush.msra.mxu0 0.0
      %3482 = vmatpush.msra.mxu0 0.0
      %3483 = vmatpush.msra.mxu0 0.0
      %3484 = vmatpush.msra.mxu0 0.0
      %3485 = vmatpush.msra.mxu0 0.0
      %3486 = vmatpush.msra.mxu0 0.0
      %3487 = vmatpush.msra.mxu0 0.0
      %3488 = vmatpush.msra.mxu0 0.0
      %3489 = vmatpush.msra.mxu0 0.0
      %3490 = vmatpush.msra.mxu0 0.0
      %3491 = vmatpush.msra.mxu0 0.0
      %3492 = vmatpush.msra.mxu0 0.0
      %3493 = vmatpush.msra.mxu0 0.0
      %3494 = vmatpush.msra.mxu0 %v3427
      %3495 = vmatmul.f32.gmra.mxu0 %v3429
      %v3496 = vpop.f32.mrf.mxu0
      %v3497 = vadd.f32 0.0, %v3496
      %3498 = vmatmul.f32.gmra.mxu0 %v3432
      %v3499 = vpop.f32.mrf.mxu0
      %v3500 = vadd.f32 0.0, %v3499
      %3501 = vmatmul.f32.gmra.mxu0 %v3435
      %v3502 = vpop.f32.mrf.mxu0
      %v3503 = vadd.f32 0.0, %v3502
      %3504 = vmatmul.f32.gmra.mxu0 %v3438
      %v3505 = vpop.f32.mrf.mxu0
      %v3506 = vadd.f32 0.0, %v3505
      %3507 = vmatmul.f32.gmra.mxu0 %v3441
      %v3508 = vpop.f32.mrf.mxu0
      %v3509 = vadd.f32 0.0, %v3508
      %3510 = vmatmul.f32.gmra.mxu0 %v3444
      %v3511 = vpop.f32.mrf.mxu0
      %v3512 = vadd.f32 0.0, %v3511
      %3513 = vmatmul.f32.gmra.mxu0 %v3447
      %v3514 = vpop.f32.mrf.mxu0
      %v3515 = vadd.f32 0.0, %v3514
      %3516 = vmatmul.f32.gmra.mxu0 %v3450
      %v3517 = vpop.f32.mrf.mxu0
      %v3518 = vadd.f32 0.0, %v3517
      %3519 = vmatmul.f32.gmra.mxu0 %v3453
      %v3520 = vpop.f32.mrf.mxu0
      %v3521 = vadd.f32 0.0, %v3520
      %3522 = vmatmul.f32.gmra.mxu0 %v3456
      %v3523 = vpop.f32.mrf.mxu0
      %v3524 = vadd.f32 0.0, %v3523
      %3525 = vmatmul.f32.gmra.mxu0 %v3459
      %v3526 = vpop.f32.mrf.mxu0
      %v3527 = vadd.f32 0.0, %v3526
      %3528 = vmatmul.f32.gmra.mxu0 %v3462
      %v3529 = vpop.f32.mrf.mxu0
      %v3530 = vadd.f32 0.0, %v3529
      %3531 = vmatmul.f32.gmra.mxu0 %v3465
      %v3532 = vpop.f32.mrf.mxu0
      %v3533 = vadd.f32 0.0, %v3532
      %3534 = vmatmul.f32.gmra.mxu0 %v3468
      %v3535 = vpop.f32.mrf.mxu0
      %v3536 = vadd.f32 0.0, %v3535
      %3537 = vmatmul.f32.gmra.mxu0 %v3471
      %v3538 = vpop.f32.mrf.mxu0
      %v3539 = vadd.f32 0.0, %v3538
      %3540 = vmatmul.f32.gmra.mxu0 %v3474
      %v3541 = vpop.f32.mrf.mxu0
      %v3542 = vadd.f32 0.0, %v3541
      %3543 = vmatmul.f32.gmra.mxu0 %v3477
      %v3544 = vpop.f32.mrf.mxu0
      %v3545 = vadd.f32 0.0, %v3544
      %3546 = vdwg.mxu0
      %v3547 = vadd.f32 %v3392, %v3497
      %v3548 = vadd.f32 %v3393, %v3500
      %v3549 = vadd.f32 %v3394, %v3503
      %v3550 = vadd.f32 %v3395, %v3506
      %v3551 = vadd.f32 %v3396, %v3509
      %v3552 = vadd.f32 %v3397, %v3512
      %v3553 = vadd.f32 %v3398, %v3515
      %v3554 = vadd.f32 %v3399, %v3518
      %v3555 = vadd.f32 %v3400, %v3521
      %v3556 = vadd.f32 %v3401, %v3524
      %v3557 = vadd.f32 %v3402, %v3527
      %v3558 = vadd.f32 %v3403, %v3530
      %v3559 = vadd.f32 %v3404, %v3533
      %v3560 = vadd.f32 %v3405, %v3536
      %v3561 = vadd.f32 %v3406, %v3539
      %v3562 = vadd.f32 %v3407, %v3542
      %v3563 = vadd.f32 %v3408, %v3545
      %v3564 = vld [vmem:[%s287 + $0x4e] sm:$0xff]
      %v3565 = vld [vmem:[%s287 + $0x56] sm:$0xff]
      %v3566 = vld [vmem:[%s287 + $0x5e] sm:$0xff]
      %v3567 = vld [vmem:[%s287 + $0x66] sm:$0xff]
      %v3568 = vld [vmem:[%s287 + $0x6e] sm:$0xff]
      %v3569 = vld [vmem:[%s287 + $0x76] sm:$0xff]
      %v3570 = vld [vmem:[%s287 + $0x7e] sm:$0xff]
      %v3571 = vld [vmem:[%s287 + $0x86] sm:$0xff]
      %v3572 = vld [vmem:[%s287 + $0x8e] sm:$0xff]
      %v3573 = vld [vmem:[%s287 + $0x96] sm:$0xff]
      %v3574 = vld [vmem:[%s287 + $0x9e] sm:$0xff]
      %v3575 = vld [vmem:[%s287 + $0xa6] sm:$0xff]
      %v3576 = vld [vmem:[%s287 + $0xae] sm:$0xff]
      %v3577 = vld [vmem:[%s287 + $0xb6] sm:$0xff]
      %v3578 = vld [vmem:[%s287 + $0xbe] sm:$0xff]
      %v3579 = vld [vmem:[%s287 + $0xc6] sm:$0xff]
      %v3580 = vld [vmem:[%s287 + $0xce] sm:$0x3]
      %s3581 = scalar_lea.vmem %s2, 168
      %v3582 = vld [vmem:[%s3581] sm:$0xff]
      %v3584 = vsel %vm380, %v3564, 0
      %v3587 = vsel %vm380, %v3565, 0
      %v3590 = vsel %vm380, %v3566, 0
      %v3593 = vsel %vm380, %v3567, 0
      %v3596 = vsel %vm380, %v3568, 0
      %v3599 = vsel %vm380, %v3569, 0
      %v3602 = vsel %vm380, %v3570, 0
      %v3605 = vsel %vm380, %v3571, 0
      %v3608 = vsel %vm380, %v3572, 0
      %v3611 = vsel %vm380, %v3573, 0
      %v3614 = vsel %vm380, %v3574, 0
      %v3617 = vsel %vm380, %v3575, 0
      %v3620 = vsel %vm380, %v3576, 0
      %v3623 = vsel %vm380, %v3577, 0
      %v3626 = vsel %vm380, %v3578, 0
      %v3629 = vsel %vm380, %v3579, 0
      %v3632 = vsel %vm380, %v3580, 0
      %3634 = vmatpush.msra.mxu0 0.0
      %3635 = vmatpush.msra.mxu0 0.0
      %3636 = vmatpush.msra.mxu0 0.0
      %3637 = vmatpush.msra.mxu0 0.0
      %3638 = vmatpush.msra.mxu0 0.0
      %3639 = vmatpush.msra.mxu0 0.0
      %3640 = vmatpush.msra.mxu0 0.0
      %3641 = vmatpush.msra.mxu0 0.0
      %3642 = vmatpush.msra.mxu0 0.0
      %3643 = vmatpush.msra.mxu0 0.0
      %3644 = vmatpush.msra.mxu0 0.0
      %3645 = vmatpush.msra.mxu0 0.0
      %3646 = vmatpush.msra.mxu0 0.0
      %3647 = vmatpush.msra.mxu0 0.0
      %3648 = vmatpush.msra.mxu0 0.0
      %3649 = vmatpush.msra.mxu0 %v3582
      %3650 = vmatmul.f32.gmra.mxu0 %v3584
      %v3651 = vpop.f32.mrf.mxu0
      %v3652 = vadd.f32 0.0, %v3651
      %3653 = vmatmul.f32.gmra.mxu0 %v3587
      %v3654 = vpop.f32.mrf.mxu0
      %v3655 = vadd.f32 0.0, %v3654
      %3656 = vmatmul.f32.gmra.mxu0 %v3590
      %v3657 = vpop.f32.mrf.mxu0
      %v3658 = vadd.f32 0.0, %v3657
      %3659 = vmatmul.f32.gmra.mxu0 %v3593
      %v3660 = vpop.f32.mrf.mxu0
      %v3661 = vadd.f32 0.0, %v3660
      %3662 = vmatmul.f32.gmra.mxu0 %v3596
      %v3663 = vpop.f32.mrf.mxu0
      %v3664 = vadd.f32 0.0, %v3663
      %3665 = vmatmul.f32.gmra.mxu0 %v3599
      %v3666 = vpop.f32.mrf.mxu0
      %v3667 = vadd.f32 0.0, %v3666
      %3668 = vmatmul.f32.gmra.mxu0 %v3602
      %v3669 = vpop.f32.mrf.mxu0
      %v3670 = vadd.f32 0.0, %v3669
      %3671 = vmatmul.f32.gmra.mxu0 %v3605
      %v3672 = vpop.f32.mrf.mxu0
      %v3673 = vadd.f32 0.0, %v3672
      %3674 = vmatmul.f32.gmra.mxu0 %v3608
      %v3675 = vpop.f32.mrf.mxu0
      %v3676 = vadd.f32 0.0, %v3675
      %3677 = vmatmul.f32.gmra.mxu0 %v3611
      %v3678 = vpop.f32.mrf.mxu0
      %v3679 = vadd.f32 0.0, %v3678
      %3680 = vmatmul.f32.gmra.mxu0 %v3614
      %v3681 = vpop.f32.mrf.mxu0
      %v3682 = vadd.f32 0.0, %v3681
      %3683 = vmatmul.f32.gmra.mxu0 %v3617
      %v3684 = vpop.f32.mrf.mxu0
      %v3685 = vadd.f32 0.0, %v3684
      %3686 = vmatmul.f32.gmra.mxu0 %v3620
      %v3687 = vpop.f32.mrf.mxu0
      %v3688 = vadd.f32 0.0, %v3687
      %3689 = vmatmul.f32.gmra.mxu0 %v3623
      %v3690 = vpop.f32.mrf.mxu0
      %v3691 = vadd.f32 0.0, %v3690
      %3692 = vmatmul.f32.gmra.mxu0 %v3626
      %v3693 = vpop.f32.mrf.mxu0
      %v3694 = vadd.f32 0.0, %v3693
      %3695 = vmatmul.f32.gmra.mxu0 %v3629
      %v3696 = vpop.f32.mrf.mxu0
      %v3697 = vadd.f32 0.0, %v3696
      %3698 = vmatmul.f32.gmra.mxu0 %v3632
      %v3699 = vpop.f32.mrf.mxu0
      %v3700 = vadd.f32 0.0, %v3699
      %3701 = vdwg.mxu0
      %v3702 = vadd.f32 %v3547, %v3652
      %v3703 = vadd.f32 %v3548, %v3655
      %v3704 = vadd.f32 %v3549, %v3658
      %v3705 = vadd.f32 %v3550, %v3661
      %v3706 = vadd.f32 %v3551, %v3664
      %v3707 = vadd.f32 %v3552, %v3667
      %v3708 = vadd.f32 %v3553, %v3670
      %v3709 = vadd.f32 %v3554, %v3673
      %v3710 = vadd.f32 %v3555, %v3676
      %v3711 = vadd.f32 %v3556, %v3679
      %v3712 = vadd.f32 %v3557, %v3682
      %v3713 = vadd.f32 %v3558, %v3685
      %v3714 = vadd.f32 %v3559, %v3688
      %v3715 = vadd.f32 %v3560, %v3691
      %v3716 = vadd.f32 %v3561, %v3694
      %v3717 = vadd.f32 %v3562, %v3697
      %v3718 = vadd.f32 %v3563, %v3700
      %v3719 = vld [vmem:[%s287 + $0x4f] sm:$0xff]
      %v3720 = vld [vmem:[%s287 + $0x57] sm:$0xff]
      %v3721 = vld [vmem:[%s287 + $0x5f] sm:$0xff]
      %v3722 = vld [vmem:[%s287 + $0x67] sm:$0xff]
      %v3723 = vld [vmem:[%s287 + $0x6f] sm:$0xff]
      %v3724 = vld [vmem:[%s287 + $0x77] sm:$0xff]
      %v3725 = vld [vmem:[%s287 + $0x7f] sm:$0xff]
      %v3726 = vld [vmem:[%s287 + $0x87] sm:$0xff]
      %v3727 = vld [vmem:[%s287 + $0x8f] sm:$0xff]
      %v3728 = vld [vmem:[%s287 + $0x97] sm:$0xff]
      %v3729 = vld [vmem:[%s287 + $0x9f] sm:$0xff]
      %v3730 = vld [vmem:[%s287 + $0xa7] sm:$0xff]
      %v3731 = vld [vmem:[%s287 + $0xaf] sm:$0xff]
      %v3732 = vld [vmem:[%s287 + $0xb7] sm:$0xff]
      %v3733 = vld [vmem:[%s287 + $0xbf] sm:$0xff]
      %v3734 = vld [vmem:[%s287 + $0xc7] sm:$0xff]
      %v3735 = vld [vmem:[%s287 + $0xcf] sm:$0x3]
      %s3736 = scalar_lea.vmem %s2, 176
      %v3737 = vld [vmem:[%s3736] sm:$0xff]
      %v3739 = vsel %vm380, %v3719, 0
      %v3742 = vsel %vm380, %v3720, 0
      %v3745 = vsel %vm380, %v3721, 0
      %v3748 = vsel %vm380, %v3722, 0
      %v3751 = vsel %vm380, %v3723, 0
      %v3754 = vsel %vm380, %v3724, 0
      %v3757 = vsel %vm380, %v3725, 0
      %v3760 = vsel %vm380, %v3726, 0
      %v3763 = vsel %vm380, %v3727, 0
      %v3766 = vsel %vm380, %v3728, 0
      %v3769 = vsel %vm380, %v3729, 0
      %v3772 = vsel %vm380, %v3730, 0
      %v3775 = vsel %vm380, %v3731, 0
      %v3778 = vsel %vm380, %v3732, 0
      %v3781 = vsel %vm380, %v3733, 0
      %v3784 = vsel %vm380, %v3734, 0
      %v3787 = vsel %vm380, %v3735, 0
      %3789 = vmatpush.msra.mxu0 0.0
      %3790 = vmatpush.msra.mxu0 0.0
      %3791 = vmatpush.msra.mxu0 0.0
      %3792 = vmatpush.msra.mxu0 0.0
      %3793 = vmatpush.msra.mxu0 0.0
      %3794 = vmatpush.msra.mxu0 0.0
      %3795 = vmatpush.msra.mxu0 0.0
      %3796 = vmatpush.msra.mxu0 0.0
      %3797 = vmatpush.msra.mxu0 0.0
      %3798 = vmatpush.msra.mxu0 0.0
      %3799 = vmatpush.msra.mxu0 0.0
      %3800 = vmatpush.msra.mxu0 0.0
      %3801 = vmatpush.msra.mxu0 0.0
      %3802 = vmatpush.msra.mxu0 0.0
      %3803 = vmatpush.msra.mxu0 0.0
      %3804 = vmatpush.msra.mxu0 %v3737
      %3805 = vmatmul.f32.gmra.mxu0 %v3739
      %v3806 = vpop.f32.mrf.mxu0
      %v3807 = vadd.f32 0.0, %v3806
      %3808 = vmatmul.f32.gmra.mxu0 %v3742
      %v3809 = vpop.f32.mrf.mxu0
      %v3810 = vadd.f32 0.0, %v3809
      %3811 = vmatmul.f32.gmra.mxu0 %v3745
      %v3812 = vpop.f32.mrf.mxu0
      %v3813 = vadd.f32 0.0, %v3812
      %3814 = vmatmul.f32.gmra.mxu0 %v3748
      %v3815 = vpop.f32.mrf.mxu0
      %v3816 = vadd.f32 0.0, %v3815
      %3817 = vmatmul.f32.gmra.mxu0 %v3751
      %v3818 = vpop.f32.mrf.mxu0
      %v3819 = vadd.f32 0.0, %v3818
      %3820 = vmatmul.f32.gmra.mxu0 %v3754
      %v3821 = vpop.f32.mrf.mxu0
      %v3822 = vadd.f32 0.0, %v3821
      %3823 = vmatmul.f32.gmra.mxu0 %v3757
      %v3824 = vpop.f32.mrf.mxu0
      %v3825 = vadd.f32 0.0, %v3824
      %3826 = vmatmul.f32.gmra.mxu0 %v3760
      %v3827 = vpop.f32.mrf.mxu0
      %v3828 = vadd.f32 0.0, %v3827
      %3829 = vmatmul.f32.gmra.mxu0 %v3763
      %v3830 = vpop.f32.mrf.mxu0
      %v3831 = vadd.f32 0.0, %v3830
      %3832 = vmatmul.f32.gmra.mxu0 %v3766
      %v3833 = vpop.f32.mrf.mxu0
      %v3834 = vadd.f32 0.0, %v3833
      %3835 = vmatmul.f32.gmra.mxu0 %v3769
      %v3836 = vpop.f32.mrf.mxu0
      %v3837 = vadd.f32 0.0, %v3836
      %3838 = vmatmul.f32.gmra.mxu0 %v3772
      %v3839 = vpop.f32.mrf.mxu0
      %v3840 = vadd.f32 0.0, %v3839
      %3841 = vmatmul.f32.gmra.mxu0 %v3775
      %v3842 = vpop.f32.mrf.mxu0
      %v3843 = vadd.f32 0.0, %v3842
      %3844 = vmatmul.f32.gmra.mxu0 %v3778
      %v3845 = vpop.f32.mrf.mxu0
      %v3846 = vadd.f32 0.0, %v3845
      %3847 = vmatmul.f32.gmra.mxu0 %v3781
      %v3848 = vpop.f32.mrf.mxu0
      %v3849 = vadd.f32 0.0, %v3848
      %3850 = vmatmul.f32.gmra.mxu0 %v3784
      %v3851 = vpop.f32.mrf.mxu0
      %v3852 = vadd.f32 0.0, %v3851
      %3853 = vmatmul.f32.gmra.mxu0 %v3787
      %v3854 = vpop.f32.mrf.mxu0
      %v3855 = vadd.f32 0.0, %v3854
      %3856 = vdwg.mxu0
      %v3857 = vadd.f32 %v3702, %v3807
      %v3858 = vadd.f32 %v3703, %v3810
      %v3859 = vadd.f32 %v3704, %v3813
      %v3860 = vadd.f32 %v3705, %v3816
      %v3861 = vadd.f32 %v3706, %v3819
      %v3862 = vadd.f32 %v3707, %v3822
      %v3863 = vadd.f32 %v3708, %v3825
      %v3864 = vadd.f32 %v3709, %v3828
      %v3865 = vadd.f32 %v3710, %v3831
      %v3866 = vadd.f32 %v3711, %v3834
      %v3867 = vadd.f32 %v3712, %v3837
      %v3868 = vadd.f32 %v3713, %v3840
      %v3869 = vadd.f32 %v3714, %v3843
      %v3870 = vadd.f32 %v3715, %v3846
      %v3871 = vadd.f32 %v3716, %v3849
      %v3872 = vadd.f32 %v3717, %v3852
      %v3873 = vadd.f32 %v3718, %v3855
      %v3874 = vld [vmem:[%s287 + $0x50] sm:$0xff]
      %v3875 = vld [vmem:[%s287 + $0x58] sm:$0xff]
      %v3876 = vld [vmem:[%s287 + $0x60] sm:$0xff]
      %v3877 = vld [vmem:[%s287 + $0x68] sm:$0xff]
      %v3878 = vld [vmem:[%s287 + $0x70] sm:$0xff]
      %v3879 = vld [vmem:[%s287 + $0x78] sm:$0xff]
      %v3880 = vld [vmem:[%s287 + $0x80] sm:$0xff]
      %v3881 = vld [vmem:[%s287 + $0x88] sm:$0xff]
      %v3882 = vld [vmem:[%s287 + $0x90] sm:$0xff]
      %v3883 = vld [vmem:[%s287 + $0x98] sm:$0xff]
      %v3884 = vld [vmem:[%s287 + $0xa0] sm:$0xff]
      %v3885 = vld [vmem:[%s287 + $0xa8] sm:$0xff]
      %v3886 = vld [vmem:[%s287 + $0xb0] sm:$0xff]
      %v3887 = vld [vmem:[%s287 + $0xb8] sm:$0xff]
      %v3888 = vld [vmem:[%s287 + $0xc0] sm:$0xff]
      %v3889 = vld [vmem:[%s287 + $0xc8] sm:$0xff]
      %v3890 = vld [vmem:[%s287 + $0xd0] sm:$0x3]
      %s3891 = scalar_lea.vmem %s2, 184
      %v3892 = vld [vmem:[%s3891] sm:$0xff]
      %v3894 = vsel %vm380, %v3874, 0
      %v3897 = vsel %vm380, %v3875, 0
      %v3900 = vsel %vm380, %v3876, 0
      %v3903 = vsel %vm380, %v3877, 0
      %v3906 = vsel %vm380, %v3878, 0
      %v3909 = vsel %vm380, %v3879, 0
      %v3912 = vsel %vm380, %v3880, 0
      %v3915 = vsel %vm380, %v3881, 0
      %v3918 = vsel %vm380, %v3882, 0
      %v3921 = vsel %vm380, %v3883, 0
      %v3924 = vsel %vm380, %v3884, 0
      %v3927 = vsel %vm380, %v3885, 0
      %v3930 = vsel %vm380, %v3886, 0
      %v3933 = vsel %vm380, %v3887, 0
      %v3936 = vsel %vm380, %v3888, 0
      %v3939 = vsel %vm380, %v3889, 0
      %v3942 = vsel %vm380, %v3890, 0
      %3944 = vmatpush.msra.mxu0 0.0
      %3945 = vmatpush.msra.mxu0 0.0
      %3946 = vmatpush.msra.mxu0 0.0
      %3947 = vmatpush.msra.mxu0 0.0
      %3948 = vmatpush.msra.mxu0 0.0
      %3949 = vmatpush.msra.mxu0 0.0
      %3950 = vmatpush.msra.mxu0 0.0
      %3951 = vmatpush.msra.mxu0 0.0
      %3952 = vmatpush.msra.mxu0 0.0
      %3953 = vmatpush.msra.mxu0 0.0
      %3954 = vmatpush.msra.mxu0 0.0
      %3955 = vmatpush.msra.mxu0 0.0
      %3956 = vmatpush.msra.mxu0 0.0
      %3957 = vmatpush.msra.mxu0 0.0
      %3958 = vmatpush.msra.mxu0 0.0
      %3959 = vmatpush.msra.mxu0 %v3892
      %3960 = vmatmul.f32.gmra.mxu0 %v3894
      %v3961 = vpop.f32.mrf.mxu0
      %v3962 = vadd.f32 0.0, %v3961
      %3963 = vmatmul.f32.gmra.mxu0 %v3897
      %v3964 = vpop.f32.mrf.mxu0
      %v3965 = vadd.f32 0.0, %v3964
      %3966 = vmatmul.f32.gmra.mxu0 %v3900
      %v3967 = vpop.f32.mrf.mxu0
      %v3968 = vadd.f32 0.0, %v3967
      %3969 = vmatmul.f32.gmra.mxu0 %v3903
      %v3970 = vpop.f32.mrf.mxu0
      %v3971 = vadd.f32 0.0, %v3970
      %3972 = vmatmul.f32.gmra.mxu0 %v3906
      %v3973 = vpop.f32.mrf.mxu0
      %v3974 = vadd.f32 0.0, %v3973
      %3975 = vmatmul.f32.gmra.mxu0 %v3909
      %v3976 = vpop.f32.mrf.mxu0
      %v3977 = vadd.f32 0.0, %v3976
      %3978 = vmatmul.f32.gmra.mxu0 %v3912
      %v3979 = vpop.f32.mrf.mxu0
      %v3980 = vadd.f32 0.0, %v3979
      %3981 = vmatmul.f32.gmra.mxu0 %v3915
      %v3982 = vpop.f32.mrf.mxu0
      %v3983 = vadd.f32 0.0, %v3982
      %3984 = vmatmul.f32.gmra.mxu0 %v3918
      %v3985 = vpop.f32.mrf.mxu0
      %v3986 = vadd.f32 0.0, %v3985
      %3987 = vmatmul.f32.gmra.mxu0 %v3921
      %v3988 = vpop.f32.mrf.mxu0
      %v3989 = vadd.f32 0.0, %v3988
      %3990 = vmatmul.f32.gmra.mxu0 %v3924
      %v3991 = vpop.f32.mrf.mxu0
      %v3992 = vadd.f32 0.0, %v3991
      %3993 = vmatmul.f32.gmra.mxu0 %v3927
      %v3994 = vpop.f32.mrf.mxu0
      %v3995 = vadd.f32 0.0, %v3994
      %3996 = vmatmul.f32.gmra.mxu0 %v3930
      %v3997 = vpop.f32.mrf.mxu0
      %v3998 = vadd.f32 0.0, %v3997
      %3999 = vmatmul.f32.gmra.mxu0 %v3933
      %v4000 = vpop.f32.mrf.mxu0
      %v4001 = vadd.f32 0.0, %v4000
      %4002 = vmatmul.f32.gmra.mxu0 %v3936
      %v4003 = vpop.f32.mrf.mxu0
      %v4004 = vadd.f32 0.0, %v4003
      %4005 = vmatmul.f32.gmra.mxu0 %v3939
      %v4006 = vpop.f32.mrf.mxu0
      %v4007 = vadd.f32 0.0, %v4006
      %4008 = vmatmul.f32.gmra.mxu0 %v3942
      %v4009 = vpop.f32.mrf.mxu0
      %v4010 = vadd.f32 0.0, %v4009
      %4011 = vdwg.mxu0
      %v4012 = vadd.f32 %v3857, %v3962
      %v4013 = vadd.f32 %v3858, %v3965
      %v4014 = vadd.f32 %v3859, %v3968
      %v4015 = vadd.f32 %v3860, %v3971
      %v4016 = vadd.f32 %v3861, %v3974
      %v4017 = vadd.f32 %v3862, %v3977
      %v4018 = vadd.f32 %v3863, %v3980
      %v4019 = vadd.f32 %v3864, %v3983
      %v4020 = vadd.f32 %v3865, %v3986
      %v4021 = vadd.f32 %v3866, %v3989
      %v4022 = vadd.f32 %v3867, %v3992
      %v4023 = vadd.f32 %v3868, %v3995
      %v4024 = vadd.f32 %v3869, %v3998
      %v4025 = vadd.f32 %v3870, %v4001
      %v4026 = vadd.f32 %v3871, %v4004
      %v4027 = vadd.f32 %v3872, %v4007
      %v4028 = vadd.f32 %v3873, %v4010
      %v4029 = vld [vmem:[%s287 + $0x54] sm:$0xff]
      %v4030 = vld [vmem:[%s287 + $0x5c] sm:$0xff]
      %v4031 = vld [vmem:[%s287 + $0x64] sm:$0xff]
      %v4032 = vld [vmem:[%s287 + $0x6c] sm:$0xff]
      %v4033 = vld [vmem:[%s287 + $0x74] sm:$0xff]
      %v4034 = vld [vmem:[%s287 + $0x7c] sm:$0xff]
      %v4035 = vld [vmem:[%s287 + $0x84] sm:$0xff]
      %v4036 = vld [vmem:[%s287 + $0x8c] sm:$0xff]
      %v4037 = vld [vmem:[%s287 + $0x94] sm:$0xff]
      %v4038 = vld [vmem:[%s287 + $0x9c] sm:$0xff]
      %v4039 = vld [vmem:[%s287 + $0xa4] sm:$0xff]
      %v4040 = vld [vmem:[%s287 + $0xac] sm:$0xff]
      %v4041 = vld [vmem:[%s287 + $0xb4] sm:$0xff]
      %v4042 = vld [vmem:[%s287 + $0xbc] sm:$0xff]
      %v4043 = vld [vmem:[%s287 + $0xc4] sm:$0xff]
      %v4044 = vld [vmem:[%s287 + $0xcc] sm:$0xff]
      %v4045 = vld [vmem:[%s287 + $0xd4] sm:$0x3]
      %s4046 = scalar_lea.vmem %s2, 192
      %v4047 = vld [vmem:[%s4046] sm:$0xff]
      %v4049 = vsel %vm380, %v4029, 0
      %v4052 = vsel %vm380, %v4030, 0
      %v4055 = vsel %vm380, %v4031, 0
      %v4058 = vsel %vm380, %v4032, 0
      %v4061 = vsel %vm380, %v4033, 0
      %v4064 = vsel %vm380, %v4034, 0
      %v4067 = vsel %vm380, %v4035, 0
      %v4070 = vsel %vm380, %v4036, 0
      %v4073 = vsel %vm380, %v4037, 0
      %v4076 = vsel %vm380, %v4038, 0
      %v4079 = vsel %vm380, %v4039, 0
      %v4082 = vsel %vm380, %v4040, 0
      %v4085 = vsel %vm380, %v4041, 0
      %v4088 = vsel %vm380, %v4042, 0
      %v4091 = vsel %vm380, %v4043, 0
      %v4094 = vsel %vm380, %v4044, 0
      %v4097 = vsel %vm380, %v4045, 0
      %4099 = vmatpush.msra.mxu0 0.0
      %4100 = vmatpush.msra.mxu0 0.0
      %4101 = vmatpush.msra.mxu0 0.0
      %4102 = vmatpush.msra.mxu0 0.0
      %4103 = vmatpush.msra.mxu0 0.0
      %4104 = vmatpush.msra.mxu0 0.0
      %4105 = vmatpush.msra.mxu0 0.0
      %4106 = vmatpush.msra.mxu0 0.0
      %4107 = vmatpush.msra.mxu0 0.0
      %4108 = vmatpush.msra.mxu0 0.0
      %4109 = vmatpush.msra.mxu0 0.0
      %4110 = vmatpush.msra.mxu0 0.0
      %4111 = vmatpush.msra.mxu0 0.0
      %4112 = vmatpush.msra.mxu0 0.0
      %4113 = vmatpush.msra.mxu0 0.0
      %4114 = vmatpush.msra.mxu0 %v4047
      %4115 = vmatmul.f32.gmra.mxu0 %v4049
      %v4116 = vpop.f32.mrf.mxu0
      %v4117 = vadd.f32 0.0, %v4116
      %4118 = vmatmul.f32.gmra.mxu0 %v4052
      %v4119 = vpop.f32.mrf.mxu0
      %v4120 = vadd.f32 0.0, %v4119
      %4121 = vmatmul.f32.gmra.mxu0 %v4055
      %v4122 = vpop.f32.mrf.mxu0
      %v4123 = vadd.f32 0.0, %v4122
      %4124 = vmatmul.f32.gmra.mxu0 %v4058
      %v4125 = vpop.f32.mrf.mxu0
      %v4126 = vadd.f32 0.0, %v4125
      %4127 = vmatmul.f32.gmra.mxu0 %v4061
      %v4128 = vpop.f32.mrf.mxu0
      %v4129 = vadd.f32 0.0, %v4128
      %4130 = vmatmul.f32.gmra.mxu0 %v4064
      %v4131 = vpop.f32.mrf.mxu0
      %v4132 = vadd.f32 0.0, %v4131
      %4133 = vmatmul.f32.gmra.mxu0 %v4067
      %v4134 = vpop.f32.mrf.mxu0
      %v4135 = vadd.f32 0.0, %v4134
      %4136 = vmatmul.f32.gmra.mxu0 %v4070
      %v4137 = vpop.f32.mrf.mxu0
      %v4138 = vadd.f32 0.0, %v4137
      %4139 = vmatmul.f32.gmra.mxu0 %v4073
      %v4140 = vpop.f32.mrf.mxu0
      %v4141 = vadd.f32 0.0, %v4140
      %4142 = vmatmul.f32.gmra.mxu0 %v4076
      %v4143 = vpop.f32.mrf.mxu0
      %v4144 = vadd.f32 0.0, %v4143
      %4145 = vmatmul.f32.gmra.mxu0 %v4079
      %v4146 = vpop.f32.mrf.mxu0
      %v4147 = vadd.f32 0.0, %v4146
      %4148 = vmatmul.f32.gmra.mxu0 %v4082
      %v4149 = vpop.f32.mrf.mxu0
      %v4150 = vadd.f32 0.0, %v4149
      %4151 = vmatmul.f32.gmra.mxu0 %v4085
      %v4152 = vpop.f32.mrf.mxu0
      %v4153 = vadd.f32 0.0, %v4152
      %4154 = vmatmul.f32.gmra.mxu0 %v4088
      %v4155 = vpop.f32.mrf.mxu0
      %v4156 = vadd.f32 0.0, %v4155
      %4157 = vmatmul.f32.gmra.mxu0 %v4091
      %v4158 = vpop.f32.mrf.mxu0
      %v4159 = vadd.f32 0.0, %v4158
      %4160 = vmatmul.f32.gmra.mxu0 %v4094
      %v4161 = vpop.f32.mrf.mxu0
      %v4162 = vadd.f32 0.0, %v4161
      %4163 = vmatmul.f32.gmra.mxu0 %v4097
      %v4164 = vpop.f32.mrf.mxu0
      %v4165 = vadd.f32 0.0, %v4164
      %4166 = vdwg.mxu0
      %v4167 = vadd.f32 %v4012, %v4117
      %v4168 = vadd.f32 %v4013, %v4120
      %v4169 = vadd.f32 %v4014, %v4123
      %v4170 = vadd.f32 %v4015, %v4126
      %v4171 = vadd.f32 %v4016, %v4129
      %v4172 = vadd.f32 %v4017, %v4132
      %v4173 = vadd.f32 %v4018, %v4135
      %v4174 = vadd.f32 %v4019, %v4138
      %v4175 = vadd.f32 %v4020, %v4141
      %v4176 = vadd.f32 %v4021, %v4144
      %v4177 = vadd.f32 %v4022, %v4147
      %v4178 = vadd.f32 %v4023, %v4150
      %v4179 = vadd.f32 %v4024, %v4153
      %v4180 = vadd.f32 %v4025, %v4156
      %v4181 = vadd.f32 %v4026, %v4159
      %v4182 = vadd.f32 %v4027, %v4162
      %v4183 = vadd.f32 %v4028, %v4165
      %v4184 = vld [vmem:[%s287 + $0x55] sm:$0xff]
      %v4185 = vld [vmem:[%s287 + $0x5d] sm:$0xff]
      %v4186 = vld [vmem:[%s287 + $0x65] sm:$0xff]
      %v4187 = vld [vmem:[%s287 + $0x6d] sm:$0xff]
      %v4188 = vld [vmem:[%s287 + $0x75] sm:$0xff]
      %v4189 = vld [vmem:[%s287 + $0x7d] sm:$0xff]
      %v4190 = vld [vmem:[%s287 + $0x85] sm:$0xff]
      %v4191 = vld [vmem:[%s287 + $0x8d] sm:$0xff]
      %v4192 = vld [vmem:[%s287 + $0x95] sm:$0xff]
      %v4193 = vld [vmem:[%s287 + $0x9d] sm:$0xff]
      %v4194 = vld [vmem:[%s287 + $0xa5] sm:$0xff]
      %v4195 = vld [vmem:[%s287 + $0xad] sm:$0xff]
      %v4196 = vld [vmem:[%s287 + $0xb5] sm:$0xff]
      %v4197 = vld [vmem:[%s287 + $0xbd] sm:$0xff]
      %v4198 = vld [vmem:[%s287 + $0xc5] sm:$0xff]
      %v4199 = vld [vmem:[%s287 + $0xcd] sm:$0xff]
      %v4200 = vld [vmem:[%s287 + $0xd5] sm:$0x3]
      %s4201 = scalar_lea.vmem %s2, 200
      %v4202 = vld [vmem:[%s4201] sm:$0xff]
      %v4204 = vsel %vm380, %v4184, 0
      %v4207 = vsel %vm380, %v4185, 0
      %v4210 = vsel %vm380, %v4186, 0
      %v4213 = vsel %vm380, %v4187, 0
      %v4216 = vsel %vm380, %v4188, 0
      %v4219 = vsel %vm380, %v4189, 0
      %v4222 = vsel %vm380, %v4190, 0
      %v4225 = vsel %vm380, %v4191, 0
      %v4228 = vsel %vm380, %v4192, 0
      %v4231 = vsel %vm380, %v4193, 0
      %v4234 = vsel %vm380, %v4194, 0
      %v4237 = vsel %vm380, %v4195, 0
      %v4240 = vsel %vm380, %v4196, 0
      %v4243 = vsel %vm380, %v4197, 0
      %v4246 = vsel %vm380, %v4198, 0
      %v4249 = vsel %vm380, %v4199, 0
      %v4252 = vsel %vm380, %v4200, 0
      %4254 = vmatpush.msra.mxu0 0.0
      %4255 = vmatpush.msra.mxu0 0.0
      %4256 = vmatpush.msra.mxu0 0.0
      %4257 = vmatpush.msra.mxu0 0.0
      %4258 = vmatpush.msra.mxu0 0.0
      %4259 = vmatpush.msra.mxu0 0.0
      %4260 = vmatpush.msra.mxu0 0.0
      %4261 = vmatpush.msra.mxu0 0.0
      %4262 = vmatpush.msra.mxu0 0.0
      %4263 = vmatpush.msra.mxu0 0.0
      %4264 = vmatpush.msra.mxu0 0.0
      %4265 = vmatpush.msra.mxu0 0.0
      %4266 = vmatpush.msra.mxu0 0.0
      %4267 = vmatpush.msra.mxu0 0.0
      %4268 = vmatpush.msra.mxu0 0.0
      %4269 = vmatpush.msra.mxu0 %v4202
      %4270 = vmatmul.f32.gmra.mxu0 %v4204
      %v4271 = vpop.f32.mrf.mxu0
      %v4272 = vadd.f32 0.0, %v4271
      %4273 = vmatmul.f32.gmra.mxu0 %v4207
      %v4274 = vpop.f32.mrf.mxu0
      %v4275 = vadd.f32 0.0, %v4274
      %4276 = vmatmul.f32.gmra.mxu0 %v4210
      %v4277 = vpop.f32.mrf.mxu0
      %v4278 = vadd.f32 0.0, %v4277
      %4279 = vmatmul.f32.gmra.mxu0 %v4213
      %v4280 = vpop.f32.mrf.mxu0
      %v4281 = vadd.f32 0.0, %v4280
      %4282 = vmatmul.f32.gmra.mxu0 %v4216
      %v4283 = vpop.f32.mrf.mxu0
      %v4284 = vadd.f32 0.0, %v4283
      %4285 = vmatmul.f32.gmra.mxu0 %v4219
      %v4286 = vpop.f32.mrf.mxu0
      %v4287 = vadd.f32 0.0, %v4286
      %4288 = vmatmul.f32.gmra.mxu0 %v4222
      %v4289 = vpop.f32.mrf.mxu0
      %v4290 = vadd.f32 0.0, %v4289
      %4291 = vmatmul.f32.gmra.mxu0 %v4225
      %v4292 = vpop.f32.mrf.mxu0
      %v4293 = vadd.f32 0.0, %v4292
      %4294 = vmatmul.f32.gmra.mxu0 %v4228
      %v4295 = vpop.f32.mrf.mxu0
      %v4296 = vadd.f32 0.0, %v4295
      %4297 = vmatmul.f32.gmra.mxu0 %v4231
      %v4298 = vpop.f32.mrf.mxu0
      %v4299 = vadd.f32 0.0, %v4298
      %4300 = vmatmul.f32.gmra.mxu0 %v4234
      %v4301 = vpop.f32.mrf.mxu0
      %v4302 = vadd.f32 0.0, %v4301
      %4303 = vmatmul.f32.gmra.mxu0 %v4237
      %v4304 = vpop.f32.mrf.mxu0
      %v4305 = vadd.f32 0.0, %v4304
      %4306 = vmatmul.f32.gmra.mxu0 %v4240
      %v4307 = vpop.f32.mrf.mxu0
      %v4308 = vadd.f32 0.0, %v4307
      %4309 = vmatmul.f32.gmra.mxu0 %v4243
      %v4310 = vpop.f32.mrf.mxu0
      %v4311 = vadd.f32 0.0, %v4310
      %4312 = vmatmul.f32.gmra.mxu0 %v4246
      %v4313 = vpop.f32.mrf.mxu0
      %v4314 = vadd.f32 0.0, %v4313
      %4315 = vmatmul.f32.gmra.mxu0 %v4249
      %v4316 = vpop.f32.mrf.mxu0
      %v4317 = vadd.f32 0.0, %v4316
      %4318 = vmatmul.f32.gmra.mxu0 %v4252
      %v4319 = vpop.f32.mrf.mxu0
      %v4320 = vadd.f32 0.0, %v4319
      %4321 = vdwg.mxu0
      %v4322 = vadd.f32 %v4167, %v4272
      %v4323 = vadd.f32 %v4168, %v4275
      %v4324 = vadd.f32 %v4169, %v4278
      %v4325 = vadd.f32 %v4170, %v4281
      %v4326 = vadd.f32 %v4171, %v4284
      %v4327 = vadd.f32 %v4172, %v4287
      %v4328 = vadd.f32 %v4173, %v4290
      %v4329 = vadd.f32 %v4174, %v4293
      %v4330 = vadd.f32 %v4175, %v4296
      %v4331 = vadd.f32 %v4176, %v4299
      %v4332 = vadd.f32 %v4177, %v4302
      %v4333 = vadd.f32 %v4178, %v4305
      %v4334 = vadd.f32 %v4179, %v4308
      %v4335 = vadd.f32 %v4180, %v4311
      %v4336 = vadd.f32 %v4181, %v4314
      %v4337 = vadd.f32 %v4182, %v4317
      %v4338 = vadd.f32 %v4183, %v4320
      %v4339 = vld [vmem:[%s287 + $0x56] sm:$0xff]
      %v4340 = vld [vmem:[%s287 + $0x5e] sm:$0xff]
      %v4341 = vld [vmem:[%s287 + $0x66] sm:$0xff]
      %v4342 = vld [vmem:[%s287 + $0x6e] sm:$0xff]
      %v4343 = vld [vmem:[%s287 + $0x76] sm:$0xff]
      %v4344 = vld [vmem:[%s287 + $0x7e] sm:$0xff]
      %v4345 = vld [vmem:[%s287 + $0x86] sm:$0xff]
      %v4346 = vld [vmem:[%s287 + $0x8e] sm:$0xff]
      %v4347 = vld [vmem:[%s287 + $0x96] sm:$0xff]
      %v4348 = vld [vmem:[%s287 + $0x9e] sm:$0xff]
      %v4349 = vld [vmem:[%s287 + $0xa6] sm:$0xff]
      %v4350 = vld [vmem:[%s287 + $0xae] sm:$0xff]
      %v4351 = vld [vmem:[%s287 + $0xb6] sm:$0xff]
      %v4352 = vld [vmem:[%s287 + $0xbe] sm:$0xff]
      %v4353 = vld [vmem:[%s287 + $0xc6] sm:$0xff]
      %v4354 = vld [vmem:[%s287 + $0xce] sm:$0xff]
      %v4355 = vld [vmem:[%s287 + $0xd6] sm:$0x3]
      %s4356 = scalar_lea.vmem %s2, 208
      %v4357 = vld [vmem:[%s4356] sm:$0xff]
      %v4359 = vsel %vm380, %v4339, 0
      %v4362 = vsel %vm380, %v4340, 0
      %v4365 = vsel %vm380, %v4341, 0
      %v4368 = vsel %vm380, %v4342, 0
      %v4371 = vsel %vm380, %v4343, 0
      %v4374 = vsel %vm380, %v4344, 0
      %v4377 = vsel %vm380, %v4345, 0
      %v4380 = vsel %vm380, %v4346, 0
      %v4383 = vsel %vm380, %v4347, 0
      %v4386 = vsel %vm380, %v4348, 0
      %v4389 = vsel %vm380, %v4349, 0
      %v4392 = vsel %vm380, %v4350, 0
      %v4395 = vsel %vm380, %v4351, 0
      %v4398 = vsel %vm380, %v4352, 0
      %v4401 = vsel %vm380, %v4353, 0
      %v4404 = vsel %vm380, %v4354, 0
      %v4407 = vsel %vm380, %v4355, 0
      %4409 = vmatpush.msra.mxu0 0.0
      %4410 = vmatpush.msra.mxu0 0.0
      %4411 = vmatpush.msra.mxu0 0.0
      %4412 = vmatpush.msra.mxu0 0.0
      %4413 = vmatpush.msra.mxu0 0.0
      %4414 = vmatpush.msra.mxu0 0.0
      %4415 = vmatpush.msra.mxu0 0.0
      %4416 = vmatpush.msra.mxu0 0.0
      %4417 = vmatpush.msra.mxu0 0.0
      %4418 = vmatpush.msra.mxu0 0.0
      %4419 = vmatpush.msra.mxu0 0.0
      %4420 = vmatpush.msra.mxu0 0.0
      %4421 = vmatpush.msra.mxu0 0.0
      %4422 = vmatpush.msra.mxu0 0.0
      %4423 = vmatpush.msra.mxu0 0.0
      %4424 = vmatpush.msra.mxu0 %v4357
      %4425 = vmatmul.f32.gmra.mxu0 %v4359
      %v4426 = vpop.f32.mrf.mxu0
      %v4427 = vadd.f32 0.0, %v4426
      %4428 = vmatmul.f32.gmra.mxu0 %v4362
      %v4429 = vpop.f32.mrf.mxu0
      %v4430 = vadd.f32 0.0, %v4429
      %4431 = vmatmul.f32.gmra.mxu0 %v4365
      %v4432 = vpop.f32.mrf.mxu0
      %v4433 = vadd.f32 0.0, %v4432
      %4434 = vmatmul.f32.gmra.mxu0 %v4368
      %v4435 = vpop.f32.mrf.mxu0
      %v4436 = vadd.f32 0.0, %v4435
      %4437 = vmatmul.f32.gmra.mxu0 %v4371
      %v4438 = vpop.f32.mrf.mxu0
      %v4439 = vadd.f32 0.0, %v4438
      %4440 = vmatmul.f32.gmra.mxu0 %v4374
      %v4441 = vpop.f32.mrf.mxu0
      %v4442 = vadd.f32 0.0, %v4441
      %4443 = vmatmul.f32.gmra.mxu0 %v4377
      %v4444 = vpop.f32.mrf.mxu0
      %v4445 = vadd.f32 0.0, %v4444
      %4446 = vmatmul.f32.gmra.mxu0 %v4380
      %v4447 = vpop.f32.mrf.mxu0
      %v4448 = vadd.f32 0.0, %v4447
      %4449 = vmatmul.f32.gmra.mxu0 %v4383
      %v4450 = vpop.f32.mrf.mxu0
      %v4451 = vadd.f32 0.0, %v4450
      %4452 = vmatmul.f32.gmra.mxu0 %v4386
      %v4453 = vpop.f32.mrf.mxu0
      %v4454 = vadd.f32 0.0, %v4453
      %4455 = vmatmul.f32.gmra.mxu0 %v4389
      %v4456 = vpop.f32.mrf.mxu0
      %v4457 = vadd.f32 0.0, %v4456
      %4458 = vmatmul.f32.gmra.mxu0 %v4392
      %v4459 = vpop.f32.mrf.mxu0
      %v4460 = vadd.f32 0.0, %v4459
      %4461 = vmatmul.f32.gmra.mxu0 %v4395
      %v4462 = vpop.f32.mrf.mxu0
      %v4463 = vadd.f32 0.0, %v4462
      %4464 = vmatmul.f32.gmra.mxu0 %v4398
      %v4465 = vpop.f32.mrf.mxu0
      %v4466 = vadd.f32 0.0, %v4465
      %4467 = vmatmul.f32.gmra.mxu0 %v4401
      %v4468 = vpop.f32.mrf.mxu0
      %v4469 = vadd.f32 0.0, %v4468
      %4470 = vmatmul.f32.gmra.mxu0 %v4404
      %v4471 = vpop.f32.mrf.mxu0
      %v4472 = vadd.f32 0.0, %v4471
      %4473 = vmatmul.f32.gmra.mxu0 %v4407
      %v4474 = vpop.f32.mrf.mxu0
      %v4475 = vadd.f32 0.0, %v4474
      %4476 = vdwg.mxu0
      %v4477 = vadd.f32 %v4322, %v4427
      %v4478 = vadd.f32 %v4323, %v4430
      %v4479 = vadd.f32 %v4324, %v4433
      %v4480 = vadd.f32 %v4325, %v4436
      %v4481 = vadd.f32 %v4326, %v4439
      %v4482 = vadd.f32 %v4327, %v4442
      %v4483 = vadd.f32 %v4328, %v4445
      %v4484 = vadd.f32 %v4329, %v4448
      %v4485 = vadd.f32 %v4330, %v4451
      %v4486 = vadd.f32 %v4331, %v4454
      %v4487 = vadd.f32 %v4332, %v4457
      %v4488 = vadd.f32 %v4333, %v4460
      %v4489 = vadd.f32 %v4334, %v4463
      %v4490 = vadd.f32 %v4335, %v4466
      %v4491 = vadd.f32 %v4336, %v4469
      %v4492 = vadd.f32 %v4337, %v4472
      %v4493 = vadd.f32 %v4338, %v4475
      %v4494 = vld [vmem:[%s3] sm:$0x1]
      %v4496 = vperm.slane %v4494, 0
      %v4498 = vadd.f32 %v4477, %v4496
      %v4499 = vadd.f32 %v4478, %v4496
      %v4500 = vadd.f32 %v4479, %v4496
      %v4501 = vadd.f32 %v4480, %v4496
      %v4502 = vadd.f32 %v4481, %v4496
      %v4503 = vadd.f32 %v4482, %v4496
      %v4504 = vadd.f32 %v4483, %v4496
      %v4505 = vadd.f32 %v4484, %v4496
      %v4506 = vadd.f32 %v4485, %v4496
      %v4507 = vadd.f32 %v4486, %v4496
      %v4508 = vadd.f32 %v4487, %v4496
      %v4509 = vadd.f32 %v4488, %v4496
      %v4510 = vadd.f32 %v4489, %v4496
      %v4511 = vadd.f32 %v4490, %v4496
      %v4512 = vadd.f32 %v4491, %v4496
      %v4513 = vadd.f32 %v4492, %v4496
      %v4514 = vadd.f32 %v4493, %v4496
      %v4515 = vld [vmem:[%s6] sm:$0x1]
      %v4516 = vmul.f32 %v4498, %v4498
      %v4517 = vmul.f32 %v4499, %v4499
      %v4518 = vmul.f32 %v4500, %v4500
      %v4519 = vmul.f32 %v4501, %v4501
      %v4520 = vmul.f32 %v4502, %v4502
      %v4521 = vmul.f32 %v4503, %v4503
      %v4522 = vmul.f32 %v4504, %v4504
      %v4523 = vmul.f32 %v4505, %v4505
      %v4524 = vmul.f32 %v4506, %v4506
      %v4525 = vmul.f32 %v4507, %v4507
      %v4526 = vmul.f32 %v4508, %v4508
      %v4527 = vmul.f32 %v4509, %v4509
      %v4528 = vmul.f32 %v4510, %v4510
      %v4529 = vmul.f32 %v4511, %v4511
      %v4530 = vmul.f32 %v4512, %v4512
      %v4531 = vmul.f32 %v4513, %v4513
      %v4532 = vmul.f32 %v4514, %v4514
      %vm4533 = vcmask 130048
      %v4534 = vsel %vm4533, %v4516, 0.0
      %4535 = vadd.xlane.f32.xlu0 %v4534
      %v4536 = vpop.xlane.xlu0 %4535
      %v4537 = vsel %vm4533, %v4517, 0.0
      %4538 = vadd.xlane.f32.xlu0 %v4537
      %v4539 = vpop.xlane.xlu0 %4538
      %v4540 = vsel %vm4533, %v4518, 0.0
      %4541 = vadd.xlane.f32.xlu0 %v4540
      %v4542 = vpop.xlane.xlu0 %4541
      %v4543 = vsel %vm4533, %v4519, 0.0
      %4544 = vadd.xlane.f32.xlu0 %v4543
      %v4545 = vpop.xlane.xlu0 %4544
      %v4546 = vsel %vm4533, %v4520, 0.0
      %4547 = vadd.xlane.f32.xlu0 %v4546
      %v4548 = vpop.xlane.xlu0 %4547
      %v4549 = vsel %vm4533, %v4521, 0.0
      %4550 = vadd.xlane.f32.xlu0 %v4549
      %v4551 = vpop.xlane.xlu0 %4550
      %v4552 = vsel %vm4533, %v4522, 0.0
      %4553 = vadd.xlane.f32.xlu0 %v4552
      %v4554 = vpop.xlane.xlu0 %4553
      %v4555 = vsel %vm4533, %v4523, 0.0
      %4556 = vadd.xlane.f32.xlu0 %v4555
      %v4557 = vpop.xlane.xlu0 %4556
      %v4558 = vsel %vm4533, %v4524, 0.0
      %4559 = vadd.xlane.f32.xlu0 %v4558
      %v4560 = vpop.xlane.xlu0 %4559
      %v4561 = vsel %vm4533, %v4525, 0.0
      %4562 = vadd.xlane.f32.xlu0 %v4561
      %v4563 = vpop.xlane.xlu0 %4562
      %v4564 = vsel %vm4533, %v4526, 0.0
      %4565 = vadd.xlane.f32.xlu0 %v4564
      %v4566 = vpop.xlane.xlu0 %4565
      %v4567 = vsel %vm4533, %v4527, 0.0
      %4568 = vadd.xlane.f32.xlu0 %v4567
      %v4569 = vpop.xlane.xlu0 %4568
      %v4570 = vsel %vm4533, %v4528, 0.0
      %4571 = vadd.xlane.f32.xlu0 %v4570
      %v4572 = vpop.xlane.xlu0 %4571
      %v4573 = vsel %vm4533, %v4529, 0.0
      %4574 = vadd.xlane.f32.xlu0 %v4573
      %v4575 = vpop.xlane.xlu0 %4574
      %v4576 = vsel %vm4533, %v4530, 0.0
      %4577 = vadd.xlane.f32.xlu0 %v4576
      %v4578 = vpop.xlane.xlu0 %4577
      %v4579 = vsel %vm4533, %v4531, 0.0
      %4580 = vadd.xlane.f32.xlu0 %v4579
      %v4581 = vpop.xlane.xlu0 %4580
      %vm4582 = vcmask 123904
      %v4583 = vsel %vm4582, %v4532, 0.0
      %4584 = vadd.xlane.f32.xlu0 %v4583
      %v4585 = vpop.xlane.xlu0 %4584
      %v4586 = vrsqrt.pop %v4536
      %v4587 = vmul.f32 %v4586, %v4536
      %v4588 = vmul.f32 %v4587, %v4586
      %v4589 = vmul.f32 0.5, %v4588
      %v4590 = vsub.f32 1.5, %v4589
      %v4591 = vmul.f32 %v4586, %v4590
      %v4592 = vmul.f32 %v4536, %v4591
      %vm4593 = vcmp.eq.f32.partialorder %v4536, inf
      %v4594 = vsel %vm4593, %v4536, %v4592
      %vm4595 = vcmp.eq.f32.partialorder %v4536, 0.0
      %v4596 = vand.u32 %v4536, 2147483648
      %v4597 = vsel %vm4595, %v4596, %v4594
      %v4598 = vrsqrt.pop %v4539
      %v4599 = vmul.f32 %v4598, %v4539
      %v4600 = vmul.f32 %v4599, %v4598
      %v4601 = vmul.f32 0.5, %v4600
      %v4602 = vsub.f32 1.5, %v4601
      %v4603 = vmul.f32 %v4598, %v4602
      %v4604 = vmul.f32 %v4539, %v4603
      %vm4605 = vcmp.eq.f32.partialorder %v4539, inf
      %v4606 = vsel %vm4605, %v4539, %v4604
      %vm4607 = vcmp.eq.f32.partialorder %v4539, 0.0
      %v4608 = vand.u32 %v4539, 2147483648
      %v4609 = vsel %vm4607, %v4608, %v4606
      %v4610 = vrsqrt.pop %v4542
      %v4611 = vmul.f32 %v4610, %v4542
      %v4612 = vmul.f32 %v4611, %v4610
      %v4613 = vmul.f32 0.5, %v4612
      %v4614 = vsub.f32 1.5, %v4613
      %v4615 = vmul.f32 %v4610, %v4614
      %v4616 = vmul.f32 %v4542, %v4615
      %vm4617 = vcmp.eq.f32.partialorder %v4542, inf
      %v4618 = vsel %vm4617, %v4542, %v4616
      %vm4619 = vcmp.eq.f32.partialorder %v4542, 0.0
      %v4620 = vand.u32 %v4542, 2147483648
      %v4621 = vsel %vm4619, %v4620, %v4618
      %v4622 = vrsqrt.pop %v4545
      %v4623 = vmul.f32 %v4622, %v4545
      %v4624 = vmul.f32 %v4623, %v4622
      %v4625 = vmul.f32 0.5, %v4624
      %v4626 = vsub.f32 1.5, %v4625
      %v4627 = vmul.f32 %v4622, %v4626
      %v4628 = vmul.f32 %v4545, %v4627
      %vm4629 = vcmp.eq.f32.partialorder %v4545, inf
      %v4630 = vsel %vm4629, %v4545, %v4628
      %vm4631 = vcmp.eq.f32.partialorder %v4545, 0.0
      %v4632 = vand.u32 %v4545, 2147483648
      %v4633 = vsel %vm4631, %v4632, %v4630
      %v4634 = vrsqrt.pop %v4548
      %v4635 = vmul.f32 %v4634, %v4548
      %v4636 = vmul.f32 %v4635, %v4634
      %v4637 = vmul.f32 0.5, %v4636
      %v4638 = vsub.f32 1.5, %v4637
      %v4639 = vmul.f32 %v4634, %v4638
      %v4640 = vmul.f32 %v4548, %v4639
      %vm4641 = vcmp.eq.f32.partialorder %v4548, inf
      %v4642 = vsel %vm4641, %v4548, %v4640
      %vm4643 = vcmp.eq.f32.partialorder %v4548, 0.0
      %v4644 = vand.u32 %v4548, 2147483648
      %v4645 = vsel %vm4643, %v4644, %v4642
      %v4646 = vrsqrt.pop %v4551
      %v4647 = vmul.f32 %v4646, %v4551
      %v4648 = vmul.f32 %v4647, %v4646
      %v4649 = vmul.f32 0.5, %v4648
      %v4650 = vsub.f32 1.5, %v4649
      %v4651 = vmul.f32 %v4646, %v4650
      %v4652 = vmul.f32 %v4551, %v4651
      %vm4653 = vcmp.eq.f32.partialorder %v4551, inf
      %v4654 = vsel %vm4653, %v4551, %v4652
      %vm4655 = vcmp.eq.f32.partialorder %v4551, 0.0
      %v4656 = vand.u32 %v4551, 2147483648
      %v4657 = vsel %vm4655, %v4656, %v4654
      %v4658 = vrsqrt.pop %v4554
      %v4659 = vmul.f32 %v4658, %v4554
      %v4660 = vmul.f32 %v4659, %v4658
      %v4661 = vmul.f32 0.5, %v4660
      %v4662 = vsub.f32 1.5, %v4661
      %v4663 = vmul.f32 %v4658, %v4662
      %v4664 = vmul.f32 %v4554, %v4663
      %vm4665 = vcmp.eq.f32.partialorder %v4554, inf
      %v4666 = vsel %vm4665, %v4554, %v4664
      %vm4667 = vcmp.eq.f32.partialorder %v4554, 0.0
      %v4668 = vand.u32 %v4554, 2147483648
      %v4669 = vsel %vm4667, %v4668, %v4666
      %v4670 = vrsqrt.pop %v4557
      %v4671 = vmul.f32 %v4670, %v4557
      %v4672 = vmul.f32 %v4671, %v4670
      %v4673 = vmul.f32 0.5, %v4672
      %v4674 = vsub.f32 1.5, %v4673
      %v4675 = vmul.f32 %v4670, %v4674
      %v4676 = vmul.f32 %v4557, %v4675
      %vm4677 = vcmp.eq.f32.partialorder %v4557, inf
      %v4678 = vsel %vm4677, %v4557, %v4676
      %vm4679 = vcmp.eq.f32.partialorder %v4557, 0.0
      %v4680 = vand.u32 %v4557, 2147483648
      %v4681 = vsel %vm4679, %v4680, %v4678
      %v4682 = vrsqrt.pop %v4560
      %v4683 = vmul.f32 %v4682, %v4560
      %v4684 = vmul.f32 %v4683, %v4682
      %v4685 = vmul.f32 0.5, %v4684
      %v4686 = vsub.f32 1.5, %v4685
      %v4687 = vmul.f32 %v4682, %v4686
      %v4688 = vmul.f32 %v4560, %v4687
      %vm4689 = vcmp.eq.f32.partialorder %v4560, inf
      %v4690 = vsel %vm4689, %v4560, %v4688
      %vm4691 = vcmp.eq.f32.partialorder %v4560, 0.0
      %v4692 = vand.u32 %v4560, 2147483648
      %v4693 = vsel %vm4691, %v4692, %v4690
      %v4694 = vrsqrt.pop %v4563
      %v4695 = vmul.f32 %v4694, %v4563
      %v4696 = vmul.f32 %v4695, %v4694
      %v4697 = vmul.f32 0.5, %v4696
      %v4698 = vsub.f32 1.5, %v4697
      %v4699 = vmul.f32 %v4694, %v4698
      %v4700 = vmul.f32 %v4563, %v4699
      %vm4701 = vcmp.eq.f32.partialorder %v4563, inf
      %v4702 = vsel %vm4701, %v4563, %v4700
      %vm4703 = vcmp.eq.f32.partialorder %v4563, 0.0
      %v4704 = vand.u32 %v4563, 2147483648
      %v4705 = vsel %vm4703, %v4704, %v4702
      %v4706 = vrsqrt.pop %v4566
      %v4707 = vmul.f32 %v4706, %v4566
      %v4708 = vmul.f32 %v4707, %v4706
      %v4709 = vmul.f32 0.5, %v4708
      %v4710 = vsub.f32 1.5, %v4709
      %v4711 = vmul.f32 %v4706, %v4710
      %v4712 = vmul.f32 %v4566, %v4711
      %vm4713 = vcmp.eq.f32.partialorder %v4566, inf
      %v4714 = vsel %vm4713, %v4566, %v4712
      %vm4715 = vcmp.eq.f32.partialorder %v4566, 0.0
      %v4716 = vand.u32 %v4566, 2147483648
      %v4717 = vsel %vm4715, %v4716, %v4714
      %v4718 = vrsqrt.pop %v4569
      %v4719 = vmul.f32 %v4718, %v4569
      %v4720 = vmul.f32 %v4719, %v4718
      %v4721 = vmul.f32 0.5, %v4720
      %v4722 = vsub.f32 1.5, %v4721
      %v4723 = vmul.f32 %v4718, %v4722
      %v4724 = vmul.f32 %v4569, %v4723
      %vm4725 = vcmp.eq.f32.partialorder %v4569, inf
      %v4726 = vsel %vm4725, %v4569, %v4724
      %vm4727 = vcmp.eq.f32.partialorder %v4569, 0.0
      %v4728 = vand.u32 %v4569, 2147483648
      %v4729 = vsel %vm4727, %v4728, %v4726
      %v4730 = vrsqrt.pop %v4572
      %v4731 = vmul.f32 %v4730, %v4572
      %v4732 = vmul.f32 %v4731, %v4730
      %v4733 = vmul.f32 0.5, %v4732
      %v4734 = vsub.f32 1.5, %v4733
      %v4735 = vmul.f32 %v4730, %v4734
      %v4736 = vmul.f32 %v4572, %v4735
      %vm4737 = vcmp.eq.f32.partialorder %v4572, inf
      %v4738 = vsel %vm4737, %v4572, %v4736
      %vm4739 = vcmp.eq.f32.partialorder %v4572, 0.0
      %v4740 = vand.u32 %v4572, 2147483648
      %v4741 = vsel %vm4739, %v4740, %v4738
      %v4742 = vrsqrt.pop %v4575
      %v4743 = vmul.f32 %v4742, %v4575
      %v4744 = vmul.f32 %v4743, %v4742
      %v4745 = vmul.f32 0.5, %v4744
      %v4746 = vsub.f32 1.5, %v4745
      %v4747 = vmul.f32 %v4742, %v4746
      %v4748 = vmul.f32 %v4575, %v4747
      %vm4749 = vcmp.eq.f32.partialorder %v4575, inf
      %v4750 = vsel %vm4749, %v4575, %v4748
      %vm4751 = vcmp.eq.f32.partialorder %v4575, 0.0
      %v4752 = vand.u32 %v4575, 2147483648
      %v4753 = vsel %vm4751, %v4752, %v4750
      %v4754 = vrsqrt.pop %v4578
      %v4755 = vmul.f32 %v4754, %v4578
      %v4756 = vmul.f32 %v4755, %v4754
      %v4757 = vmul.f32 0.5, %v4756
      %v4758 = vsub.f32 1.5, %v4757
      %v4759 = vmul.f32 %v4754, %v4758
      %v4760 = vmul.f32 %v4578, %v4759
      %vm4761 = vcmp.eq.f32.partialorder %v4578, inf
      %v4762 = vsel %vm4761, %v4578, %v4760
      %vm4763 = vcmp.eq.f32.partialorder %v4578, 0.0
      %v4764 = vand.u32 %v4578, 2147483648
      %v4765 = vsel %vm4763, %v4764, %v4762
      %v4766 = vrsqrt.pop %v4581
      %v4767 = vmul.f32 %v4766, %v4581
      %v4768 = vmul.f32 %v4767, %v4766
      %v4769 = vmul.f32 0.5, %v4768
      %v4770 = vsub.f32 1.5, %v4769
      %v4771 = vmul.f32 %v4766, %v4770
      %v4772 = vmul.f32 %v4581, %v4771
      %vm4773 = vcmp.eq.f32.partialorder %v4581, inf
      %v4774 = vsel %vm4773, %v4581, %v4772
      %vm4775 = vcmp.eq.f32.partialorder %v4581, 0.0
      %v4776 = vand.u32 %v4581, 2147483648
      %v4777 = vsel %vm4775, %v4776, %v4774
      %v4778 = vrsqrt.pop %v4585
      %v4779 = vmul.f32 %v4778, %v4585
      %v4780 = vmul.f32 %v4779, %v4778
      %v4781 = vmul.f32 0.5, %v4780
      %v4782 = vsub.f32 1.5, %v4781
      %v4783 = vmul.f32 %v4778, %v4782
      %v4784 = vmul.f32 %v4585, %v4783
      %vm4785 = vcmp.eq.f32.partialorder %v4585, inf
      %v4786 = vsel %vm4785, %v4585, %v4784
      %vm4787 = vcmp.eq.f32.partialorder %v4585, 0.0
      %v4788 = vand.u32 %v4585, 2147483648
      %v4789 = vsel %vm4787, %v4788, %v4786
      %v4790 = vmax.f32 %v4597, 1e-12
      %v4791 = vmax.f32 %v4609, 1e-12
      %v4792 = vmax.f32 %v4621, 1e-12
      %v4793 = vmax.f32 %v4633, 1e-12
      %v4794 = vmax.f32 %v4645, 1e-12
      %v4795 = vmax.f32 %v4657, 1e-12
      %v4796 = vmax.f32 %v4669, 1e-12
      %v4797 = vmax.f32 %v4681, 1e-12
      %v4798 = vmax.f32 %v4693, 1e-12
      %v4799 = vmax.f32 %v4705, 1e-12
      %v4800 = vmax.f32 %v4717, 1e-12
      %v4801 = vmax.f32 %v4729, 1e-12
      %v4802 = vmax.f32 %v4741, 1e-12
      %v4803 = vmax.f32 %v4753, 1e-12
      %v4804 = vmax.f32 %v4765, 1e-12
      %v4805 = vmax.f32 %v4777, 1e-12
      %v4806 = vmax.f32 %v4789, 1e-12
      %v4807 = vrcp.pop %v4790
      %v4808 = vmul.f32 %v4790, %v4807
      %v4809 = vsub.f32 1.0, %v4808
      %v4810 = vmul.f32 %v4807, %v4809
      %v4811 = vadd.f32 %v4807, %v4810
      %vm4812 = vweird.f32 %v4790
      %vm4813 = vweird.f32 %v4807
      %vm4814 = vmor %vm4812, %vm4813
      %v4815 = vsel %vm4814, %v4807, %v4811
      %v4816 = vand.u32 2147483647, %v4790
      %vm4817 = vcmp.eq.f32.partialorder %v4816, 8.507059e+37
      %v4818 = vand.u32 %v4790, 2147483648
      %v4819 = vor.u32 1.1754944e-38, %v4818
      %v4820 = vsel %vm4817, %v4819, %v4815
      %v4821 = vmul.f32 1.0, %v4820
      %v4822 = vrcp.pop %v4791
      %v4823 = vmul.f32 %v4791, %v4822
      %v4824 = vsub.f32 1.0, %v4823
      %v4825 = vmul.f32 %v4822, %v4824
      %v4826 = vadd.f32 %v4822, %v4825
      %vm4827 = vweird.f32 %v4791
      %vm4828 = vweird.f32 %v4822
      %vm4829 = vmor %vm4827, %vm4828
      %v4830 = vsel %vm4829, %v4822, %v4826
      %v4831 = vand.u32 2147483647, %v4791
      %vm4832 = vcmp.eq.f32.partialorder %v4831, 8.507059e+37
      %v4833 = vand.u32 %v4791, 2147483648
      %v4834 = vor.u32 1.1754944e-38, %v4833
      %v4835 = vsel %vm4832, %v4834, %v4830
      %v4836 = vmul.f32 1.0, %v4835
      %v4837 = vrcp.pop %v4792
      %v4838 = vmul.f32 %v4792, %v4837
      %v4839 = vsub.f32 1.0, %v4838
      %v4840 = vmul.f32 %v4837, %v4839
      %v4841 = vadd.f32 %v4837, %v4840
      %vm4842 = vweird.f32 %v4792
      %vm4843 = vweird.f32 %v4837
      %vm4844 = vmor %vm4842, %vm4843
      %v4845 = vsel %vm4844, %v4837, %v4841
      %v4846 = vand.u32 2147483647, %v4792
      %vm4847 = vcmp.eq.f32.partialorder %v4846, 8.507059e+37
      %v4848 = vand.u32 %v4792, 2147483648
      %v4849 = vor.u32 1.1754944e-38, %v4848
      %v4850 = vsel %vm4847, %v4849, %v4845
      %v4851 = vmul.f32 1.0, %v4850
      %v4852 = vrcp.pop %v4793
      %v4853 = vmul.f32 %v4793, %v4852
      %v4854 = vsub.f32 1.0, %v4853
      %v4855 = vmul.f32 %v4852, %v4854
      %v4856 = vadd.f32 %v4852, %v4855
      %vm4857 = vweird.f32 %v4793
      %vm4858 = vweird.f32 %v4852
      %vm4859 = vmor %vm4857, %vm4858
      %v4860 = vsel %vm4859, %v4852, %v4856
      %v4861 = vand.u32 2147483647, %v4793
      %vm4862 = vcmp.eq.f32.partialorder %v4861, 8.507059e+37
      %v4863 = vand.u32 %v4793, 2147483648
      %v4864 = vor.u32 1.1754944e-38, %v4863
      %v4865 = vsel %vm4862, %v4864, %v4860
      %v4866 = vmul.f32 1.0, %v4865
      %v4867 = vrcp.pop %v4794
      %v4868 = vmul.f32 %v4794, %v4867
      %v4869 = vsub.f32 1.0, %v4868
      %v4870 = vmul.f32 %v4867, %v4869
      %v4871 = vadd.f32 %v4867, %v4870
      %vm4872 = vweird.f32 %v4794
      %vm4873 = vweird.f32 %v4867
      %vm4874 = vmor %vm4872, %vm4873
      %v4875 = vsel %vm4874, %v4867, %v4871
      %v4876 = vand.u32 2147483647, %v4794
      %vm4877 = vcmp.eq.f32.partialorder %v4876, 8.507059e+37
      %v4878 = vand.u32 %v4794, 2147483648
      %v4879 = vor.u32 1.1754944e-38, %v4878
      %v4880 = vsel %vm4877, %v4879, %v4875
      %v4881 = vmul.f32 1.0, %v4880
      %v4882 = vrcp.pop %v4795
      %v4883 = vmul.f32 %v4795, %v4882
      %v4884 = vsub.f32 1.0, %v4883
      %v4885 = vmul.f32 %v4882, %v4884
      %v4886 = vadd.f32 %v4882, %v4885
      %vm4887 = vweird.f32 %v4795
      %vm4888 = vweird.f32 %v4882
      %vm4889 = vmor %vm4887, %vm4888
      %v4890 = vsel %vm4889, %v4882, %v4886
      %v4891 = vand.u32 2147483647, %v4795
      %vm4892 = vcmp.eq.f32.partialorder %v4891, 8.507059e+37
      %v4893 = vand.u32 %v4795, 2147483648
      %v4894 = vor.u32 1.1754944e-38, %v4893
      %v4895 = vsel %vm4892, %v4894, %v4890
      %v4896 = vmul.f32 1.0, %v4895
      %v4897 = vrcp.pop %v4796
      %v4898 = vmul.f32 %v4796, %v4897
      %v4899 = vsub.f32 1.0, %v4898
      %v4900 = vmul.f32 %v4897, %v4899
      %v4901 = vadd.f32 %v4897, %v4900
      %vm4902 = vweird.f32 %v4796
      %vm4903 = vweird.f32 %v4897
      %vm4904 = vmor %vm4902, %vm4903
      %v4905 = vsel %vm4904, %v4897, %v4901
      %v4906 = vand.u32 2147483647, %v4796
      %vm4907 = vcmp.eq.f32.partialorder %v4906, 8.507059e+37
      %v4908 = vand.u32 %v4796, 2147483648
      %v4909 = vor.u32 1.1754944e-38, %v4908
      %v4910 = vsel %vm4907, %v4909, %v4905
      %v4911 = vmul.f32 1.0, %v4910
      %v4912 = vrcp.pop %v4797
      %v4913 = vmul.f32 %v4797, %v4912
      %v4914 = vsub.f32 1.0, %v4913
      %v4915 = vmul.f32 %v4912, %v4914
      %v4916 = vadd.f32 %v4912, %v4915
      %vm4917 = vweird.f32 %v4797
      %vm4918 = vweird.f32 %v4912
      %vm4919 = vmor %vm4917, %vm4918
      %v4920 = vsel %vm4919, %v4912, %v4916
      %v4921 = vand.u32 2147483647, %v4797
      %vm4922 = vcmp.eq.f32.partialorder %v4921, 8.507059e+37
      %v4923 = vand.u32 %v4797, 2147483648
      %v4924 = vor.u32 1.1754944e-38, %v4923
      %v4925 = vsel %vm4922, %v4924, %v4920
      %v4926 = vmul.f32 1.0, %v4925
      %v4927 = vrcp.pop %v4798
      %v4928 = vmul.f32 %v4798, %v4927
      %v4929 = vsub.f32 1.0, %v4928
      %v4930 = vmul.f32 %v4927, %v4929
      %v4931 = vadd.f32 %v4927, %v4930
      %vm4932 = vweird.f32 %v4798
      %vm4933 = vweird.f32 %v4927
      %vm4934 = vmor %vm4932, %vm4933
      %v4935 = vsel %vm4934, %v4927, %v4931
      %v4936 = vand.u32 2147483647, %v4798
      %vm4937 = vcmp.eq.f32.partialorder %v4936, 8.507059e+37
      %v4938 = vand.u32 %v4798, 2147483648
      %v4939 = vor.u32 1.1754944e-38, %v4938
      %v4940 = vsel %vm4937, %v4939, %v4935
      %v4941 = vmul.f32 1.0, %v4940
      %v4942 = vrcp.pop %v4799
      %v4943 = vmul.f32 %v4799, %v4942
      %v4944 = vsub.f32 1.0, %v4943
      %v4945 = vmul.f32 %v4942, %v4944
      %v4946 = vadd.f32 %v4942, %v4945
      %vm4947 = vweird.f32 %v4799
      %vm4948 = vweird.f32 %v4942
      %vm4949 = vmor %vm4947, %vm4948
      %v4950 = vsel %vm4949, %v4942, %v4946
      %v4951 = vand.u32 2147483647, %v4799
      %vm4952 = vcmp.eq.f32.partialorder %v4951, 8.507059e+37
      %v4953 = vand.u32 %v4799, 2147483648
      %v4954 = vor.u32 1.1754944e-38, %v4953
      %v4955 = vsel %vm4952, %v4954, %v4950
      %v4956 = vmul.f32 1.0, %v4955
      %v4957 = vrcp.pop %v4800
      %v4958 = vmul.f32 %v4800, %v4957
      %v4959 = vsub.f32 1.0, %v4958
      %v4960 = vmul.f32 %v4957, %v4959
      %v4961 = vadd.f32 %v4957, %v4960
      %vm4962 = vweird.f32 %v4800
      %vm4963 = vweird.f32 %v4957
      %vm4964 = vmor %vm4962, %vm4963
      %v4965 = vsel %vm4964, %v4957, %v4961
      %v4966 = vand.u32 2147483647, %v4800
      %vm4967 = vcmp.eq.f32.partialorder %v4966, 8.507059e+37
      %v4968 = vand.u32 %v4800, 2147483648
      %v4969 = vor.u32 1.1754944e-38, %v4968
      %v4970 = vsel %vm4967, %v4969, %v4965
      %v4971 = vmul.f32 1.0, %v4970
      %v4972 = vrcp.pop %v4801
      %v4973 = vmul.f32 %v4801, %v4972
      %v4974 = vsub.f32 1.0, %v4973
      %v4975 = vmul.f32 %v4972, %v4974
      %v4976 = vadd.f32 %v4972, %v4975
      %vm4977 = vweird.f32 %v4801
      %vm4978 = vweird.f32 %v4972
      %vm4979 = vmor %vm4977, %vm4978
      %v4980 = vsel %vm4979, %v4972, %v4976
      %v4981 = vand.u32 2147483647, %v4801
      %vm4982 = vcmp.eq.f32.partialorder %v4981, 8.507059e+37
      %v4983 = vand.u32 %v4801, 2147483648
      %v4984 = vor.u32 1.1754944e-38, %v4983
      %v4985 = vsel %vm4982, %v4984, %v4980
      %v4986 = vmul.f32 1.0, %v4985
      %v4987 = vrcp.pop %v4802
      %v4988 = vmul.f32 %v4802, %v4987
      %v4989 = vsub.f32 1.0, %v4988
      %v4990 = vmul.f32 %v4987, %v4989
      %v4991 = vadd.f32 %v4987, %v4990
      %vm4992 = vweird.f32 %v4802
      %vm4993 = vweird.f32 %v4987
      %vm4994 = vmor %vm4992, %vm4993
      %v4995 = vsel %vm4994, %v4987, %v4991
      %v4996 = vand.u32 2147483647, %v4802
      %vm4997 = vcmp.eq.f32.partialorder %v4996, 8.507059e+37
      %v4998 = vand.u32 %v4802, 2147483648
      %v4999 = vor.u32 1.1754944e-38, %v4998
      %v5000 = vsel %vm4997, %v4999, %v4995
      %v5001 = vmul.f32 1.0, %v5000
      %v5002 = vrcp.pop %v4803
      %v5003 = vmul.f32 %v4803, %v5002
      %v5004 = vsub.f32 1.0, %v5003
      %v5005 = vmul.f32 %v5002, %v5004
      %v5006 = vadd.f32 %v5002, %v5005
      %vm5007 = vweird.f32 %v4803
      %vm5008 = vweird.f32 %v5002
      %vm5009 = vmor %vm5007, %vm5008
      %v5010 = vsel %vm5009, %v5002, %v5006
      %v5011 = vand.u32 2147483647, %v4803
      %vm5012 = vcmp.eq.f32.partialorder %v5011, 8.507059e+37
      %v5013 = vand.u32 %v4803, 2147483648
      %v5014 = vor.u32 1.1754944e-38, %v5013
      %v5015 = vsel %vm5012, %v5014, %v5010
      %v5016 = vmul.f32 1.0, %v5015
      %v5017 = vrcp.pop %v4804
      %v5018 = vmul.f32 %v4804, %v5017
      %v5019 = vsub.f32 1.0, %v5018
      %v5020 = vmul.f32 %v5017, %v5019
      %v5021 = vadd.f32 %v5017, %v5020
      %vm5022 = vweird.f32 %v4804
      %vm5023 = vweird.f32 %v5017
      %vm5024 = vmor %vm5022, %vm5023
      %v5025 = vsel %vm5024, %v5017, %v5021
      %v5026 = vand.u32 2147483647, %v4804
      %vm5027 = vcmp.eq.f32.partialorder %v5026, 8.507059e+37
      %v5028 = vand.u32 %v4804, 2147483648
      %v5029 = vor.u32 1.1754944e-38, %v5028
      %v5030 = vsel %vm5027, %v5029, %v5025
      %v5031 = vmul.f32 1.0, %v5030
      %v5032 = vrcp.pop %v4805
      %v5033 = vmul.f32 %v4805, %v5032
      %v5034 = vsub.f32 1.0, %v5033
      %v5035 = vmul.f32 %v5032, %v5034
      %v5036 = vadd.f32 %v5032, %v5035
      %vm5037 = vweird.f32 %v4805
      %vm5038 = vweird.f32 %v5032
      %vm5039 = vmor %vm5037, %vm5038
      %v5040 = vsel %vm5039, %v5032, %v5036
      %v5041 = vand.u32 2147483647, %v4805
      %vm5042 = vcmp.eq.f32.partialorder %v5041, 8.507059e+37
      %v5043 = vand.u32 %v4805, 2147483648
      %v5044 = vor.u32 1.1754944e-38, %v5043
      %v5045 = vsel %vm5042, %v5044, %v5040
      %v5046 = vmul.f32 1.0, %v5045
      %v5047 = vrcp.pop %v4806
      %v5048 = vmul.f32 %v4806, %v5047
      %v5049 = vsub.f32 1.0, %v5048
      %v5050 = vmul.f32 %v5047, %v5049
      %v5051 = vadd.f32 %v5047, %v5050
      %vm5052 = vweird.f32 %v4806
      %vm5053 = vweird.f32 %v5047
      %vm5054 = vmor %vm5052, %vm5053
      %v5055 = vsel %vm5054, %v5047, %v5051
      %v5056 = vand.u32 2147483647, %v4806
      %vm5057 = vcmp.eq.f32.partialorder %v5056, 8.507059e+37
      %v5058 = vand.u32 %v4806, 2147483648
      %v5059 = vor.u32 1.1754944e-38, %v5058
      %v5060 = vsel %vm5057, %v5059, %v5055
      %v5061 = vmul.f32 1.0, %v5060
      %v5062 = vmul.f32 %v4498, %v4821
      %v5063 = vmul.f32 %v4499, %v4836
      %v5064 = vmul.f32 %v4500, %v4851
      %v5065 = vmul.f32 %v4501, %v4866
      %v5066 = vmul.f32 %v4502, %v4881
      %v5067 = vmul.f32 %v4503, %v4896
      %v5068 = vmul.f32 %v4504, %v4911
      %v5069 = vmul.f32 %v4505, %v4926
      %v5070 = vmul.f32 %v4506, %v4941
      %v5071 = vmul.f32 %v4507, %v4956
      %v5072 = vmul.f32 %v4508, %v4971
      %v5073 = vmul.f32 %v4509, %v4986
      %v5074 = vmul.f32 %v4510, %v5001
      %v5075 = vmul.f32 %v4511, %v5016
      %v5076 = vmul.f32 %v4512, %v5031
      %v5077 = vmul.f32 %v4513, %v5046
      %v5078 = vmul.f32 %v4514, %v5061
      %v5079 = vmul.f32 %v4515, 4.0
      %v5081 = vperm.slane %v5079, 0
      %v5083 = vmul.f32 %v5062, %v5081
      %v5084 = vmul.f32 %v5063, %v5081
      %v5085 = vmul.f32 %v5064, %v5081
      %v5086 = vmul.f32 %v5065, %v5081
      %v5087 = vmul.f32 %v5066, %v5081
      %v5088 = vmul.f32 %v5067, %v5081
      %v5089 = vmul.f32 %v5068, %v5081
      %v5090 = vmul.f32 %v5069, %v5081
      %v5091 = vmul.f32 %v5070, %v5081
      %v5092 = vmul.f32 %v5071, %v5081
      %v5093 = vmul.f32 %v5072, %v5081
      %v5094 = vmul.f32 %v5073, %v5081
      %v5095 = vmul.f32 %v5074, %v5081
      %v5096 = vmul.f32 %v5075, %v5081
      %v5097 = vmul.f32 %v5076, %v5081
      %v5098 = vmul.f32 %v5077, %v5081
      %v5099 = vmul.f32 %v5078, %v5081
      %v5100 = vadd.f32 %v341, 1.0
      %v5101 = vperm.slane %v5100, 0
      %v5102 = vmul.f32 %v5083, %v5101
      %v5103 = vmul.f32 %v5084, %v5101
      %v5104 = vmul.f32 %v5085, %v5101
      %v5105 = vmul.f32 %v5086, %v5101
      %v5106 = vmul.f32 %v5087, %v5101
      %v5107 = vmul.f32 %v5088, %v5101
      %v5108 = vmul.f32 %v5089, %v5101
      %v5109 = vmul.f32 %v5090, %v5101
      %v5110 = vmul.f32 %v5091, %v5101
      %v5111 = vmul.f32 %v5092, %v5101
      %v5112 = vmul.f32 %v5093, %v5101
      %v5113 = vmul.f32 %v5094, %v5101
      %v5114 = vmul.f32 %v5095, %v5101
      %v5115 = vmul.f32 %v5096, %v5101
      %v5116 = vmul.f32 %v5097, %v5101
      %v5117 = vmul.f32 %v5098, %v5101
      %v5118 = vmul.f32 %v5099, %v5101
      %v5119 = vperm.slane %v341, 0
      %5121 = vrot.lane.b32.xlu0 %v5119, 112
      %v5122 = vpop.permute.xlu0 %5121
      %v5124 = vadd.f32 %v5102, %v5122
      %v5125 = vadd.f32 %v5103, %v5122
      %v5126 = vadd.f32 %v5104, %v5122
      %v5127 = vadd.f32 %v5105, %v5122
      %v5128 = vadd.f32 %v5106, %v5122
      %v5129 = vadd.f32 %v5107, %v5122
      %v5130 = vadd.f32 %v5108, %v5122
      %v5131 = vadd.f32 %v5109, %v5122
      %v5132 = vadd.f32 %v5110, %v5122
      %v5133 = vadd.f32 %v5111, %v5122
      %v5134 = vadd.f32 %v5112, %v5122
      %v5135 = vadd.f32 %v5113, %v5122
      %v5136 = vadd.f32 %v5114, %v5122
      %v5137 = vadd.f32 %v5115, %v5122
      %v5138 = vadd.f32 %v5116, %v5122
      %v5139 = vadd.f32 %v5117, %v5122
      %v5140 = vadd.f32 %v5118, %v5122
      %v5141 = vsub.f32 0.0, %v5124
      %v5142 = vsub.f32 0.0, %v5125
      %v5143 = vsub.f32 0.0, %v5126
      %v5144 = vsub.f32 0.0, %v5127
      %v5145 = vsub.f32 0.0, %v5128
      %v5146 = vsub.f32 0.0, %v5129
      %v5147 = vsub.f32 0.0, %v5130
      %v5148 = vsub.f32 0.0, %v5131
      %v5149 = vsub.f32 0.0, %v5132
      %v5150 = vsub.f32 0.0, %v5133
      %v5151 = vsub.f32 0.0, %v5134
      %v5152 = vsub.f32 0.0, %v5135
      %v5153 = vsub.f32 0.0, %v5136
      %v5154 = vsub.f32 0.0, %v5137
      %v5155 = vsub.f32 0.0, %v5138
      %v5156 = vsub.f32 0.0, %v5139
      %v5157 = vsub.f32 0.0, %v5140
      %v5158 = vmul.f32 %v5141, 1.442695
      %v5159 = vpow.pop %v5158
      %v5160 = vmul.f32 %v5142, 1.442695
      %v5161 = vpow.pop %v5160
      %v5162 = vmul.f32 %v5143, 1.442695
      %v5163 = vpow.pop %v5162
      %v5164 = vmul.f32 %v5144, 1.442695
      %v5165 = vpow.pop %v5164
      %v5166 = vmul.f32 %v5145, 1.442695
      %v5167 = vpow.pop %v5166
      %v5168 = vmul.f32 %v5146, 1.442695
      %v5169 = vpow.pop %v5168
      %v5170 = vmul.f32 %v5147, 1.442695
      %v5171 = vpow.pop %v5170
      %v5172 = vmul.f32 %v5148, 1.442695
      %v5173 = vpow.pop %v5172
      %v5174 = vmul.f32 %v5149, 1.442695
      %v5175 = vpow.pop %v5174
      %v5176 = vmul.f32 %v5150, 1.442695
      %v5177 = vpow.pop %v5176
      %v5178 = vmul.f32 %v5151, 1.442695
      %v5179 = vpow.pop %v5178
      %v5180 = vmul.f32 %v5152, 1.442695
      %v5181 = vpow.pop %v5180
      %v5182 = vmul.f32 %v5153, 1.442695
      %v5183 = vpow.pop %v5182
      %v5184 = vmul.f32 %v5154, 1.442695
      %v5185 = vpow.pop %v5184
      %v5186 = vmul.f32 %v5155, 1.442695
      %v5187 = vpow.pop %v5186
      %v5188 = vmul.f32 %v5156, 1.442695
      %v5189 = vpow.pop %v5188
      %v5190 = vmul.f32 %v5157, 1.442695
      %v5191 = vpow.pop %v5190
      %v5192 = vadd.f32 %v5159, 1.0
      %v5193 = vadd.f32 %v5161, 1.0
      %v5194 = vadd.f32 %v5163, 1.0
      %v5195 = vadd.f32 %v5165, 1.0
      %v5196 = vadd.f32 %v5167, 1.0
      %v5197 = vadd.f32 %v5169, 1.0
      %v5198 = vadd.f32 %v5171, 1.0
      %v5199 = vadd.f32 %v5173, 1.0
      %v5200 = vadd.f32 %v5175, 1.0
      %v5201 = vadd.f32 %v5177, 1.0
      %v5202 = vadd.f32 %v5179, 1.0
      %v5203 = vadd.f32 %v5181, 1.0
      %v5204 = vadd.f32 %v5183, 1.0
      %v5205 = vadd.f32 %v5185, 1.0
      %v5206 = vadd.f32 %v5187, 1.0
      %v5207 = vadd.f32 %v5189, 1.0
      %v5208 = vadd.f32 %v5191, 1.0
      %v5209 = vrcp.pop %v5192
      %v5210 = vmul.f32 %v5192, %v5209
      %v5211 = vsub.f32 1.0, %v5210
      %v5212 = vmul.f32 %v5209, %v5211
      %v5213 = vadd.f32 %v5209, %v5212
      %vm5214 = vweird.f32 %v5192
      %vm5215 = vweird.f32 %v5209
      %vm5216 = vmor %vm5214, %vm5215
      %v5217 = vsel %vm5216, %v5209, %v5213
      %v5218 = vand.u32 2147483647, %v5192
      %vm5219 = vcmp.eq.f32.partialorder %v5218, 8.507059e+37
      %v5220 = vand.u32 %v5192, 2147483648
      %v5221 = vor.u32 1.1754944e-38, %v5220
      %v5222 = vsel %vm5219, %v5221, %v5217
      %v5223 = vmul.f32 1.0, %v5222
      %v5224 = vrcp.pop %v5193
      %v5225 = vmul.f32 %v5193, %v5224
      %v5226 = vsub.f32 1.0, %v5225
      %v5227 = vmul.f32 %v5224, %v5226
      %v5228 = vadd.f32 %v5224, %v5227
      %vm5229 = vweird.f32 %v5193
      %vm5230 = vweird.f32 %v5224
      %vm5231 = vmor %vm5229, %vm5230
      %v5232 = vsel %vm5231, %v5224, %v5228
      %v5233 = vand.u32 2147483647, %v5193
      %vm5234 = vcmp.eq.f32.partialorder %v5233, 8.507059e+37
      %v5235 = vand.u32 %v5193, 2147483648
      %v5236 = vor.u32 1.1754944e-38, %v5235
      %v5237 = vsel %vm5234, %v5236, %v5232
      %v5238 = vmul.f32 1.0, %v5237
      %v5239 = vrcp.pop %v5194
      %v5240 = vmul.f32 %v5194, %v5239
      %v5241 = vsub.f32 1.0, %v5240
      %v5242 = vmul.f32 %v5239, %v5241
      %v5243 = vadd.f32 %v5239, %v5242
      %vm5244 = vweird.f32 %v5194
      %vm5245 = vweird.f32 %v5239
      %vm5246 = vmor %vm5244, %vm5245
      %v5247 = vsel %vm5246, %v5239, %v5243
      %v5248 = vand.u32 2147483647, %v5194
      %vm5249 = vcmp.eq.f32.partialorder %v5248, 8.507059e+37
      %v5250 = vand.u32 %v5194, 2147483648
      %v5251 = vor.u32 1.1754944e-38, %v5250
      %v5252 = vsel %vm5249, %v5251, %v5247
      %v5253 = vmul.f32 1.0, %v5252
      %v5254 = vrcp.pop %v5195
      %v5255 = vmul.f32 %v5195, %v5254
      %v5256 = vsub.f32 1.0, %v5255
      %v5257 = vmul.f32 %v5254, %v5256
      %v5258 = vadd.f32 %v5254, %v5257
      %vm5259 = vweird.f32 %v5195
      %vm5260 = vweird.f32 %v5254
      %vm5261 = vmor %vm5259, %vm5260
      %v5262 = vsel %vm5261, %v5254, %v5258
      %v5263 = vand.u32 2147483647, %v5195
      %vm5264 = vcmp.eq.f32.partialorder %v5263, 8.507059e+37
      %v5265 = vand.u32 %v5195, 2147483648
      %v5266 = vor.u32 1.1754944e-38, %v5265
      %v5267 = vsel %vm5264, %v5266, %v5262
      %v5268 = vmul.f32 1.0, %v5267
      %v5269 = vrcp.pop %v5196
      %v5270 = vmul.f32 %v5196, %v5269
      %v5271 = vsub.f32 1.0, %v5270
      %v5272 = vmul.f32 %v5269, %v5271
      %v5273 = vadd.f32 %v5269, %v5272
      %vm5274 = vweird.f32 %v5196
      %vm5275 = vweird.f32 %v5269
      %vm5276 = vmor %vm5274, %vm5275
      %v5277 = vsel %vm5276, %v5269, %v5273
      %v5278 = vand.u32 2147483647, %v5196
      %vm5279 = vcmp.eq.f32.partialorder %v5278, 8.507059e+37
      %v5280 = vand.u32 %v5196, 2147483648
      %v5281 = vor.u32 1.1754944e-38, %v5280
      %v5282 = vsel %vm5279, %v5281, %v5277
      %v5283 = vmul.f32 1.0, %v5282
      %v5284 = vrcp.pop %v5197
      %v5285 = vmul.f32 %v5197, %v5284
      %v5286 = vsub.f32 1.0, %v5285
      %v5287 = vmul.f32 %v5284, %v5286
      %v5288 = vadd.f32 %v5284, %v5287
      %vm5289 = vweird.f32 %v5197
      %vm5290 = vweird.f32 %v5284
      %vm5291 = vmor %vm5289, %vm5290
      %v5292 = vsel %vm5291, %v5284, %v5288
      %v5293 = vand.u32 2147483647, %v5197
      %vm5294 = vcmp.eq.f32.partialorder %v5293, 8.507059e+37
      %v5295 = vand.u32 %v5197, 2147483648
      %v5296 = vor.u32 1.1754944e-38, %v5295
      %v5297 = vsel %vm5294, %v5296, %v5292
      %v5298 = vmul.f32 1.0, %v5297
      %v5299 = vrcp.pop %v5198
      %v5300 = vmul.f32 %v5198, %v5299
      %v5301 = vsub.f32 1.0, %v5300
      %v5302 = vmul.f32 %v5299, %v5301
      %v5303 = vadd.f32 %v5299, %v5302
      %vm5304 = vweird.f32 %v5198
      %vm5305 = vweird.f32 %v5299
      %vm5306 = vmor %vm5304, %vm5305
      %v5307 = vsel %vm5306, %v5299, %v5303
      %v5308 = vand.u32 2147483647, %v5198
      %vm5309 = vcmp.eq.f32.partialorder %v5308, 8.507059e+37
      %v5310 = vand.u32 %v5198, 2147483648
      %v5311 = vor.u32 1.1754944e-38, %v5310
      %v5312 = vsel %vm5309, %v5311, %v5307
      %v5313 = vmul.f32 1.0, %v5312
      %v5314 = vrcp.pop %v5199
      %v5315 = vmul.f32 %v5199, %v5314
      %v5316 = vsub.f32 1.0, %v5315
      %v5317 = vmul.f32 %v5314, %v5316
      %v5318 = vadd.f32 %v5314, %v5317
      %vm5319 = vweird.f32 %v5199
      %vm5320 = vweird.f32 %v5314
      %vm5321 = vmor %vm5319, %vm5320
      %v5322 = vsel %vm5321, %v5314, %v5318
      %v5323 = vand.u32 2147483647, %v5199
      %vm5324 = vcmp.eq.f32.partialorder %v5323, 8.507059e+37
      %v5325 = vand.u32 %v5199, 2147483648
      %v5326 = vor.u32 1.1754944e-38, %v5325
      %v5327 = vsel %vm5324, %v5326, %v5322
      %v5328 = vmul.f32 1.0, %v5327
      %v5329 = vrcp.pop %v5200
      %v5330 = vmul.f32 %v5200, %v5329
      %v5331 = vsub.f32 1.0, %v5330
      %v5332 = vmul.f32 %v5329, %v5331
      %v5333 = vadd.f32 %v5329, %v5332
      %vm5334 = vweird.f32 %v5200
      %vm5335 = vweird.f32 %v5329
      %vm5336 = vmor %vm5334, %vm5335
      %v5337 = vsel %vm5336, %v5329, %v5333
      %v5338 = vand.u32 2147483647, %v5200
      %vm5339 = vcmp.eq.f32.partialorder %v5338, 8.507059e+37
      %v5340 = vand.u32 %v5200, 2147483648
      %v5341 = vor.u32 1.1754944e-38, %v5340
      %v5342 = vsel %vm5339, %v5341, %v5337
      %v5343 = vmul.f32 1.0, %v5342
      %v5344 = vrcp.pop %v5201
      %v5345 = vmul.f32 %v5201, %v5344
      %v5346 = vsub.f32 1.0, %v5345
      %v5347 = vmul.f32 %v5344, %v5346
      %v5348 = vadd.f32 %v5344, %v5347
      %vm5349 = vweird.f32 %v5201
      %vm5350 = vweird.f32 %v5344
      %vm5351 = vmor %vm5349, %vm5350
      %v5352 = vsel %vm5351, %v5344, %v5348
      %v5353 = vand.u32 2147483647, %v5201
      %vm5354 = vcmp.eq.f32.partialorder %v5353, 8.507059e+37
      %v5355 = vand.u32 %v5201, 2147483648
      %v5356 = vor.u32 1.1754944e-38, %v5355
      %v5357 = vsel %vm5354, %v5356, %v5352
      %v5358 = vmul.f32 1.0, %v5357
      %v5359 = vrcp.pop %v5202
      %v5360 = vmul.f32 %v5202, %v5359
      %v5361 = vsub.f32 1.0, %v5360
      %v5362 = vmul.f32 %v5359, %v5361
      %v5363 = vadd.f32 %v5359, %v5362
      %vm5364 = vweird.f32 %v5202
      %vm5365 = vweird.f32 %v5359
      %vm5366 = vmor %vm5364, %vm5365
      %v5367 = vsel %vm5366, %v5359, %v5363
      %v5368 = vand.u32 2147483647, %v5202
      %vm5369 = vcmp.eq.f32.partialorder %v5368, 8.507059e+37
      %v5370 = vand.u32 %v5202, 2147483648
      %v5371 = vor.u32 1.1754944e-38, %v5370
      %v5372 = vsel %vm5369, %v5371, %v5367
      %v5373 = vmul.f32 1.0, %v5372
      %v5374 = vrcp.pop %v5203
      %v5375 = vmul.f32 %v5203, %v5374
      %v5376 = vsub.f32 1.0, %v5375
      %v5377 = vmul.f32 %v5374, %v5376
      %v5378 = vadd.f32 %v5374, %v5377
      %vm5379 = vweird.f32 %v5203
      %vm5380 = vweird.f32 %v5374
      %vm5381 = vmor %vm5379, %vm5380
      %v5382 = vsel %vm5381, %v5374, %v5378
      %v5383 = vand.u32 2147483647, %v5203
      %vm5384 = vcmp.eq.f32.partialorder %v5383, 8.507059e+37
      %v5385 = vand.u32 %v5203, 2147483648
      %v5386 = vor.u32 1.1754944e-38, %v5385
      %v5387 = vsel %vm5384, %v5386, %v5382
      %v5388 = vmul.f32 1.0, %v5387
      %v5389 = vrcp.pop %v5204
      %v5390 = vmul.f32 %v5204, %v5389
      %v5391 = vsub.f32 1.0, %v5390
      %v5392 = vmul.f32 %v5389, %v5391
      %v5393 = vadd.f32 %v5389, %v5392
      %vm5394 = vweird.f32 %v5204
      %vm5395 = vweird.f32 %v5389
      %vm5396 = vmor %vm5394, %vm5395
      %v5397 = vsel %vm5396, %v5389, %v5393
      %v5398 = vand.u32 2147483647, %v5204
      %vm5399 = vcmp.eq.f32.partialorder %v5398, 8.507059e+37
      %v5400 = vand.u32 %v5204, 2147483648
      %v5401 = vor.u32 1.1754944e-38, %v5400
      %v5402 = vsel %vm5399, %v5401, %v5397
      %v5403 = vmul.f32 1.0, %v5402
      %v5404 = vrcp.pop %v5205
      %v5405 = vmul.f32 %v5205, %v5404
      %v5406 = vsub.f32 1.0, %v5405
      %v5407 = vmul.f32 %v5404, %v5406
      %v5408 = vadd.f32 %v5404, %v5407
      %vm5409 = vweird.f32 %v5205
      %vm5410 = vweird.f32 %v5404
      %vm5411 = vmor %vm5409, %vm5410
      %v5412 = vsel %vm5411, %v5404, %v5408
      %v5413 = vand.u32 2147483647, %v5205
      %vm5414 = vcmp.eq.f32.partialorder %v5413, 8.507059e+37
      %v5415 = vand.u32 %v5205, 2147483648
      %v5416 = vor.u32 1.1754944e-38, %v5415
      %v5417 = vsel %vm5414, %v5416, %v5412
      %v5418 = vmul.f32 1.0, %v5417
      %v5419 = vrcp.pop %v5206
      %v5420 = vmul.f32 %v5206, %v5419
      %v5421 = vsub.f32 1.0, %v5420
      %v5422 = vmul.f32 %v5419, %v5421
      %v5423 = vadd.f32 %v5419, %v5422
      %vm5424 = vweird.f32 %v5206
      %vm5425 = vweird.f32 %v5419
      %vm5426 = vmor %vm5424, %vm5425
      %v5427 = vsel %vm5426, %v5419, %v5423
      %v5428 = vand.u32 2147483647, %v5206
      %vm5429 = vcmp.eq.f32.partialorder %v5428, 8.507059e+37
      %v5430 = vand.u32 %v5206, 2147483648
      %v5431 = vor.u32 1.1754944e-38, %v5430
      %v5432 = vsel %vm5429, %v5431, %v5427
      %v5433 = vmul.f32 1.0, %v5432
      %v5434 = vrcp.pop %v5207
      %v5435 = vmul.f32 %v5207, %v5434
      %v5436 = vsub.f32 1.0, %v5435
      %v5437 = vmul.f32 %v5434, %v5436
      %v5438 = vadd.f32 %v5434, %v5437
      %vm5439 = vweird.f32 %v5207
      %vm5440 = vweird.f32 %v5434
      %vm5441 = vmor %vm5439, %vm5440
      %v5442 = vsel %vm5441, %v5434, %v5438
      %v5443 = vand.u32 2147483647, %v5207
      %vm5444 = vcmp.eq.f32.partialorder %v5443, 8.507059e+37
      %v5445 = vand.u32 %v5207, 2147483648
      %v5446 = vor.u32 1.1754944e-38, %v5445
      %v5447 = vsel %vm5444, %v5446, %v5442
      %v5448 = vmul.f32 1.0, %v5447
      %v5449 = vrcp.pop %v5208
      %v5450 = vmul.f32 %v5208, %v5449
      %v5451 = vsub.f32 1.0, %v5450
      %v5452 = vmul.f32 %v5449, %v5451
      %v5453 = vadd.f32 %v5449, %v5452
      %vm5454 = vweird.f32 %v5208
      %vm5455 = vweird.f32 %v5449
      %vm5456 = vmor %vm5454, %vm5455
      %v5457 = vsel %vm5456, %v5449, %v5453
      %v5458 = vand.u32 2147483647, %v5208
      %vm5459 = vcmp.eq.f32.partialorder %v5458, 8.507059e+37
      %v5460 = vand.u32 %v5208, 2147483648
      %v5461 = vor.u32 1.1754944e-38, %v5460
      %v5462 = vsel %vm5459, %v5461, %v5457
      %v5463 = vmul.f32 1.0, %v5462
      %v5464 = vmul.f32 %v5124, %v5223
      %v5465 = vmul.f32 %v5125, %v5238
      %v5466 = vmul.f32 %v5126, %v5253
      %v5467 = vmul.f32 %v5127, %v5268
      %v5468 = vmul.f32 %v5128, %v5283
      %v5469 = vmul.f32 %v5129, %v5298
      %v5470 = vmul.f32 %v5130, %v5313
      %v5471 = vmul.f32 %v5131, %v5328
      %v5472 = vmul.f32 %v5132, %v5343
      %v5473 = vmul.f32 %v5133, %v5358
      %v5474 = vmul.f32 %v5134, %v5373
      %v5475 = vmul.f32 %v5135, %v5388
      %v5476 = vmul.f32 %v5136, %v5403
      %v5477 = vmul.f32 %v5137, %v5418
      %v5478 = vmul.f32 %v5138, %v5433
      %v5479 = vmul.f32 %v5139, %v5448
      %v5480 = vmul.f32 %v5140, %v5463
      %5481 = vst.msk [vmem:[%s292] sm:$0xff] %vm4533, %v5464
      %5482 = vst.msk [vmem:[%s292 + $0x8] sm:$0xff] %vm4533, %v5465
      %5483 = vst.msk [vmem:[%s292 + $0x10] sm:$0xff] %vm4533, %v5466
      %5484 = vst.msk [vmem:[%s292 + $0x18] sm:$0xff] %vm4533, %v5467
      %5485 = vst.msk [vmem:[%s292 + $0x20] sm:$0xff] %vm4533, %v5468
      %5486 = vst.msk [vmem:[%s292 + $0x28] sm:$0xff] %vm4533, %v5469
      %5487 = vst.msk [vmem:[%s292 + $0x30] sm:$0xff] %vm4533, %v5470
      %5488 = vst.msk [vmem:[%s292 + $0x38] sm:$0xff] %vm4533, %v5471
      %5489 = vst.msk [vmem:[%s292 + $0x40] sm:$0xff] %vm4533, %v5472
      %5490 = vst.msk [vmem:[%s292 + $0x48] sm:$0xff] %vm4533, %v5473
      %5491 = vst.msk [vmem:[%s292 + $0x50] sm:$0xff] %vm4533, %v5474
      %5492 = vst.msk [vmem:[%s292 + $0x58] sm:$0xff] %vm4533, %v5475
      %5493 = vst.msk [vmem:[%s292 + $0x60] sm:$0xff] %vm4533, %v5476
      %5494 = vst.msk [vmem:[%s292 + $0x68] sm:$0xff] %vm4533, %v5477
      %5495 = vst.msk [vmem:[%s292 + $0x70] sm:$0xff] %vm4533, %v5478
      %5496 = vst.msk [vmem:[%s292 + $0x78] sm:$0xff] %vm4533, %v5479
      %5497 = vst.msk [vmem:[%s292 + $0x80] sm:$0x3] %vm4582, %v5480
      %p5498 = scmp.lt.s32.totalorder %s18, 1
      %s5499 = scalar_select %p5498, %s18, 1
      %s5500 = smul.addr %s5499, 17
      %s5501 = smul.addr %s5500, 8
      %s5502 = scalar_lea.vmem %s7, %s5501
      // Predicated region
      $region49: #{tpu_custom_call.1} parent=47 // pred_check
        %p5503 = pneg %p193
      $region50: #{tpu_custom_call.1} parent=47 // pred_check_branch
        %5505 = sbr.rel (%p5503) target = $region52
      $region51: #{tpu_custom_call.1} parent=47 // pred_region
        _
      $region52: #{tpu_custom_call.1} parent=47 // pred_fallthru
        _
    $region48: #{tpu_custom_call.1} parent=5 // pred_fallthru
      _
    %p5506 = scmp.le.s32.totalorder 2, %s13
    // Predicated region
    $region53: #{tpu_custom_call.1} parent=5 // pred_check
      %p5507 = pneg %p5506
    $region54: #{tpu_custom_call.1} parent=5 // pred_check_branch
      %5509 = sbr.rel (%p5507) target = $region56
    $region55: #{tpu_custom_call.1} parent=5 // pred_region
      %s5510 = ssub.s32 %s13, 2
      // Predicated region
      $region57: #{tpu_custom_call.1} parent=55 // pred_check
        %p5511 = pneg %p199
      $region58: #{tpu_custom_call.1} parent=55 // pred_check_branch
        %5513 = sbr.rel (%p5511) target = $region60
      $region59: #{tpu_custom_call.1} parent=55 // pred_region
        %p5514 = scmp.lt.s32.totalorder %s19, 1
        %s5515 = scalar_select %p5514, %s19, 1
        %s5516 = smul.addr %s5515, 17
        %s5517 = smul.addr %s5516, 8
        %s5518 = scalar_lea.vmem %s7, %s5517
      $region60: #{tpu_custom_call.1} parent=55 // pred_fallthru
        _
    $region56: #{tpu_custom_call.1} parent=5 // pred_fallthru
      _
  $region6: #{tpu_custom_call.1} parent=0 // loop_footer
    %s17 = sadd.s32 1, %s13
  $region7: #{tpu_custom_call.1} parent=0 // loop_footer_branch
    %12 = sbr.rel target = $region3
  $region8: #{tpu_custom_call.1} parent=0 // loop_exit
    _

</llo_original>
